<compile_context>
chip_gen: v7x
topology: tpu7x:2x2x1
jax: 0.10.0
libtpu: 0.0.40
codegen_flags: <defaults>
</compile_context>

<pallas_src>
import functools
import math

import jax
import jax.numpy as jnp
from jax import lax
from jax.experimental import pallas as pl
from jax.experimental.pallas import tpu as pltpu


_VMEM_LIMIT_BYTES = 32 * 1024 * 1024   # v7x-safe budget; plans below use <=~14MB
_ACC_CAP_BYTES = 2 * 1024 * 1024       # per-step f32 accumulator cap
_SLAB_CAP_BYTES = 2 * 1024 * 1024      # per-step halo'd input slab cap (bf16)


# ----------------------------------------------------------------------------
# Pallas kernel 1: direct conv (+ bias + LeakyReLU + optional fused 2x2 pool),
# bf16 MXU, local f32 accumulator, one store per grid step.
# ----------------------------------------------------------------------------
def _conv_kernel(x_ref, w_ref, b_ref, o_ref, *, KH, KW, B, TH, W, CIN,
                 act, pool, concat_w):
    # x_ref : (B, TH+KH-1, W+KW-1, CIN)  bf16  (halo'd row slab, all batches)
    # w_ref : (KH, KW*CIN, TN)           bf16
    # b_ref : (1, TN)                    f32   (eval-mode BN folded)
    # o_ref : (B, TH[/2], W[/2], TN)
    x = x_ref[...]
    TN = w_ref.shape[2]
    MR = B * TH * W

    acc = None

    def _add(a, d):
        return d if a is None else a + d

    if KH == 1 and KW == 1:
        acc = jnp.dot(x.reshape(MR, CIN), w_ref[0],
                      preferred_element_type=jnp.float32)
    elif concat_w:
        # Small Cin: concatenate the KW taps along K so the MXU streams the M
        # rows KH times instead of KH*KW times.
        for di in range(KH):
            xd = x[:, di:di + TH]                                # leading-dim slice
            cols = [xd[:, :, dj:dj + W, :] for dj in range(KW)]
            patch = jnp.concatenate(cols, axis=-1).reshape(MR, KW * CIN)
            acc = _add(acc, jnp.dot(patch, w_ref[di],
                                    preferred_element_type=jnp.float32))
    else:
        # Large Cin: one dot per tap; the (sublane-misaligned) dj reslice is
        # hoisted out of the di loop (KW relayouts per step instead of KH*KW).
        for dj in range(KW):
            xs = x[:, :, dj:dj + W, :]
            for di in range(KH):
                patch = xs[:, di:di + TH].reshape(MR, CIN)
                wt = w_ref[di, dj * CIN:(dj + 1) * CIN]
                acc = _add(acc, jnp.dot(patch, wt,
                                        preferred_element_type=jnp.float32))

    y = acc + b_ref[...]                       # f32 epilogue
    if act == "leaky":
        y = jnp.where(y >= 0.0, y, 0.1 * y)
    y = y.reshape(B, TH, W, TN)
    if pool:                                   # fused 2x2/2 maxpool
        y = y.reshape(B, TH // 2, 2, W, TN)
        y = jnp.maximum(y[:, :, 0], y[:, :, 1])          # row pairs (leading dim)
        y = y.reshape(B, TH // 2, W // 2, 2, TN)
        y = jnp.max(y, axis=3)                           # column pairs (sublane)
    o_ref[...] = y.astype(o_ref.dtype)


def _pick_row_tile(H, W, B, CIN, tn, KH, pool):
    """Largest divisor of H keeping the f32 accumulator and bf16 slab small."""
    smallest = None
    for th in range(H, 0, -1):
        if H % th:
            continue
        if pool and th % 2:
            continue
        smallest = th
        acc_bytes = B * th * W * tn * 4
        slab_bytes = B * (th + KH - 1) * (W + KH - 1) * CIN * 2
        if acc_bytes <= _ACC_CAP_BYTES and slab_bytes <= _SLAB_CAP_BYTES:
            return th
    return smallest if smallest is not None else H


def conv2d(x, w, bias, *, act="leaky", pool=False, out_dtype=jnp.bfloat16):
    """'Same' conv, stride 1, + bias (+ LeakyReLU) (+ fused 2x2 maxpool).
    x: [B,H,W,Cin] bf16;  w: [kh,kw,Cin,Cout] bf16 (eval-mode BN folded);
    bias: [1,Cout] f32."""
    B, H, W, CIN = x.shape
    KH, KW, CIN2, COUT = w.shape
    assert CIN == CIN2 and KH == KW and KH in (1, 3)
    assert W % 8 == 0
    if pool:
        assert H % 2 == 0 and W % 2 == 0

    tn = COUT if COUT <= 256 else 256             # v7x-safe Cout tile
    assert COUT % tn == 0 and (tn % 128 == 0 or tn == COUT)

    th = _pick_row_tile(H, W, B, CIN, tn, KH, pool)
    m_tiles = H // th
    n_tiles = COUT // tn
    R = th + KH - 1
    Wp = W + KW - 1

    th_out = th // 2 if pool else th
    H_out = H // 2 if pool else H
    W_out = W // 2 if pool else W

    wf = w.reshape(KH, KW * CIN, COUT)            # adjacent-dim collapse (free)
    concat_w = (KW > 1) and (KW * CIN <= 256)

    kernel = functools.partial(_conv_kernel, KH=KH, KW=KW, B=B, TH=th, W=W,
                               CIN=CIN, act=act, pool=pool, concat_w=concat_w)

    if KH == 1:
        # 1x1 conv: no halo -> plain auto-pipelined block, no slab copy at all.
        x_in = x
        x_spec = pl.BlockSpec((B, th, W, CIN), lambda m, n: (0, m, 0, 0))
    else:
        pad = KH // 2
        xp = jnp.pad(x, ((0, 0), (pad, pad), (pad, pad), (0, 0)))
        if m_tiles == 1:
            x_in = xp[None]
        else:
            # Overlapping halo'd row slabs: auto-pipelined / double-buffered by
            # Pallas, and fetched once per row tile (block index is constant
            # across the Cout-tile axis, so the copy is elided on revisits).
            x_in = jnp.stack([xp[:, m * th:m * th + R] for m in range(m_tiles)],
                             axis=0)
        x_spec = pl.BlockSpec((None, B, R, Wp, CIN),
                              lambda m, n: (m, 0, 0, 0, 0))

    flops = 2 * B * H * W * COUT * CIN * KH * KW
    bytes_accessed = int(x_in.size * 2 + wf.size * 2
                         + B * H_out * W_out * COUT
                         * jnp.dtype(out_dtype).itemsize)

    return pl.pallas_call(
        kernel,
        out_shape=jax.ShapeDtypeStruct((B, H_out, W_out, COUT), out_dtype),
        grid=(m_tiles, n_tiles),
        in_specs=[
            x_spec,
            pl.BlockSpec((KH, KW * CIN, tn), lambda m, n: (0, 0, n)),
            pl.BlockSpec((1, tn), lambda m, n: (0, n)),
        ],
        out_specs=pl.BlockSpec((B, th_out, W_out, tn),
                               lambda m, n: (0, m, 0, n)),
        compiler_params=pltpu.CompilerParams(
            dimension_semantics=("parallel", "parallel"),
            vmem_limit_bytes=_VMEM_LIMIT_BYTES),
        cost_estimate=pl.CostEstimate(flops=flops, transcendentals=0,
                                      bytes_accessed=bytes_accessed),
    )(x_in, wf, bias)


# ----------------------------------------------------------------------------
# Pallas kernel 2: inference-time decode (sigmoid / exp / softmax / box decode)
# ----------------------------------------------------------------------------
def _sigmoid(z):
    # exp + approx reciprocal both route to the (otherwise idle) EUP slot.
    return pl.reciprocal(1.0 + jnp.exp(-z), approx=True)


def _decode_kernel(xywh_ref, obj_ref, cls_ref, grid_ref, anch_ref,
                   inv_scale_ref, bbox_ref, cls_out_ref, obj_out_ref, *, stride):
    xywh = xywh_ref[...]
    c_xy = _sigmoid(xywh[:, :2]) + grid_ref[...]
    b_wh = jnp.exp(xywh[:, 2:]) * anch_ref[...]
    x1y1 = (c_xy - 0.5 * b_wh) * stride
    x2y2 = (c_xy + 0.5 * b_wh) * stride
    bbox = jnp.concatenate([x1y1, x2y2], axis=-1) * inv_scale_ref[...]
    bbox_ref[...] = jnp.clip(bbox, 0.0, 1.0)

    obj = _sigmoid(obj_ref[...])
    obj_out_ref[...] = obj

    logits = cls_ref[...]
    m = jnp.max(logits, axis=-1, keepdims=True)
    e = jnp.exp(logits - m)
    sm = e * pl.reciprocal(jnp.sum(e, axis=-1, keepdims=True), approx=True)
    cls_out_ref[...] = sm * obj


def decode_infer(xywh_pred, obj_pred, cls_pred, grid_flat, anch_flat,
                 inv_scale, stride):
    N = xywh_pred.shape[0]
    C = cls_pred.shape[1]
    vmem = pl.BlockSpec(memory_space=pltpu.MemorySpace.VMEM)
    return pl.pallas_call(
        functools.partial(_decode_kernel, stride=float(stride)),
        out_shape=(jax.ShapeDtypeStruct((N, 4), jnp.float32),
                   jax.ShapeDtypeStruct((N, C), jnp.float32),
                   jax.ShapeDtypeStruct((N, 1), jnp.float32)),
        in_specs=[vmem] * 6,
        out_specs=(vmem, vmem, vmem),
    )(xywh_pred, obj_pred, cls_pred, grid_flat, anch_flat, inv_scale)


# ----------------------------------------------------------------------------
# Glue: maxpool, reorg, im2col for the stem, parameter construction
# ----------------------------------------------------------------------------
def maxpool2(x):
    B, H, W, C = x.shape
    return x.reshape(B, H // 2, 2, W // 2, 2, C).max(axis=(2, 4))


def reorg2(x, s=2):
    """NHWC equivalent of the torch reorg_layer(stride=2): out ch = q*C + c."""
    # TODO(synk): channel ordering is an assumption about reorg_layer; only
    #             matters if real darknet weights are ever loaded.
    B, H, W, C = x.shape
    h, w = H // s, W // s
    x = x.reshape(B, h, s, w, s, C).transpose(0, 1, 3, 2, 4, 5)
    return x.reshape(B, h, w, s * s * C)


def im2col3x3(x):
    """3x3/pad-1 im2col along channels: (B,H,W,C) -> (B,H,W,9C).
    Channel order (di, dj, c) matches w.reshape(1, 1, 9C, Cout)."""
    B, H, W, C = x.shape
    xp = jnp.pad(x, ((0, 0), (1, 1), (1, 1), (0, 0)))
    cols = [xp[:, di:di + H, dj:dj + W, :]
            for di in range(3) for dj in range(3)]
    return jnp.concatenate(cols, axis=-1)


def make_conv(key, cin, cout, ksize, bn=True, cout_pad=None):
    """Deterministic conv(+folded eval-mode BN) params: bf16 weights, f32 bias."""
    ks = jax.random.split(key, 6)
    fan_in = float(cin * ksize * ksize)
    w = jax.random.normal(ks[0], (cout, cin, ksize, ksize), jnp.float32) / math.sqrt(fan_in)
    b = 0.01 * jax.random.normal(ks[1], (cout,), jnp.float32)
    if bn:
        gamma = 1.0 + 0.1 * jax.random.normal(ks[2], (cout,), jnp.float32)
        beta = 0.1 * jax.random.normal(ks[3], (cout,), jnp.float32)
        mean = 0.1 * jax.random.normal(ks[4], (cout,), jnp.float32)
        var = jnp.abs(1.0 + 0.1 * jax.random.normal(ks[5], (cout,), jnp.float32))
        scale = gamma / jnp.sqrt(var + 1e-5)
        w = w * scale[:, None, None, None]
        b = (b - mean) * scale + beta
    w_hwio = jnp.transpose(w, (2, 3, 1, 0))            # (kh, kw, cin, cout)
    if cout_pad is not None and cout_pad > cout:       # lane-dense padding
        w_hwio = jnp.pad(w_hwio, ((0, 0), (0, 0), (0, 0), (0, cout_pad - cout)))
        b = jnp.pad(b, (0, cout_pad - cout))
    return w_hwio.astype(jnp.bfloat16), b.reshape(1, -1).astype(jnp.float32)


def init_params(key, num_classes=20, anchor_number=5):
    keys = jax.random.split(key, 12)
    abC = anchor_number * (1 + 4 + num_classes)
    abC_pad = ((abC + 127) // 128) * 128
    p = {}
    # stand-in backbone (see TODO at top)
    w1, b1 = make_conv(keys[0], 3, 32, 3)
    p["b1"] = (w1.reshape(1, 1, 27, 32), b1)       # stem as K=27 1x1 (im2col'd)
    p["b2"] = make_conv(keys[1], 32, 64, 3)
    p["b3"] = make_conv(keys[2], 64, 128, 3)
    p["b4"] = make_conv(keys[3], 128, 256, 3)
    p["b5"] = make_conv(keys[4], 256, 512, 3)      # -> fp_1 (512ch @ /16)
    p["b6"] = make_conv(keys[5], 512, 1024, 3)     # -> fp_2 (1024ch @ /32)
    # detection head (exactly the channel plan of myYOLOv2.__init__)
    p["cs1a"] = make_conv(keys[6], 1024, 1024, 3)
    p["cs1b"] = make_conv(keys[7], 1024, 1024, 3)
    p["route"] = make_conv(keys[8], 512, 64, 1)
    p["cs2"] = make_conv(keys[9], 1280, 1024, 3)
    p["pred"] = make_conv(keys[10], 1024, abC, 1, bn=False, cout_pad=abC_pad)
    return p


# ----------------------------------------------------------------------------
# Full forward
# ----------------------------------------------------------------------------
def yolo_v2_forward(params, x_nchw, *, input_size, num_classes, anchor_size,
                    trainable):
    A = anchor_size.shape[0]
    stride = 32
    abC = A * (1 + 4 + num_classes)
    x = jnp.transpose(x_nchw, (0, 2, 3, 1)).astype(jnp.bfloat16)   # -> NHWC bf16

    # ------ backbone (stand-in) ------
    h = conv2d(im2col3x3(x), *params["b1"], pool=True)    # stem: one K=27 matmul
    h = conv2d(h, *params["b2"], pool=True)
    h = conv2d(h, *params["b3"], pool=True)
    h = conv2d(h, *params["b4"], pool=True)
    fp_1 = conv2d(h, *params["b5"])                       # /16, 512ch
    fp_2 = conv2d(maxpool2(fp_1), *params["b6"])          # /32, 1024ch

    # ------ head ------
    fp_2 = conv2d(fp_2, *params["cs1a"])
    fp_2 = conv2d(fp_2, *params["cs1b"])
    r = reorg2(conv2d(fp_1, *params["route"]))            # (B, hs, ws, 256)
    fp = jnp.concatenate([r, fp_2], axis=-1)              # (B, hs, ws, 1280)
    fp = conv2d(fp, *params["cs2"])
    pred = conv2d(fp, params["pred"][0], params["pred"][1],
                  act=None, out_dtype=jnp.float32)        # (B, hs, ws, 128)

    B, Hs, Ws, _ = pred.shape
    prediction = pred[..., :abC].reshape(B, Hs * Ws, abC)  # drop lane-pad channels

    obj_pred = prediction[:, :, :A].reshape(B, Hs * Ws * A, 1)
    cls_pred = prediction[:, :, A:(1 + num_classes) * A].reshape(
        B, Hs * Ws * A, num_classes)
    xywh_pred = prediction[:, :, (1 + num_classes) * A:].reshape(
        B, Hs * Ws * A, 4)

    if trainable:
        return jnp.concatenate([obj_pred, cls_pred, xywh_pred], axis=-1)

    # ------ inference decode (Pallas kernel), batch item 0, pre-NMS ------
    gy, gx = jnp.meshgrid(jnp.arange(Hs), jnp.arange(Ws), indexing="ij")
    grid_xy = jnp.stack([gx, gy], axis=-1).astype(jnp.float32).reshape(Hs * Ws, 1, 2)
    grid_flat = jnp.broadcast_to(grid_xy, (Hs * Ws, A, 2)).reshape(Hs * Ws * A, 2)
    anch_flat = jnp.broadcast_to(anchor_size[None, :, :],
                                 (Hs * Ws, A, 2)).reshape(Hs * Ws * A, 2)
    h_in, w_in = input_size
    inv_scale = 1.0 / jnp.array([[w_in, h_in, w_in, h_in]], jnp.float32)

    all_bbox, all_class, all_obj = decode_infer(
        xywh_pred[0], obj_pred[0], cls_pred[0], grid_flat, anch_flat, inv_scale,
        stride)
    # TODO(synk): numpy NMS / postprocess() not translated (see header).
    return all_bbox, all_class, all_obj


# ----------------------------------------------------------------------------
def _conv_reference(x, w, bias, act, pool):
    """Plain-XLA reference for the fused conv kernel (self-check)."""
    y = lax.conv_general_dilated(
        x.astype(jnp.float32), w.astype(jnp.float32), (1, 1), "SAME",
        dimension_numbers=("NHWC", "HWIO", "NHWC"))
    y = y + bias.reshape(1, 1, 1, -1)
    if act == "leaky":
        y = jnp.where(y >= 0.0, y, 0.1 * y)
    if pool:
        y = maxpool2(y)
    return y


if __name__ == "__main__":
    key = jax.random.PRNGKey(0)
    k_param, k_x, k_t = jax.random.split(key, 3)

    # --- small self-checks of the conv kernel against XLA (both tap paths) ---
    kc = jax.random.split(k_t, 4)
    xa = jax.random.normal(kc[0], (2, 16, 16, 8), jnp.float32).astype(jnp.bfloat16)
    wa, ba = make_conv(kc[1], 8, 32, 3)
    got_a = conv2d(xa, wa, ba, pool=True).astype(jnp.float32)
    want_a = _conv_reference(xa, wa, ba, "leaky", True)
    assert bool(jnp.allclose(got_a, want_a, atol=6e-2, rtol=6e-2)), \
        "conv kernel (tap-concat path) mismatch vs XLA reference"

    xb = jax.random.normal(kc[2], (2, 8, 8, 256), jnp.float32).astype(jnp.bfloat16)
    wb, bb = make_conv(kc[3], 256, 256, 3)
    got_b = conv2d(xb, wb, bb).astype(jnp.float32)
    want_b = _conv_reference(xb, wb, bb, "leaky", False)
    assert bool(jnp.allclose(got_b, want_b, atol=6e-2, rtol=6e-2)), \
        "conv kernel (per-tap path) mismatch vs XLA reference"

    # --- full forward ---
    num_classes = 20
    anchor_size = jnp.array([[1.19, 1.98], [2.79, 4.59], [4.53, 8.92],
                             [8.06, 5.29], [10.32, 10.65]], jnp.float32)
    A = anchor_size.shape[0]
    # smallest size where every feature-map width stays a multiple of 8 down to
    # the stride-32 head (keeps all convs on the lane/sublane-friendly path)
    input_size = (256, 256)                 # (H, W)

    params = init_params(k_param, num_classes=num_classes, anchor_number=A)
    x = jax.random.normal(k_x, (2, 3, input_size[0], input_size[1]), jnp.float32)

    fwd_train = jax.jit(lambda p, img, anc: yolo_v2_forward(
        p, img, input_size=input_size, num_classes=num_classes,
        anchor_size=anc, trainable=True))
    fwd_infer = jax.jit(lambda p, img, anc: yolo_v2_forward(
        p, img, input_size=input_size, num_classes=num_classes,
        anchor_size=anc, trainable=False))

    # trainable=True path: final_prediction [B, H*W*A, 1+C+4]
    final_pred = fwd_train(params, x, anchor_size)
    # trainable=False path: pre-NMS decoded tensors for batch item 0
    all_bbox, all_class, all_obj = fwd_infer(params, x, anchor_size)

    jax.block_until_ready((final_pred, all_bbox, all_class, all_obj))

    hs, ws = input_size[0] // 32, input_size[1] // 32
    assert final_pred.shape == (2, hs * ws * A, 1 + num_classes + 4)
    assert all_bbox.shape == (hs * ws * A, 4)
    assert all_class.shape == (hs * ws * A, num_classes)
    assert all_obj.shape == (hs * ws * A, 1)
    assert bool(jnp.all(jnp.isfinite(final_pred)))
    assert bool(jnp.all((all_bbox >= 0.0) & (all_bbox <= 1.0)))

    print("KERNEL_OK")
</pallas_src>

<mosaic_0001>
module attributes {stable_mosaic.version = 11 : i64} {
  func.func @_conv_kernel(%arg0: i32, %arg1: i32, %arg2: memref<1x2x18x18x8xbf16, #tpu.memory_space<vmem>>, %arg3: memref<3x24x32xbf16, #tpu.memory_space<vmem>>, %arg4: memref<1x32xf32, #tpu.memory_space<vmem>>, %arg5: memref<2x8x8x32xbf16, #tpu.memory_space<vmem>>) attributes {dimension_semantics = [#tpu.dimension_semantics<parallel>, #tpu.dimension_semantics<parallel>], iteration_bounds = array<i64: 1, 1>, scalar_prefetch = 0 : i64, scratch_operands = 0 : i64, tpu.core_type = #tpu.core_type<tc>, window_params = [{transform_indices = @transform_0, window_bounds = array<i64: 1, 2, 18, 18, 8>}, {transform_indices = @transform_1, window_bounds = array<i64: 3, 24, 32>}, {transform_indices = @transform_2, window_bounds = array<i64: 1, 32>}, {transform_indices = @transform_3, window_bounds = array<i64: 2, 8, 8, 32>}]} {
    %c0 = arith.constant 0 : index
    %c0_0 = arith.constant 0 : index
    %c0_1 = arith.constant 0 : index
    %c0_2 = arith.constant 0 : index
    %c0_3 = arith.constant 0 : index
    %0 = vector.load %arg2[%c0, %c0_0, %c0_1, %c0_2, %c0_3] : memref<1x2x18x18x8xbf16, #tpu.memory_space<vmem>>, vector<1x2x18x18x8xbf16>
    %1 = vector.shape_cast %0 : vector<1x2x18x18x8xbf16> to vector<2x18x18x8xbf16>
    %2 = vector.extract_strided_slice %1 {offsets = [0, 0, 0, 0], sizes = [2, 16, 18, 8], strides = [1, 1, 1, 1]} : vector<2x18x18x8xbf16> to vector<2x16x18x8xbf16>
    %3 = vector.extract_strided_slice %2 {offsets = [0, 0, 0, 0], sizes = [2, 16, 16, 8], strides = [1, 1, 1, 1]} : vector<2x16x18x8xbf16> to vector<2x16x16x8xbf16>
    %4 = vector.extract_strided_slice %2 {offsets = [0, 0, 1, 0], sizes = [2, 16, 16, 8], strides = [1, 1, 1, 1]} : vector<2x16x18x8xbf16> to vector<2x16x16x8xbf16>
    %5 = vector.extract_strided_slice %2 {offsets = [0, 0, 2, 0], sizes = [2, 16, 16, 8], strides = [1, 1, 1, 1]} : vector<2x16x18x8xbf16> to vector<2x16x16x8xbf16>
    %6 = tpu.concatenate %3, %4, %5 in 3 : vector<2x16x16x8xbf16>, vector<2x16x16x8xbf16>, vector<2x16x16x8xbf16> -> vector<2x16x16x24xbf16>
    %7 = vector.shape_cast %6 : vector<2x16x16x24xbf16> to vector<512x24xbf16>
    %c0_4 = arith.constant 0 : index
    %c0_5 = arith.constant 0 : index
    %c0_6 = arith.constant 0 : index
    %8 = vector.load %arg3[%c0_4, %c0_5, %c0_6] : memref<3x24x32xbf16, #tpu.memory_space<vmem>>, vector<1x24x32xbf16>
    %9 = vector.shape_cast %8 : vector<1x24x32xbf16> to vector<24x32xbf16>
    %cst = arith.constant dense<0.000000e+00> : vector<512x32xf32>
    %10 = tpu.matmul %7, %9, %cst {dimension_numbers = #tpu.dot_dimension_numbers<[1], [0], [0], [1], [0, 0, 1, 1], [], []>} : vector<512x24xbf16>, vector<24x32xbf16>, vector<512x32xf32> -> vector<512x32xf32>
    %11 = vector.extract_strided_slice %1 {offsets = [0, 1, 0, 0], sizes = [2, 16, 18, 8], strides = [1, 1, 1, 1]} : vector<2x18x18x8xbf16> to vector<2x16x18x8xbf16>
    %12 = vector.extract_strided_slice %11 {offsets = [0, 0, 0, 0], sizes = [2, 16, 16, 8], strides = [1, 1, 1, 1]} : vector<2x16x18x8xbf16> to vector<2x16x16x8xbf16>
    %13 = vector.extract_strided_slice %11 {offsets = [0, 0, 1, 0], sizes = [2, 16, 16, 8], strides = [1, 1, 1, 1]} : vector<2x16x18x8xbf16> to vector<2x16x16x8xbf16>
    %14 = vector.extract_strided_slice %11 {offsets = [0, 0, 2, 0], sizes = [2, 16, 16, 8], strides = [1, 1, 1, 1]} : vector<2x16x18x8xbf16> to vector<2x16x16x8xbf16>
    %15 = tpu.concatenate %12, %13, %14 in 3 : vector<2x16x16x8xbf16>, vector<2x16x16x8xbf16>, vector<2x16x16x8xbf16> -> vector<2x16x16x24xbf16>
    %16 = vector.shape_cast %15 : vector<2x16x16x24xbf16> to vector<512x24xbf16>
    %c1 = arith.constant 1 : index
    %c0_7 = arith.constant 0 : index
    %c0_8 = arith.constant 0 : index
    %17 = vector.load %arg3[%c1, %c0_7, %c0_8] : memref<3x24x32xbf16, #tpu.memory_space<vmem>>, vector<1x24x32xbf16>
    %18 = vector.shape_cast %17 : vector<1x24x32xbf16> to vector<24x32xbf16>
    %cst_9 = arith.constant dense<0.000000e+00> : vector<512x32xf32>
    %19 = tpu.matmul %16, %18, %cst_9 {dimension_numbers = #tpu.dot_dimension_numbers<[1], [0], [0], [1], [0, 0, 1, 1], [], []>} : vector<512x24xbf16>, vector<24x32xbf16>, vector<512x32xf32> -> vector<512x32xf32>
    %20 = arith.addf %10, %19 : vector<512x32xf32>
    %21 = vector.extract_strided_slice %1 {offsets = [0, 2, 0, 0], sizes = [2, 16, 18, 8], strides = [1, 1, 1, 1]} : vector<2x18x18x8xbf16> to vector<2x16x18x8xbf16>
    %22 = vector.extract_strided_slice %21 {offsets = [0, 0, 0, 0], sizes = [2, 16, 16, 8], strides = [1, 1, 1, 1]} : vector<2x16x18x8xbf16> to vector<2x16x16x8xbf16>
    %23 = vector.extract_strided_slice %21 {offsets = [0, 0, 1, 0], sizes = [2, 16, 16, 8], strides = [1, 1, 1, 1]} : vector<2x16x18x8xbf16> to vector<2x16x16x8xbf16>
    %24 = vector.extract_strided_slice %21 {offsets = [0, 0, 2, 0], sizes = [2, 16, 16, 8], strides = [1, 1, 1, 1]} : vector<2x16x18x8xbf16> to vector<2x16x16x8xbf16>
    %25 = tpu.concatenate %22, %23, %24 in 3 : vector<2x16x16x8xbf16>, vector<2x16x16x8xbf16>, vector<2x16x16x8xbf16> -> vector<2x16x16x24xbf16>
    %26 = vector.shape_cast %25 : vector<2x16x16x24xbf16> to vector<512x24xbf16>
    %c2 = arith.constant 2 : index
    %c0_10 = arith.constant 0 : index
    %c0_11 = arith.constant 0 : index
    %27 = vector.load %arg3[%c2, %c0_10, %c0_11] : memref<3x24x32xbf16, #tpu.memory_space<vmem>>, vector<1x24x32xbf16>
    %28 = vector.shape_cast %27 : vector<1x24x32xbf16> to vector<24x32xbf16>
    %cst_12 = arith.constant dense<0.000000e+00> : vector<512x32xf32>
    %29 = tpu.matmul %26, %28, %cst_12 {dimension_numbers = #tpu.dot_dimension_numbers<[1], [0], [0], [1], [0, 0, 1, 1], [], []>} : vector<512x24xbf16>, vector<24x32xbf16>, vector<512x32xf32> -> vector<512x32xf32>
    %30 = arith.addf %20, %29 : vector<512x32xf32>
    %c0_13 = arith.constant 0 : index
    %c0_14 = arith.constant 0 : index
    %31 = vector.load %arg4[%c0_13, %c0_14] : memref<1x32xf32, #tpu.memory_space<vmem>>, vector<1x32xf32>
    %32 = vector.broadcast %31 : vector<1x32xf32> to vector<512x32xf32>
    %33 = arith.addf %30, %32 : vector<512x32xf32>
    %cst_15 = arith.constant 0.000000e+00 : f32
    %34 = vector.broadcast %cst_15 : f32 to vector<512x32xf32>
    %35 = arith.cmpf oge, %33, %34 : vector<512x32xf32>
    %cst_16 = arith.constant 1.000000e-01 : f32
    %36 = vector.broadcast %cst_16 : f32 to vector<512x32xf32>
    %37 = arith.mulf %36, %33 : vector<512x32xf32>
    %38 = arith.select %35, %33, %37 : vector<512x32xi1>, vector<512x32xf32>
    %39 = vector.shape_cast %38 : vector<512x32xf32> to vector<2x16x16x32xf32>
    %40 = vector.shape_cast %39 : vector<2x16x16x32xf32> to vector<2x8x2x16x32xf32>
    %41 = vector.extract_strided_slice %40 {offsets = [0, 0, 0, 0, 0], sizes = [2, 8, 1, 16, 32], strides = [1, 1, 1, 1, 1]} : vector<2x8x2x16x32xf32> to vector<2x8x1x16x32xf32>
    %42 = vector.shape_cast %41 : vector<2x8x1x16x32xf32> to vector<2x8x16x32xf32>
    %43 = vector.extract_strided_slice %40 {offsets = [0, 0, 1, 0, 0], sizes = [2, 8, 1, 16, 32], strides = [1, 1, 1, 1, 1]} : vector<2x8x2x16x32xf32> to vector<2x8x1x16x32xf32>
    %44 = vector.shape_cast %43 : vector<2x8x1x16x32xf32> to vector<2x8x16x32xf32>
    %45 = arith.maximumf %42, %44 : vector<2x8x16x32xf32>
    %46 = vector.shape_cast %45 : vector<2x8x16x32xf32> to vector<2x8x8x2x32xf32>
    %cst_17 = arith.constant dense<0xFF800000> : vector<2x8x8x32xf32>
    %47 = vector.multi_reduction <maximumf>, %46, %cst_17 [3] : vector<2x8x8x2x32xf32> to vector<2x8x8x32xf32>
    %48 = arith.truncf %47 : vector<2x8x8x32xf32> to vector<2x8x8x32xbf16>
    %c0_18 = arith.constant 0 : index
    %c0_19 = arith.constant 0 : index
    %c0_20 = arith.constant 0 : index
    %c0_21 = arith.constant 0 : index
    %49 = vector.load %arg5[%c0_18, %c0_19, %c0_20, %c0_21] : memref<2x8x8x32xbf16, #tpu.memory_space<vmem>>, vector<2x8x8x32xbf16>
    tpu.vector_store %arg5[%c0_18, %c0_19, %c0_20, %c0_21], %48 {strides = array<i32>} : memref<2x8x8x32xbf16, #tpu.memory_space<vmem>>, vector<2x8x8x32xbf16>,
    return
  }
  func.func @transform_0(%arg0: i32, %arg1: i32) -> (i32, i32, i32, i32, i32) {
    %c0_i32 = arith.constant 0 : i32
    %c0_i32_0 = arith.constant 0 : i32
    %c0_i32_1 = arith.constant 0 : i32
    %c0_i32_2 = arith.constant 0 : i32
    %c0_i32_3 = arith.constant 0 : i32
    return %arg0, %c0_i32, %c0_i32_0, %c0_i32_1, %c0_i32_2 : i32, i32, i32, i32, i32
  }
  func.func @transform_1(%arg0: i32, %arg1: i32) -> (i32, i32, i32) {
    %c0_i32 = arith.constant 0 : i32
    %c0_i32_0 = arith.constant 0 : i32
    %c0_i32_1 = arith.constant 0 : i32
    return %c0_i32, %c0_i32_0, %arg1 : i32, i32, i32
  }
  func.func @transform_2(%arg0: i32, %arg1: i32) -> (i32, i32) {
    %c0_i32 = arith.constant 0 : i32
    %c0_i32_0 = arith.constant 0 : i32
    return %c0_i32, %arg1 : i32, i32
  }
  func.func @transform_3(%arg0: i32, %arg1: i32) -> (i32, i32, i32, i32) {
    %c0_i32 = arith.constant 0 : i32
    %c0_i32_0 = arith.constant 0 : i32
    %c0_i32_1 = arith.constant 0 : i32
    return %c0_i32, %arg0, %c0_i32_0, %arg1 : i32, i32, i32, i32
  }
}

</mosaic_0001>

<llo_original>
// kernel: tpu_custom_call.1
$region0: #{tpu_custom_call.1}
  #allocation0 [shape = 'u32[]', space=smem, size = 0x4, offset = 0x4, fixed_abs, tag = 'smem constant byte address 0x4 - core index']
  #allocation1 [shape = 'u32[144,128]{1,0:T(1,128)}', space=vmem, size = 0x12000, scoped, tag = 'internal scratch']
  %s0 = inlined_call_operand.vmem [shape: bf16[1,2,18,18,8], index: 0, kind: input, shape index: {}]
  %s1 = inlined_call_operand.vmem [shape: bf16[3,24,32], index: 1, kind: input, shape index: {}]
  %s2 = inlined_call_operand.vmem [shape: f32[1,32], index: 2, kind: input, shape index: {}]
  %s3 = inlined_call_operand.hbm [shape: bf16[2,8,8,32], index: 3, kind: output, shape index: {}]
  %s4 = sld [smem:[#allocation0]]
  $region22: #{tpu_custom_call.1} parent=0
    _
  %s6 = ssub.s32 1, %s4
  %s7 = scalar_select 0, %s6, %s4
  $region1: #{tpu_custom_call.1} parent=0
    #allocation2 [shape = 'u8[32768]{0}', space=vmem, size = 0x8000, scoped, tag = 'output window, operand 0, single buffered']
    #allocation3 [shape = 's32[1]{0}', space=sflag, size = 0x4, scoped, tag = 'scoped memory for tpu_custom_call.1']
    %8 = vsyncpa [#allocation3], 0
    // Predicated region
    $region2: #{tpu_custom_call.1} parent=1 // pred_check
      _
    $region3: #{tpu_custom_call.1} parent=1 // pred_check_branch
      %10 = sbr.rel (0) target = $region5
    $region4: #{tpu_custom_call.1} parent=1 // pred_region
      _
    $region5: #{tpu_custom_call.1} parent=1 // pred_fallthru
      _
    // Predicated region
    $region6: #{tpu_custom_call.1} parent=1 // pred_check
      _
    $region7: #{tpu_custom_call.1} parent=1 // pred_check_branch
      %12 = sbr.rel (0) target = $region9
    $region8: #{tpu_custom_call.1} parent=1 // pred_region
      _
    $region9: #{tpu_custom_call.1} parent=1 // pred_fallthru
      _
    // Predicated region
    $region10: #{tpu_custom_call.1} parent=1 // pred_check
      _
    $region11: #{tpu_custom_call.1} parent=1 // pred_check_branch
      %14 = sbr.rel (0) target = $region13
    $region12: #{tpu_custom_call.1} parent=1 // pred_region
      _
    $region13: #{tpu_custom_call.1} parent=1 // pred_fallthru
      _
    %v16 = vld [vmem:[%s0] sm:$0xf]
    %v17 = vld [vmem:[%s0 + $0x4] sm:$0xf]
    %v18 = vld [vmem:[%s0 + $0x8] sm:$0x1]
    %v19 = vld [vmem:[%s0 + $0xc] sm:$0xf]
    %v20 = vld [vmem:[%s0 + $0x10] sm:$0xf]
    %v21 = vld [vmem:[%s0 + $0x14] sm:$0x1]
    %v22 = vld [vmem:[%s0 + $0x18] sm:$0xf]
    %v23 = vld [vmem:[%s0 + $0x1c] sm:$0xf]
    %v24 = vld [vmem:[%s0 + $0x20] sm:$0x1]
    %v25 = vld [vmem:[%s0 + $0x24] sm:$0xf]
    %v26 = vld [vmem:[%s0 + $0x28] sm:$0xf]
    %v27 = vld [vmem:[%s0 + $0x2c] sm:$0x1]
    %v28 = vld [vmem:[%s0 + $0x30] sm:$0xf]
    %v29 = vld [vmem:[%s0 + $0x34] sm:$0xf]
    %v30 = vld [vmem:[%s0 + $0x38] sm:$0x1]
    %v31 = vld [vmem:[%s0 + $0x3c] sm:$0xf]
    %v32 = vld [vmem:[%s0 + $0x40] sm:$0xf]
    %v33 = vld [vmem:[%s0 + $0x44] sm:$0x1]
    %v34 = vld [vmem:[%s0 + $0x48] sm:$0xf]
    %v35 = vld [vmem:[%s0 + $0x4c] sm:$0xf]
    %v36 = vld [vmem:[%s0 + $0x50] sm:$0x1]
    %v37 = vld [vmem:[%s0 + $0x54] sm:$0xf]
    %v38 = vld [vmem:[%s0 + $0x58] sm:$0xf]
    %v39 = vld [vmem:[%s0 + $0x5c] sm:$0x1]
    %v40 = vld [vmem:[%s0 + $0x60] sm:$0xf]
    %v41 = vld [vmem:[%s0 + $0x64] sm:$0xf]
    %v42 = vld [vmem:[%s0 + $0x68] sm:$0x1]
    %v43 = vld [vmem:[%s0 + $0x6c] sm:$0xf]
    %v44 = vld [vmem:[%s0 + $0x70] sm:$0xf]
    %v45 = vld [vmem:[%s0 + $0x74] sm:$0x1]
    %v46 = vld [vmem:[%s0 + $0x78] sm:$0xf]
    %v47 = vld [vmem:[%s0 + $0x7c] sm:$0xf]
    %v48 = vld [vmem:[%s0 + $0x80] sm:$0x1]
    %v49 = vld [vmem:[%s0 + $0x84] sm:$0xf]
    %v50 = vld [vmem:[%s0 + $0x88] sm:$0xf]
    %v51 = vld [vmem:[%s0 + $0x8c] sm:$0x1]
    %v52 = vld [vmem:[%s0 + $0x90] sm:$0xf]
    %v53 = vld [vmem:[%s0 + $0x94] sm:$0xf]
    %v54 = vld [vmem:[%s0 + $0x98] sm:$0x1]
    %v55 = vld [vmem:[%s0 + $0x9c] sm:$0xf]
    %v56 = vld [vmem:[%s0 + $0xa0] sm:$0xf]
    %v57 = vld [vmem:[%s0 + $0xa4] sm:$0x1]
    %v58 = vld [vmem:[%s0 + $0xa8] sm:$0xf]
    %v59 = vld [vmem:[%s0 + $0xac] sm:$0xf]
    %v60 = vld [vmem:[%s0 + $0xb0] sm:$0x1]
    %v61 = vld [vmem:[%s0 + $0xb4] sm:$0xf]
    %v62 = vld [vmem:[%s0 + $0xb8] sm:$0xf]
    %v63 = vld [vmem:[%s0 + $0xbc] sm:$0x1]
    %v64 = vld [vmem:[%s0 + $0xc0] sm:$0xf]
    %v65 = vld [vmem:[%s0 + $0xc4] sm:$0xf]
    %v66 = vld [vmem:[%s0 + $0xc8] sm:$0x1]
    %v67 = vld [vmem:[%s0 + $0xcc] sm:$0xf]
    %v68 = vld [vmem:[%s0 + $0xd0] sm:$0xf]
    %v69 = vld [vmem:[%s0 + $0xd4] sm:$0x1]
    %v70 = vld [vmem:[%s0 + $0xd8] sm:$0xf]
    %v71 = vld [vmem:[%s0 + $0xdc] sm:$0xf]
    %v72 = vld [vmem:[%s0 + $0xe0] sm:$0x1]
    %v73 = vld [vmem:[%s0 + $0xe4] sm:$0xf]
    %v74 = vld [vmem:[%s0 + $0xe8] sm:$0xf]
    %v75 = vld [vmem:[%s0 + $0xec] sm:$0x1]
    %v76 = vld [vmem:[%s0 + $0xf0] sm:$0xf]
    %v77 = vld [vmem:[%s0 + $0xf4] sm:$0xf]
    %v78 = vld [vmem:[%s0 + $0xf8] sm:$0x1]
    %v79 = vld [vmem:[%s0 + $0xfc] sm:$0xf]
    %v80 = vld [vmem:[%s0 + $0x100] sm:$0xf]
    %v81 = vld [vmem:[%s0 + $0x104] sm:$0x1]
    %v82 = vld [vmem:[%s0 + $0x108] sm:$0xf]
    %v83 = vld [vmem:[%s0 + $0x10c] sm:$0xf]
    %v84 = vld [vmem:[%s0 + $0x110] sm:$0x1]
    %v85 = vld [vmem:[%s0 + $0x114] sm:$0xf]
    %v86 = vld [vmem:[%s0 + $0x118] sm:$0xf]
    %v87 = vld [vmem:[%s0 + $0x11c] sm:$0x1]
    %v88 = vld [vmem:[%s0 + $0x120] sm:$0xf]
    %v89 = vld [vmem:[%s0 + $0x124] sm:$0xf]
    %v90 = vld [vmem:[%s0 + $0x128] sm:$0x1]
    %v91 = vld [vmem:[%s0 + $0x12c] sm:$0xf]
    %v92 = vld [vmem:[%s0 + $0x130] sm:$0xf]
    %v93 = vld [vmem:[%s0 + $0x134] sm:$0x1]
    %v94 = vld [vmem:[%s0 + $0x138] sm:$0xf]
    %v95 = vld [vmem:[%s0 + $0x13c] sm:$0xf]
    %v96 = vld [vmem:[%s0 + $0x140] sm:$0x1]
    %v97 = vld [vmem:[%s0 + $0x144] sm:$0xf]
    %v98 = vld [vmem:[%s0 + $0x148] sm:$0xf]
    %v99 = vld [vmem:[%s0 + $0x14c] sm:$0x1]
    %v100 = vld [vmem:[%s0 + $0x150] sm:$0xf]
    %v101 = vld [vmem:[%s0 + $0x154] sm:$0xf]
    %v102 = vld [vmem:[%s0 + $0x158] sm:$0x1]
    %v103 = vld [vmem:[%s0 + $0x15c] sm:$0xf]
    %v104 = vld [vmem:[%s0 + $0x160] sm:$0xf]
    %v105 = vld [vmem:[%s0 + $0x164] sm:$0x1]
    %v106 = vld [vmem:[%s0 + $0x168] sm:$0xf]
    %v107 = vld [vmem:[%s0 + $0x16c] sm:$0xf]
    %v108 = vld [vmem:[%s0 + $0x170] sm:$0x1]
    %v109 = vld [vmem:[%s0 + $0x174] sm:$0xf]
    %v110 = vld [vmem:[%s0 + $0x178] sm:$0xf]
    %v111 = vld [vmem:[%s0 + $0x17c] sm:$0x1]
    %v112 = vld [vmem:[%s0 + $0x180] sm:$0xf]
    %v113 = vld [vmem:[%s0 + $0x184] sm:$0xf]
    %v114 = vld [vmem:[%s0 + $0x188] sm:$0x1]
    %v115 = vld [vmem:[%s0 + $0x18c] sm:$0xf]
    %v116 = vld [vmem:[%s0 + $0x190] sm:$0xf]
    %v117 = vld [vmem:[%s0 + $0x194] sm:$0x1]
    %v118 = vld [vmem:[%s0 + $0x198] sm:$0xf]
    %v119 = vld [vmem:[%s0 + $0x19c] sm:$0xf]
    %v120 = vld [vmem:[%s0 + $0x1a0] sm:$0x1]
    %v121 = vld [vmem:[%s0 + $0x1a4] sm:$0xf]
    %v122 = vld [vmem:[%s0 + $0x1a8] sm:$0xf]
    %v123 = vld [vmem:[%s0 + $0x1ac] sm:$0x1]
    %v188 = vunpack.c.l.b16 %v16
    %v189 = vunpack.c.l.b16 %v17
    %v190 = vunpack.c.l.b16 %v19
    %v191 = vunpack.c.l.b16 %v20
    %v192 = vunpack.c.l.b16 %v22
    %v193 = vunpack.c.l.b16 %v23
    %v194 = vunpack.c.l.b16 %v25
    %v195 = vunpack.c.l.b16 %v26
    %v196 = vunpack.c.l.b16 %v28
    %v197 = vunpack.c.l.b16 %v29
    %v198 = vunpack.c.l.b16 %v31
    %v199 = vunpack.c.l.b16 %v32
    %v200 = vunpack.c.l.b16 %v34
    %v201 = vunpack.c.l.b16 %v35
    %v202 = vunpack.c.l.b16 %v37
    %v203 = vunpack.c.l.b16 %v38
    %v204 = vunpack.c.l.b16 %v40
    %v205 = vunpack.c.l.b16 %v41
    %v206 = vunpack.c.l.b16 %v43
    %v207 = vunpack.c.l.b16 %v44
    %v208 = vunpack.c.l.b16 %v46
    %v209 = vunpack.c.l.b16 %v47
    %v210 = vunpack.c.l.b16 %v49
    %v211 = vunpack.c.l.b16 %v50
    %v212 = vunpack.c.l.b16 %v52
    %v213 = vunpack.c.l.b16 %v53
    %v214 = vunpack.c.l.b16 %v55
    %v215 = vunpack.c.l.b16 %v56
    %v216 = vunpack.c.l.b16 %v58
    %v217 = vunpack.c.l.b16 %v59
    %v218 = vunpack.c.l.b16 %v61
    %v219 = vunpack.c.l.b16 %v62
    %v220 = vunpack.c.l.b16 %v70
    %v221 = vunpack.c.l.b16 %v71
    %v222 = vunpack.c.l.b16 %v73
    %v223 = vunpack.c.l.b16 %v74
    %v224 = vunpack.c.l.b16 %v76
    %v225 = vunpack.c.l.b16 %v77
    %v226 = vunpack.c.l.b16 %v79
    %v227 = vunpack.c.l.b16 %v80
    %v228 = vunpack.c.l.b16 %v82
    %v229 = vunpack.c.l.b16 %v83
    %v230 = vunpack.c.l.b16 %v85
    %v231 = vunpack.c.l.b16 %v86
    %v232 = vunpack.c.l.b16 %v88
    %v233 = vunpack.c.l.b16 %v89
    %v234 = vunpack.c.l.b16 %v91
    %v235 = vunpack.c.l.b16 %v92
    %v236 = vunpack.c.l.b16 %v94
    %v237 = vunpack.c.l.b16 %v95
    %v238 = vunpack.c.l.b16 %v97
    %v239 = vunpack.c.l.b16 %v98
    %v240 = vunpack.c.l.b16 %v100
    %v241 = vunpack.c.l.b16 %v101
    %v242 = vunpack.c.l.b16 %v103
    %v243 = vunpack.c.l.b16 %v104
    %v244 = vunpack.c.l.b16 %v106
    %v245 = vunpack.c.l.b16 %v107
    %v246 = vunpack.c.l.b16 %v109
    %v247 = vunpack.c.l.b16 %v110
    %v248 = vunpack.c.l.b16 %v112
    %v249 = vunpack.c.l.b16 %v113
    %v250 = vunpack.c.l.b16 %v115
    %v251 = vunpack.c.l.b16 %v116
    %v252 = vpack.c.b16 %v189, %v188
    %v253 = vpack.c.b16 %v191, %v190
    %v254 = vpack.c.b16 %v193, %v192
    %v255 = vpack.c.b16 %v195, %v194
    %v256 = vpack.c.b16 %v197, %v196
    %v257 = vpack.c.b16 %v199, %v198
    %v258 = vpack.c.b16 %v201, %v200
    %v259 = vpack.c.b16 %v203, %v202
    %v260 = vpack.c.b16 %v205, %v204
    %v261 = vpack.c.b16 %v207, %v206
    %v262 = vpack.c.b16 %v209, %v208
    %v263 = vpack.c.b16 %v211, %v210
    %v264 = vpack.c.b16 %v213, %v212
    %v265 = vpack.c.b16 %v215, %v214
    %v266 = vpack.c.b16 %v217, %v216
    %v267 = vpack.c.b16 %v219, %v218
    %v268 = vpack.c.b16 %v221, %v220
    %v269 = vpack.c.b16 %v223, %v222
    %v270 = vpack.c.b16 %v225, %v224
    %v271 = vpack.c.b16 %v227, %v226
    %v272 = vpack.c.b16 %v229, %v228
    %v273 = vpack.c.b16 %v231, %v230
    %v274 = vpack.c.b16 %v233, %v232
    %v275 = vpack.c.b16 %v235, %v234
    %v276 = vpack.c.b16 %v237, %v236
    %v277 = vpack.c.b16 %v239, %v238
    %v278 = vpack.c.b16 %v241, %v240
    %v279 = vpack.c.b16 %v243, %v242
    %v280 = vpack.c.b16 %v245, %v244
    %v281 = vpack.c.b16 %v247, %v246
    %v282 = vpack.c.b16 %v249, %v248
    %v283 = vpack.c.b16 %v251, %v250
    %v316 = vunpack.c.l.b16 %v18
    %v317 = vunpack.c.l.b16 %v21
    %v318 = vunpack.c.l.b16 %v24
    %v319 = vunpack.c.l.b16 %v27
    %v320 = vunpack.c.l.b16 %v30
    %v321 = vunpack.c.l.b16 %v33
    %v322 = vunpack.c.l.b16 %v36
    %v323 = vunpack.c.l.b16 %v39
    %v324 = vunpack.c.l.b16 %v42
    %v325 = vunpack.c.l.b16 %v45
    %v326 = vunpack.c.l.b16 %v48
    %v327 = vunpack.c.l.b16 %v51
    %v328 = vunpack.c.l.b16 %v54
    %v329 = vunpack.c.l.b16 %v57
    %v330 = vunpack.c.l.b16 %v60
    %v331 = vunpack.c.l.b16 %v63
    %v332 = vunpack.c.l.b16 %v72
    %v333 = vunpack.c.l.b16 %v75
    %v334 = vunpack.c.l.b16 %v78
    %v335 = vunpack.c.l.b16 %v81
    %v336 = vunpack.c.l.b16 %v84
    %v337 = vunpack.c.l.b16 %v87
    %v338 = vunpack.c.l.b16 %v90
    %v339 = vunpack.c.l.b16 %v93
    %v340 = vunpack.c.l.b16 %v96
    %v341 = vunpack.c.l.b16 %v99
    %v342 = vunpack.c.l.b16 %v102
    %v343 = vunpack.c.l.b16 %v105
    %v344 = vunpack.c.l.b16 %v108
    %v345 = vunpack.c.l.b16 %v111
    %v346 = vunpack.c.l.b16 %v114
    %v347 = vunpack.c.l.b16 %v117
    %v348 = vpack.c.b16 %v316, %v316
    %v349 = vpack.c.b16 %v317, %v317
    %v350 = vpack.c.b16 %v318, %v318
    %v351 = vpack.c.b16 %v319, %v319
    %v352 = vpack.c.b16 %v320, %v320
    %v353 = vpack.c.b16 %v321, %v321
    %v354 = vpack.c.b16 %v322, %v322
    %v355 = vpack.c.b16 %v323, %v323
    %v356 = vpack.c.b16 %v324, %v324
    %v357 = vpack.c.b16 %v325, %v325
    %v358 = vpack.c.b16 %v326, %v326
    %v359 = vpack.c.b16 %v327, %v327
    %v360 = vpack.c.b16 %v328, %v328
    %v361 = vpack.c.b16 %v329, %v329
    %v362 = vpack.c.b16 %v330, %v330
    %v363 = vpack.c.b16 %v331, %v331
    %v364 = vpack.c.b16 %v332, %v332
    %v365 = vpack.c.b16 %v333, %v333
    %v366 = vpack.c.b16 %v334, %v334
    %v367 = vpack.c.b16 %v335, %v335
    %v368 = vpack.c.b16 %v336, %v336
    %v369 = vpack.c.b16 %v337, %v337
    %v370 = vpack.c.b16 %v338, %v338
    %v371 = vpack.c.b16 %v339, %v339
    %v372 = vpack.c.b16 %v340, %v340
    %v373 = vpack.c.b16 %v341, %v341
    %v374 = vpack.c.b16 %v342, %v342
    %v375 = vpack.c.b16 %v343, %v343
    %v376 = vpack.c.b16 %v344, %v344
    %v377 = vpack.c.b16 %v345, %v345
    %v378 = vpack.c.b16 %v346, %v346
    %v379 = vpack.c.b16 %v347, %v347
    %vm380 = vsmask.f32 7424
    %v382 = vshrl.u32 %v252, 16
    %v384 = vshll.u32 %v252, 16
    %v386 = vrot.slane %v384, 1
    %v387 = vor.u32 %v382, %v386
    %v389 = vshll.u32 %v348, 16
    %v391 = vrot.slane %v389, 1
    %v392 = vsel %vm380, %v387, %v391
    %v394 = vshrl.u32 %v253, 16
    %v396 = vshll.u32 %v253, 16
    %v398 = vrot.slane %v396, 1
    %v399 = vor.u32 %v394, %v398
    %v401 = vshll.u32 %v349, 16
    %v403 = vrot.slane %v401, 1
    %v404 = vsel %vm380, %v399, %v403
    %v406 = vshrl.u32 %v254, 16
    %v408 = vshll.u32 %v254, 16
    %v410 = vrot.slane %v408, 1
    %v411 = vor.u32 %v406, %v410
    %v413 = vshll.u32 %v350, 16
    %v415 = vrot.slane %v413, 1
    %v416 = vsel %vm380, %v411, %v415
    %v418 = vshrl.u32 %v255, 16
    %v420 = vshll.u32 %v255, 16
    %v422 = vrot.slane %v420, 1
    %v423 = vor.u32 %v418, %v422
    %v425 = vshll.u32 %v351, 16
    %v427 = vrot.slane %v425, 1
    %v428 = vsel %vm380, %v423, %v427
    %v430 = vshrl.u32 %v256, 16
    %v432 = vshll.u32 %v256, 16
    %v434 = vrot.slane %v432, 1
    %v435 = vor.u32 %v430, %v434
    %v437 = vshll.u32 %v352, 16
    %v439 = vrot.slane %v437, 1
    %v440 = vsel %vm380, %v435, %v439
    %v442 = vshrl.u32 %v257, 16
    %v444 = vshll.u32 %v257, 16
    %v446 = vrot.slane %v444, 1
    %v447 = vor.u32 %v442, %v446
    %v449 = vshll.u32 %v353, 16
    %v451 = vrot.slane %v449, 1
    %v452 = vsel %vm380, %v447, %v451
    %v454 = vshrl.u32 %v258, 16
    %v456 = vshll.u32 %v258, 16
    %v458 = vrot.slane %v456, 1
    %v459 = vor.u32 %v454, %v458
    %v461 = vshll.u32 %v354, 16
    %v463 = vrot.slane %v461, 1
    %v464 = vsel %vm380, %v459, %v463
    %v466 = vshrl.u32 %v259, 16
    %v468 = vshll.u32 %v259, 16
    %v470 = vrot.slane %v468, 1
    %v471 = vor.u32 %v466, %v470
    %v473 = vshll.u32 %v355, 16
    %v475 = vrot.slane %v473, 1
    %v476 = vsel %vm380, %v471, %v475
    %v478 = vshrl.u32 %v260, 16
    %v480 = vshll.u32 %v260, 16
    %v482 = vrot.slane %v480, 1
    %v483 = vor.u32 %v478, %v482
    %v485 = vshll.u32 %v356, 16
    %v487 = vrot.slane %v485, 1
    %v488 = vsel %vm380, %v483, %v487
    %v490 = vshrl.u32 %v261, 16
    %v492 = vshll.u32 %v261, 16
    %v494 = vrot.slane %v492, 1
    %v495 = vor.u32 %v490, %v494
    %v497 = vshll.u32 %v357, 16
    %v499 = vrot.slane %v497, 1
    %v500 = vsel %vm380, %v495, %v499
    %v502 = vshrl.u32 %v262, 16
    %v504 = vshll.u32 %v262, 16
    %v506 = vrot.slane %v504, 1
    %v507 = vor.u32 %v502, %v506
    %v509 = vshll.u32 %v358, 16
    %v511 = vrot.slane %v509, 1
    %v512 = vsel %vm380, %v507, %v511
    %v514 = vshrl.u32 %v263, 16
    %v516 = vshll.u32 %v263, 16
    %v518 = vrot.slane %v516, 1
    %v519 = vor.u32 %v514, %v518
    %v521 = vshll.u32 %v359, 16
    %v523 = vrot.slane %v521, 1
    %v524 = vsel %vm380, %v519, %v523
    %v526 = vshrl.u32 %v264, 16
    %v528 = vshll.u32 %v264, 16
    %v530 = vrot.slane %v528, 1
    %v531 = vor.u32 %v526, %v530
    %v533 = vshll.u32 %v360, 16
    %v535 = vrot.slane %v533, 1
    %v536 = vsel %vm380, %v531, %v535
    %v538 = vshrl.u32 %v265, 16
    %v540 = vshll.u32 %v265, 16
    %v542 = vrot.slane %v540, 1
    %v543 = vor.u32 %v538, %v542
    %v545 = vshll.u32 %v361, 16
    %v547 = vrot.slane %v545, 1
    %v548 = vsel %vm380, %v543, %v547
    %v550 = vshrl.u32 %v266, 16
    %v552 = vshll.u32 %v266, 16
    %v554 = vrot.slane %v552, 1
    %v555 = vor.u32 %v550, %v554
    %v557 = vshll.u32 %v362, 16
    %v559 = vrot.slane %v557, 1
    %v560 = vsel %vm380, %v555, %v559
    %v562 = vshrl.u32 %v267, 16
    %v564 = vshll.u32 %v267, 16
    %v566 = vrot.slane %v564, 1
    %v567 = vor.u32 %v562, %v566
    %v569 = vshll.u32 %v363, 16
    %v571 = vrot.slane %v569, 1
    %v572 = vsel %vm380, %v567, %v571
    %v574 = vshrl.u32 %v268, 16
    %v576 = vshll.u32 %v268, 16
    %v578 = vrot.slane %v576, 1
    %v579 = vor.u32 %v574, %v578
    %v581 = vshll.u32 %v364, 16
    %v583 = vrot.slane %v581, 1
    %v584 = vsel %vm380, %v579, %v583
    %v586 = vshrl.u32 %v269, 16
    %v588 = vshll.u32 %v269, 16
    %v590 = vrot.slane %v588, 1
    %v591 = vor.u32 %v586, %v590
    %v593 = vshll.u32 %v365, 16
    %v595 = vrot.slane %v593, 1
    %v596 = vsel %vm380, %v591, %v595
    %v598 = vshrl.u32 %v270, 16
    %v600 = vshll.u32 %v270, 16
    %v602 = vrot.slane %v600, 1
    %v603 = vor.u32 %v598, %v602
    %v605 = vshll.u32 %v366, 16
    %v607 = vrot.slane %v605, 1
    %v608 = vsel %vm380, %v603, %v607
    %v610 = vshrl.u32 %v271, 16
    %v612 = vshll.u32 %v271, 16
    %v614 = vrot.slane %v612, 1
    %v615 = vor.u32 %v610, %v614
    %v617 = vshll.u32 %v367, 16
    %v619 = vrot.slane %v617, 1
    %v620 = vsel %vm380, %v615, %v619
    %v622 = vshrl.u32 %v272, 16
    %v624 = vshll.u32 %v272, 16
    %v626 = vrot.slane %v624, 1
    %v627 = vor.u32 %v622, %v626
    %v629 = vshll.u32 %v368, 16
    %v631 = vrot.slane %v629, 1
    %v632 = vsel %vm380, %v627, %v631
    %v634 = vshrl.u32 %v273, 16
    %v636 = vshll.u32 %v273, 16
    %v638 = vrot.slane %v636, 1
    %v639 = vor.u32 %v634, %v638
    %v641 = vshll.u32 %v369, 16
    %v643 = vrot.slane %v641, 1
    %v644 = vsel %vm380, %v639, %v643
    %v646 = vshrl.u32 %v274, 16
    %v648 = vshll.u32 %v274, 16
    %v650 = vrot.slane %v648, 1
    %v651 = vor.u32 %v646, %v650
    %v653 = vshll.u32 %v370, 16
    %v655 = vrot.slane %v653, 1
    %v656 = vsel %vm380, %v651, %v655
    %v658 = vshrl.u32 %v275, 16
    %v660 = vshll.u32 %v275, 16
    %v662 = vrot.slane %v660, 1
    %v663 = vor.u32 %v658, %v662
    %v665 = vshll.u32 %v371, 16
    %v667 = vrot.slane %v665, 1
    %v668 = vsel %vm380, %v663, %v667
    %v670 = vshrl.u32 %v276, 16
    %v672 = vshll.u32 %v276, 16
    %v674 = vrot.slane %v672, 1
    %v675 = vor.u32 %v670, %v674
    %v677 = vshll.u32 %v372, 16
    %v679 = vrot.slane %v677, 1
    %v680 = vsel %vm380, %v675, %v679
    %v682 = vshrl.u32 %v277, 16
    %v684 = vshll.u32 %v277, 16
    %v686 = vrot.slane %v684, 1
    %v687 = vor.u32 %v682, %v686
    %v689 = vshll.u32 %v373, 16
    %v691 = vrot.slane %v689, 1
    %v692 = vsel %vm380, %v687, %v691
    %v694 = vshrl.u32 %v278, 16
    %v696 = vshll.u32 %v278, 16
    %v698 = vrot.slane %v696, 1
    %v699 = vor.u32 %v694, %v698
    %v701 = vshll.u32 %v374, 16
    %v703 = vrot.slane %v701, 1
    %v704 = vsel %vm380, %v699, %v703
    %v706 = vshrl.u32 %v279, 16
    %v708 = vshll.u32 %v279, 16
    %v710 = vrot.slane %v708, 1
    %v711 = vor.u32 %v706, %v710
    %v713 = vshll.u32 %v375, 16
    %v715 = vrot.slane %v713, 1
    %v716 = vsel %vm380, %v711, %v715
    %v718 = vshrl.u32 %v280, 16
    %v720 = vshll.u32 %v280, 16
    %v722 = vrot.slane %v720, 1
    %v723 = vor.u32 %v718, %v722
    %v725 = vshll.u32 %v376, 16
    %v727 = vrot.slane %v725, 1
    %v728 = vsel %vm380, %v723, %v727
    %v730 = vshrl.u32 %v281, 16
    %v732 = vshll.u32 %v281, 16
    %v734 = vrot.slane %v732, 1
    %v735 = vor.u32 %v730, %v734
    %v737 = vshll.u32 %v377, 16
    %v739 = vrot.slane %v737, 1
    %v740 = vsel %vm380, %v735, %v739
    %v742 = vshrl.u32 %v282, 16
    %v744 = vshll.u32 %v282, 16
    %v746 = vrot.slane %v744, 1
    %v747 = vor.u32 %v742, %v746
    %v749 = vshll.u32 %v378, 16
    %v751 = vrot.slane %v749, 1
    %v752 = vsel %vm380, %v747, %v751
    %v754 = vshrl.u32 %v283, 16
    %v756 = vshll.u32 %v283, 16
    %v758 = vrot.slane %v756, 1
    %v759 = vor.u32 %v754, %v758
    %v761 = vshll.u32 %v379, 16
    %v763 = vrot.slane %v761, 1
    %v764 = vsel %vm380, %v759, %v763
    %765 = vrot.lane.b32.xlu0 %v392, 8
    %v766 = vpop.permute.xlu0 %765
    %767 = vrot.lane.b32.xlu0 %v404, 8
    %v768 = vpop.permute.xlu0 %767
    %769 = vrot.lane.b32.xlu0 %v416, 8
    %v770 = vpop.permute.xlu0 %769
    %771 = vrot.lane.b32.xlu0 %v428, 8
    %v772 = vpop.permute.xlu0 %771
    %773 = vrot.lane.b32.xlu0 %v440, 8
    %v774 = vpop.permute.xlu0 %773
    %775 = vrot.lane.b32.xlu0 %v452, 8
    %v776 = vpop.permute.xlu0 %775
    %777 = vrot.lane.b32.xlu0 %v464, 8
    %v778 = vpop.permute.xlu0 %777
    %779 = vrot.lane.b32.xlu0 %v476, 8
    %v780 = vpop.permute.xlu0 %779
    %781 = vrot.lane.b32.xlu0 %v488, 8
    %v782 = vpop.permute.xlu0 %781
    %783 = vrot.lane.b32.xlu0 %v500, 8
    %v784 = vpop.permute.xlu0 %783
    %785 = vrot.lane.b32.xlu0 %v512, 8
    %v786 = vpop.permute.xlu0 %785
    %787 = vrot.lane.b32.xlu0 %v524, 8
    %v788 = vpop.permute.xlu0 %787
    %789 = vrot.lane.b32.xlu0 %v536, 8
    %v790 = vpop.permute.xlu0 %789
    %791 = vrot.lane.b32.xlu0 %v548, 8
    %v792 = vpop.permute.xlu0 %791
    %793 = vrot.lane.b32.xlu0 %v560, 8
    %v794 = vpop.permute.xlu0 %793
    %795 = vrot.lane.b32.xlu0 %v572, 8
    %v796 = vpop.permute.xlu0 %795
    %797 = vrot.lane.b32.xlu0 %v584, 8
    %v798 = vpop.permute.xlu0 %797
    %799 = vrot.lane.b32.xlu0 %v596, 8
    %v800 = vpop.permute.xlu0 %799
    %801 = vrot.lane.b32.xlu0 %v608, 8
    %v802 = vpop.permute.xlu0 %801
    %803 = vrot.lane.b32.xlu0 %v620, 8
    %v804 = vpop.permute.xlu0 %803
    %805 = vrot.lane.b32.xlu0 %v632, 8
    %v806 = vpop.permute.xlu0 %805
    %807 = vrot.lane.b32.xlu0 %v644, 8
    %v808 = vpop.permute.xlu0 %807
    %809 = vrot.lane.b32.xlu0 %v656, 8
    %v810 = vpop.permute.xlu0 %809
    %811 = vrot.lane.b32.xlu0 %v668, 8
    %v812 = vpop.permute.xlu0 %811
    %813 = vrot.lane.b32.xlu0 %v680, 8
    %v814 = vpop.permute.xlu0 %813
    %815 = vrot.lane.b32.xlu0 %v692, 8
    %v816 = vpop.permute.xlu0 %815
    %817 = vrot.lane.b32.xlu0 %v704, 8
    %v818 = vpop.permute.xlu0 %817
    %819 = vrot.lane.b32.xlu0 %v716, 8
    %v820 = vpop.permute.xlu0 %819
    %821 = vrot.lane.b32.xlu0 %v728, 8
    %v822 = vpop.permute.xlu0 %821
    %823 = vrot.lane.b32.xlu0 %v740, 8
    %v824 = vpop.permute.xlu0 %823
    %825 = vrot.lane.b32.xlu0 %v752, 8
    %v826 = vpop.permute.xlu0 %825
    %827 = vrot.lane.b32.xlu0 %v764, 8
    %v828 = vpop.permute.xlu0 %827
    %vm829 = vcmask 1046528
    %v830 = vrot.slane %v252, 1
    %v831 = vrot.slane %v348, 1
    %v832 = vsel %vm829, %v830, %v831
    %v833 = vrot.slane %v253, 1
    %v834 = vrot.slane %v349, 1
    %v835 = vsel %vm829, %v833, %v834
    %v836 = vrot.slane %v254, 1
    %v837 = vrot.slane %v350, 1
    %v838 = vsel %vm829, %v836, %v837
    %v839 = vrot.slane %v255, 1
    %v840 = vrot.slane %v351, 1
    %v841 = vsel %vm829, %v839, %v840
    %v842 = vrot.slane %v256, 1
    %v843 = vrot.slane %v352, 1
    %v844 = vsel %vm829, %v842, %v843
    %v845 = vrot.slane %v257, 1
    %v846 = vrot.slane %v353, 1
    %v847 = vsel %vm829, %v845, %v846
    %v848 = vrot.slane %v258, 1
    %v849 = vrot.slane %v354, 1
    %v850 = vsel %vm829, %v848, %v849
    %v851 = vrot.slane %v259, 1
    %v852 = vrot.slane %v355, 1
    %v853 = vsel %vm829, %v851, %v852
    %v854 = vrot.slane %v260, 1
    %v855 = vrot.slane %v356, 1
    %v856 = vsel %vm829, %v854, %v855
    %v857 = vrot.slane %v261, 1
    %v858 = vrot.slane %v357, 1
    %v859 = vsel %vm829, %v857, %v858
    %v860 = vrot.slane %v262, 1
    %v861 = vrot.slane %v358, 1
    %v862 = vsel %vm829, %v860, %v861
    %v863 = vrot.slane %v263, 1
    %v864 = vrot.slane %v359, 1
    %v865 = vsel %vm829, %v863, %v864
    %v866 = vrot.slane %v264, 1
    %v867 = vrot.slane %v360, 1
    %v868 = vsel %vm829, %v866, %v867
    %v869 = vrot.slane %v265, 1
    %v870 = vrot.slane %v361, 1
    %v871 = vsel %vm829, %v869, %v870
    %v872 = vrot.slane %v266, 1
    %v873 = vrot.slane %v362, 1
    %v874 = vsel %vm829, %v872, %v873
    %v875 = vrot.slane %v267, 1
    %v876 = vrot.slane %v363, 1
    %v877 = vsel %vm829, %v875, %v876
    %v878 = vrot.slane %v268, 1
    %v879 = vrot.slane %v364, 1
    %v880 = vsel %vm829, %v878, %v879
    %v881 = vrot.slane %v269, 1
    %v882 = vrot.slane %v365, 1
    %v883 = vsel %vm829, %v881, %v882
    %v884 = vrot.slane %v270, 1
    %v885 = vrot.slane %v366, 1
    %v886 = vsel %vm829, %v884, %v885
    %v887 = vrot.slane %v271, 1
    %v888 = vrot.slane %v367, 1
    %v889 = vsel %vm829, %v887, %v888
    %v890 = vrot.slane %v272, 1
    %v891 = vrot.slane %v368, 1
    %v892 = vsel %vm829, %v890, %v891
    %v893 = vrot.slane %v273, 1
    %v894 = vrot.slane %v369, 1
    %v895 = vsel %vm829, %v893, %v894
    %v896 = vrot.slane %v274, 1
    %v897 = vrot.slane %v370, 1
    %v898 = vsel %vm829, %v896, %v897
    %v899 = vrot.slane %v275, 1
    %v900 = vrot.slane %v371, 1
    %v901 = vsel %vm829, %v899, %v900
    %v902 = vrot.slane %v276, 1
    %v903 = vrot.slane %v372, 1
    %v904 = vsel %vm829, %v902, %v903
    %v905 = vrot.slane %v277, 1
    %v906 = vrot.slane %v373, 1
    %v907 = vsel %vm829, %v905, %v906
    %v908 = vrot.slane %v278, 1
    %v909 = vrot.slane %v374, 1
    %v910 = vsel %vm829, %v908, %v909
    %v911 = vrot.slane %v279, 1
    %v912 = vrot.slane %v375, 1
    %v913 = vsel %vm829, %v911, %v912
    %v914 = vrot.slane %v280, 1
    %v915 = vrot.slane %v376, 1
    %v916 = vsel %vm829, %v914, %v915
    %v917 = vrot.slane %v281, 1
    %v918 = vrot.slane %v377, 1
    %v919 = vsel %vm829, %v917, %v918
    %v920 = vrot.slane %v282, 1
    %v921 = vrot.slane %v378, 1
    %v922 = vsel %vm829, %v920, %v921
    %v923 = vrot.slane %v283, 1
    %v924 = vrot.slane %v379, 1
    %v925 = vsel %vm829, %v923, %v924
    %926 = vrot.lane.b32.xlu0 %v832, 16
    %v927 = vpop.permute.xlu0 %926
    %928 = vrot.lane.b32.xlu0 %v835, 16
    %v929 = vpop.permute.xlu0 %928
    %930 = vrot.lane.b32.xlu0 %v838, 16
    %v931 = vpop.permute.xlu0 %930
    %932 = vrot.lane.b32.xlu0 %v841, 16
    %v933 = vpop.permute.xlu0 %932
    %934 = vrot.lane.b32.xlu0 %v844, 16
    %v935 = vpop.permute.xlu0 %934
    %936 = vrot.lane.b32.xlu0 %v847, 16
    %v937 = vpop.permute.xlu0 %936
    %938 = vrot.lane.b32.xlu0 %v850, 16
    %v939 = vpop.permute.xlu0 %938
    %940 = vrot.lane.b32.xlu0 %v853, 16
    %v941 = vpop.permute.xlu0 %940
    %942 = vrot.lane.b32.xlu0 %v856, 16
    %v943 = vpop.permute.xlu0 %942
    %944 = vrot.lane.b32.xlu0 %v859, 16
    %v945 = vpop.permute.xlu0 %944
    %946 = vrot.lane.b32.xlu0 %v862, 16
    %v947 = vpop.permute.xlu0 %946
    %948 = vrot.lane.b32.xlu0 %v865, 16
    %v949 = vpop.permute.xlu0 %948
    %950 = vrot.lane.b32.xlu0 %v868, 16
    %v951 = vpop.permute.xlu0 %950
    %952 = vrot.lane.b32.xlu0 %v871, 16
    %v953 = vpop.permute.xlu0 %952
    %954 = vrot.lane.b32.xlu0 %v874, 16
    %v955 = vpop.permute.xlu0 %954
    %956 = vrot.lane.b32.xlu0 %v877, 16
    %v957 = vpop.permute.xlu0 %956
    %958 = vrot.lane.b32.xlu0 %v880, 16
    %v959 = vpop.permute.xlu0 %958
    %960 = vrot.lane.b32.xlu0 %v883, 16
    %v961 = vpop.permute.xlu0 %960
    %962 = vrot.lane.b32.xlu0 %v886, 16
    %v963 = vpop.permute.xlu0 %962
    %964 = vrot.lane.b32.xlu0 %v889, 16
    %v965 = vpop.permute.xlu0 %964
    %966 = vrot.lane.b32.xlu0 %v892, 16
    %v967 = vpop.permute.xlu0 %966
    %968 = vrot.lane.b32.xlu0 %v895, 16
    %v969 = vpop.permute.xlu0 %968
    %970 = vrot.lane.b32.xlu0 %v898, 16
    %v971 = vpop.permute.xlu0 %970
    %972 = vrot.lane.b32.xlu0 %v901, 16
    %v973 = vpop.permute.xlu0 %972
    %974 = vrot.lane.b32.xlu0 %v904, 16
    %v975 = vpop.permute.xlu0 %974
    %976 = vrot.lane.b32.xlu0 %v907, 16
    %v977 = vpop.permute.xlu0 %976
    %978 = vrot.lane.b32.xlu0 %v910, 16
    %v979 = vpop.permute.xlu0 %978
    %980 = vrot.lane.b32.xlu0 %v913, 16
    %v981 = vpop.permute.xlu0 %980
    %982 = vrot.lane.b32.xlu0 %v916, 16
    %v983 = vpop.permute.xlu0 %982
    %984 = vrot.lane.b32.xlu0 %v919, 16
    %v985 = vpop.permute.xlu0 %984
    %986 = vrot.lane.b32.xlu0 %v922, 16
    %v987 = vpop.permute.xlu0 %986
    %988 = vrot.lane.b32.xlu0 %v925, 16
    %v989 = vpop.permute.xlu0 %988
    %vm990 = vcmask 64512
    %v992 = vsel %vm990, %v252, %v766
    %v994 = vsel %vm990, %v253, %v768
    %v996 = vsel %vm990, %v254, %v770
    %v998 = vsel %vm990, %v255, %v772
    %v1000 = vsel %vm990, %v256, %v774
    %v1002 = vsel %vm990, %v257, %v776
    %v1004 = vsel %vm990, %v258, %v778
    %v1006 = vsel %vm990, %v259, %v780
    %v1008 = vsel %vm990, %v260, %v782
    %v1010 = vsel %vm990, %v261, %v784
    %v1012 = vsel %vm990, %v262, %v786
    %v1014 = vsel %vm990, %v263, %v788
    %v1016 = vsel %vm990, %v264, %v790
    %v1018 = vsel %vm990, %v265, %v792
    %v1020 = vsel %vm990, %v266, %v794
    %v1022 = vsel %vm990, %v267, %v796
    %v1024 = vsel %vm990, %v268, %v798
    %v1026 = vsel %vm990, %v269, %v800
    %v1028 = vsel %vm990, %v270, %v802
    %v1030 = vsel %vm990, %v271, %v804
    %v1032 = vsel %vm990, %v272, %v806
    %v1034 = vsel %vm990, %v273, %v808
    %v1036 = vsel %vm990, %v274, %v810
    %v1038 = vsel %vm990, %v275, %v812
    %v1040 = vsel %vm990, %v276, %v814
    %v1042 = vsel %vm990, %v277, %v816
    %v1044 = vsel %vm990, %v278, %v818
    %v1046 = vsel %vm990, %v279, %v820
    %v1048 = vsel %vm990, %v280, %v822
    %v1050 = vsel %vm990, %v281, %v824
    %v1052 = vsel %vm990, %v282, %v826
    %v1054 = vsel %vm990, %v283, %v828
    %vm1055 = vcmask 130048
    %v1057 = vsel %vm1055, %v992, %v927
    %v1059 = vsel %vm1055, %v994, %v929
    %v1061 = vsel %vm1055, %v996, %v931
    %v1063 = vsel %vm1055, %v998, %v933
    %v1065 = vsel %vm1055, %v1000, %v935
    %v1067 = vsel %vm1055, %v1002, %v937
    %v1069 = vsel %vm1055, %v1004, %v939
    %v1071 = vsel %vm1055, %v1006, %v941
    %v1073 = vsel %vm1055, %v1008, %v943
    %v1075 = vsel %vm1055, %v1010, %v945
    %v1077 = vsel %vm1055, %v1012, %v947
    %v1079 = vsel %vm1055, %v1014, %v949
    %v1081 = vsel %vm1055, %v1016, %v951
    %v1083 = vsel %vm1055, %v1018, %v953
    %v1085 = vsel %vm1055, %v1020, %v955
    %v1087 = vsel %vm1055, %v1022, %v957
    %v1089 = vsel %vm1055, %v1024, %v959
    %v1091 = vsel %vm1055, %v1026, %v961
    %v1093 = vsel %vm1055, %v1028, %v963
    %v1095 = vsel %vm1055, %v1030, %v965
    %v1097 = vsel %vm1055, %v1032, %v967
    %v1099 = vsel %vm1055, %v1034, %v969
    %v1101 = vsel %vm1055, %v1036, %v971
    %v1103 = vsel %vm1055, %v1038, %v973
    %v1105 = vsel %vm1055, %v1040, %v975
    %v1107 = vsel %vm1055, %v1042, %v977
    %v1109 = vsel %vm1055, %v1044, %v979
    %v1111 = vsel %vm1055, %v1046, %v981
    %v1113 = vsel %vm1055, %v1048, %v983
    %v1115 = vsel %vm1055, %v1050, %v985
    %v1117 = vsel %vm1055, %v1052, %v987
    %v1119 = vsel %vm1055, %v1054, %v989
    %v1120 = vld [vmem:[%s1] sm:$0xf]
    %v1121 = vld [vmem:[%s1 + $0x4] sm:$0xf]
    %v1122 = vld [vmem:[%s1 + $0x8] sm:$0xf]
    %v1127 = vunpack.c.l.b16 %v64
    %v1128 = vunpack.c.l.b16 %v65
    %v1129 = vunpack.c.l.b16 %v118
    %v1130 = vunpack.c.l.b16 %v119
    %v1131 = vpack.c.b16 %v1128, %v1127
    %v1132 = vpack.c.b16 %v1130, %v1129
    %v1135 = vunpack.c.l.b16 %v66
    %v1136 = vunpack.c.l.b16 %v120
    %v1137 = vpack.c.b16 %v1135, %v1135
    %v1138 = vpack.c.b16 %v1136, %v1136
    %v1140 = vshrl.u32 %v1131, 16
    %v1142 = vshll.u32 %v1131, 16
    %v1144 = vrot.slane %v1142, 1
    %v1145 = vor.u32 %v1140, %v1144
    %v1147 = vshll.u32 %v1137, 16
    %v1149 = vrot.slane %v1147, 1
    %v1150 = vsel %vm380, %v1145, %v1149
    %v1152 = vshrl.u32 %v1132, 16
    %v1154 = vshll.u32 %v1132, 16
    %v1156 = vrot.slane %v1154, 1
    %v1157 = vor.u32 %v1152, %v1156
    %v1159 = vshll.u32 %v1138, 16
    %v1161 = vrot.slane %v1159, 1
    %v1162 = vsel %vm380, %v1157, %v1161
    %1163 = vrot.lane.b32.xlu0 %v1150, 8
    %v1164 = vpop.permute.xlu0 %1163
    %1165 = vrot.lane.b32.xlu0 %v1162, 8
    %v1166 = vpop.permute.xlu0 %1165
    %v1167 = vrot.slane %v1131, 1
    %v1168 = vrot.slane %v1137, 1
    %v1169 = vsel %vm829, %v1167, %v1168
    %v1170 = vrot.slane %v1132, 1
    %v1171 = vrot.slane %v1138, 1
    %v1172 = vsel %vm829, %v1170, %v1171
    %1173 = vrot.lane.b32.xlu0 %v1169, 16
    %v1174 = vpop.permute.xlu0 %1173
    %1175 = vrot.lane.b32.xlu0 %v1172, 16
    %v1176 = vpop.permute.xlu0 %1175
    %v1178 = vsel %vm990, %v1131, %v1164
    %v1180 = vsel %vm990, %v1132, %v1166
    %v1182 = vsel %vm1055, %v1178, %v1174
    %v1184 = vsel %vm1055, %v1180, %v1176
    %s1185 = scalar_lea.vmem %s1, 12
    %v1186 = vld [vmem:[%s1185] sm:$0xf]
    %v1187 = vld [vmem:[%s1185 + $0x4] sm:$0xf]
    %v1188 = vld [vmem:[%s1185 + $0x8] sm:$0xf]
    %v1192 = vunpack.c.l.b16 %v1186
    %v1193 = vunpack.c.l.b16 %v1187
    %v1194 = vunpack.c.l.b16 %v1188
    %v1195 = vpack.c.b16 %v1193, %v1192
    %v1196 = vpack.c.b16 %v1194, %v1194
    %vm1198 = vcmask 195584
    %v1199 = vsel %vm1198, %v1059, 0
    %v1201 = vsel %vm1198, %v1061, 0
    %v1203 = vsel %vm1198, %v1063, 0
    %v1205 = vsel %vm1198, %v1065, 0
    %v1207 = vsel %vm1198, %v1067, 0
    %v1209 = vsel %vm1198, %v1069, 0
    %v1211 = vsel %vm1198, %v1071, 0
    %v1213 = vsel %vm1198, %v1073, 0
    %v1215 = vsel %vm1198, %v1075, 0
    %v1217 = vsel %vm1198, %v1077, 0
    %v1219 = vsel %vm1198, %v1079, 0
    %v1221 = vsel %vm1198, %v1081, 0
    %v1223 = vsel %vm1198, %v1083, 0
    %v1225 = vsel %vm1198, %v1085, 0
    %v1227 = vsel %vm1198, %v1087, 0
    %v1229 = vsel %vm1198, %v1182, 0
    %v1231 = vsel %vm1198, %v1091, 0
    %v1233 = vsel %vm1198, %v1093, 0
    %v1235 = vsel %vm1198, %v1095, 0
    %v1237 = vsel %vm1198, %v1097, 0
    %v1239 = vsel %vm1198, %v1099, 0
    %v1241 = vsel %vm1198, %v1101, 0
    %v1243 = vsel %vm1198, %v1103, 0
    %v1245 = vsel %vm1198, %v1105, 0
    %v1247 = vsel %vm1198, %v1107, 0
    %v1249 = vsel %vm1198, %v1109, 0
    %v1251 = vsel %vm1198, %v1111, 0
    %v1253 = vsel %vm1198, %v1113, 0
    %v1255 = vsel %vm1198, %v1115, 0
    %v1257 = vsel %vm1198, %v1117, 0
    %v1259 = vsel %vm1198, %v1119, 0
    %v1261 = vsel %vm1198, %v1184, 0
    %vm1263 = vcmask 1043456
    %v1265 = vsel %vm1263, %v1196, 0
    %1267 = vmatprep.subr.bf16.mxu0 0
    %1268 = vmatpush1.bf16.msra.mxu0 %v1195
    %1269 = vmatprep.subr.bf16.mxu0 0
    %1270 = vmatpush1.bf16.msra.mxu0 %v1265
    %1271 = vmatprep.subr.bf16.mxu0 0
    %1272 = vmatpush1.bf16.msra.mxu0 0
    %1273 = vmatprep.subr.bf16.mxu0 0
    %1274 = vmatpush1.bf16.msra.mxu0 0
    %1275 = vmatprep.subr.bf16.mxu0 0
    %1276 = vmatpush1.bf16.msra.mxu0 0
    %1277 = vmatprep.subr.bf16.mxu0 0
    %1278 = vmatpush1.bf16.msra.mxu0 0
    %1279 = vmatprep.subr.bf16.mxu0 0
    %1280 = vmatpush1.bf16.msra.mxu0 0
    %1281 = vmatprep.subr.bf16.mxu0 0
    %1282 = vmatpush1.bf16.msra.mxu0 0
    %1283 = vmatprep.subr.bf16.mxu0 0
    %1284 = vmatpush1.bf16.msra.mxu0 0
    %1285 = vmatprep.subr.bf16.mxu0 0
    %1286 = vmatpush1.bf16.msra.mxu0 0
    %1287 = vmatprep.subr.bf16.mxu0 0
    %1288 = vmatpush1.bf16.msra.mxu0 0
    %1289 = vmatprep.subr.bf16.mxu0 0
    %1290 = vmatpush1.bf16.msra.mxu0 0
    %1291 = vmatprep.subr.bf16.mxu0 0
    %1292 = vmatpush1.bf16.msra.mxu0 0
    %1293 = vmatprep.subr.bf16.mxu0 0
    %1294 = vmatpush1.bf16.msra.mxu0 0
    %1295 = vmatprep.subr.bf16.mxu0 0
    %1296 = vmatpush1.bf16.msra.mxu0 0
    %1297 = vmatprep.subr.bf16.mxu0 0
    %1298 = vmatpush1.bf16.msra.mxu0 0
    %1299 = vmatprep.mubr.bf16.mxu0 0
    %1300 = vmatmul.mubr.bf16.gmra.mrb[0].mxu0 %v1199
    %v1301 = vpop.f32.mrb[0].mxu0
    %v1302 = vadd.f32 0.0, %v1301
    %v1303 = vpop.f32.mrb[0].mxu0
    %v1304 = vpop.f32.mrb[0].mxu0
    %v1305 = vadd.f32 0.0, %v1304
    %v1306 = vpop.f32.mrb[0].mxu0
    %1307 = vmatprep.mubr.bf16.mxu0 0
    %1308 = vmatmul.mubr.bf16.gmra.mrb[0].mxu0 %v1201
    %v1309 = vpop.f32.mrb[0].mxu0
    %v1310 = vadd.f32 0.0, %v1309
    %v1311 = vpop.f32.mrb[0].mxu0
    %v1312 = vpop.f32.mrb[0].mxu0
    %v1313 = vadd.f32 0.0, %v1312
    %v1314 = vpop.f32.mrb[0].mxu0
    %1315 = vmatprep.mubr.bf16.mxu0 0
    %1316 = vmatmul.mubr.bf16.gmra.mrb[0].mxu0 %v1203
    %v1317 = vpop.f32.mrb[0].mxu0
    %v1318 = vadd.f32 0.0, %v1317
    %v1319 = vpop.f32.mrb[0].mxu0
    %v1320 = vpop.f32.mrb[0].mxu0
    %v1321 = vadd.f32 0.0, %v1320
    %v1322 = vpop.f32.mrb[0].mxu0
    %1323 = vmatprep.mubr.bf16.mxu0 0
    %1324 = vmatmul.mubr.bf16.gmra.mrb[0].mxu0 %v1205
    %v1325 = vpop.f32.mrb[0].mxu0
    %v1326 = vadd.f32 0.0, %v1325
    %v1327 = vpop.f32.mrb[0].mxu0
    %v1328 = vpop.f32.mrb[0].mxu0
    %v1329 = vadd.f32 0.0, %v1328
    %v1330 = vpop.f32.mrb[0].mxu0
    %1331 = vmatprep.mubr.bf16.mxu0 0
    %1332 = vmatmul.mubr.bf16.gmra.mrb[0].mxu0 %v1207
    %v1333 = vpop.f32.mrb[0].mxu0
    %v1334 = vadd.f32 0.0, %v1333
    %v1335 = vpop.f32.mrb[0].mxu0
    %v1336 = vpop.f32.mrb[0].mxu0
    %v1337 = vadd.f32 0.0, %v1336
    %v1338 = vpop.f32.mrb[0].mxu0
    %1339 = vmatprep.mubr.bf16.mxu0 0
    %1340 = vmatmul.mubr.bf16.gmra.mrb[0].mxu0 %v1209
    %v1341 = vpop.f32.mrb[0].mxu0
    %v1342 = vadd.f32 0.0, %v1341
    %v1343 = vpop.f32.mrb[0].mxu0
    %v1344 = vpop.f32.mrb[0].mxu0
    %v1345 = vadd.f32 0.0, %v1344
    %v1346 = vpop.f32.mrb[0].mxu0
    %1347 = vmatprep.mubr.bf16.mxu0 0
    %1348 = vmatmul.mubr.bf16.gmra.mrb[0].mxu0 %v1211
    %v1349 = vpop.f32.mrb[0].mxu0
    %v1350 = vadd.f32 0.0, %v1349
    %v1351 = vpop.f32.mrb[0].mxu0
    %v1352 = vpop.f32.mrb[0].mxu0
    %v1353 = vadd.f32 0.0, %v1352
    %v1354 = vpop.f32.mrb[0].mxu0
    %1355 = vmatprep.mubr.bf16.mxu0 0
    %1356 = vmatmul.mubr.bf16.gmra.mrb[0].mxu0 %v1213
    %v1357 = vpop.f32.mrb[0].mxu0
    %v1358 = vadd.f32 0.0, %v1357
    %v1359 = vpop.f32.mrb[0].mxu0
    %v1360 = vpop.f32.mrb[0].mxu0
    %v1361 = vadd.f32 0.0, %v1360
    %v1362 = vpop.f32.mrb[0].mxu0
    %1363 = vmatprep.mubr.bf16.mxu0 0
    %1364 = vmatmul.mubr.bf16.gmra.mrb[0].mxu0 %v1215
    %v1365 = vpop.f32.mrb[0].mxu0
    %v1366 = vadd.f32 0.0, %v1365
    %v1367 = vpop.f32.mrb[0].mxu0
    %v1368 = vpop.f32.mrb[0].mxu0
    %v1369 = vadd.f32 0.0, %v1368
    %v1370 = vpop.f32.mrb[0].mxu0
    %1371 = vmatprep.mubr.bf16.mxu0 0
    %1372 = vmatmul.mubr.bf16.gmra.mrb[0].mxu0 %v1217
    %v1373 = vpop.f32.mrb[0].mxu0
    %v1374 = vadd.f32 0.0, %v1373
    %v1375 = vpop.f32.mrb[0].mxu0
    %v1376 = vpop.f32.mrb[0].mxu0
    %v1377 = vadd.f32 0.0, %v1376
    %v1378 = vpop.f32.mrb[0].mxu0
    %1379 = vmatprep.mubr.bf16.mxu0 0
    %1380 = vmatmul.mubr.bf16.gmra.mrb[0].mxu0 %v1219
    %v1381 = vpop.f32.mrb[0].mxu0
    %v1382 = vadd.f32 0.0, %v1381
    %v1383 = vpop.f32.mrb[0].mxu0
    %v1384 = vpop.f32.mrb[0].mxu0
    %v1385 = vadd.f32 0.0, %v1384
    %v1386 = vpop.f32.mrb[0].mxu0
    %1387 = vmatprep.mubr.bf16.mxu0 0
    %1388 = vmatmul.mubr.bf16.gmra.mrb[0].mxu0 %v1221
    %v1389 = vpop.f32.mrb[0].mxu0
    %v1390 = vadd.f32 0.0, %v1389
    %v1391 = vpop.f32.mrb[0].mxu0
    %v1392 = vpop.f32.mrb[0].mxu0
    %v1393 = vadd.f32 0.0, %v1392
    %v1394 = vpop.f32.mrb[0].mxu0
    %1395 = vmatprep.mubr.bf16.mxu0 0
    %1396 = vmatmul.mubr.bf16.gmra.mrb[0].mxu0 %v1223
    %v1397 = vpop.f32.mrb[0].mxu0
    %v1398 = vadd.f32 0.0, %v1397
    %v1399 = vpop.f32.mrb[0].mxu0
    %v1400 = vpop.f32.mrb[0].mxu0
    %v1401 = vadd.f32 0.0, %v1400
    %v1402 = vpop.f32.mrb[0].mxu0
    %1403 = vmatprep.mubr.bf16.mxu0 0
    %1404 = vmatmul.mubr.bf16.gmra.mrb[0].mxu0 %v1225
    %v1405 = vpop.f32.mrb[0].mxu0
    %v1406 = vadd.f32 0.0, %v1405
    %v1407 = vpop.f32.mrb[0].mxu0
    %v1408 = vpop.f32.mrb[0].mxu0
    %v1409 = vadd.f32 0.0, %v1408
    %v1410 = vpop.f32.mrb[0].mxu0
    %1411 = vmatprep.mubr.bf16.mxu0 0
    %1412 = vmatmul.mubr.bf16.gmra.mrb[0].mxu0 %v1227
    %v1413 = vpop.f32.mrb[0].mxu0
    %v1414 = vadd.f32 0.0, %v1413
    %v1415 = vpop.f32.mrb[0].mxu0
    %v1416 = vpop.f32.mrb[0].mxu0
    %v1417 = vadd.f32 0.0, %v1416
    %v1418 = vpop.f32.mrb[0].mxu0
    %1419 = vmatprep.mubr.bf16.mxu0 0
    %1420 = vmatmul.mubr.bf16.gmra.mrb[0].mxu0 %v1229
    %v1421 = vpop.f32.mrb[0].mxu0
    %v1422 = vadd.f32 0.0, %v1421
    %v1423 = vpop.f32.mrb[0].mxu0
    %v1424 = vpop.f32.mrb[0].mxu0
    %v1425 = vadd.f32 0.0, %v1424
    %v1426 = vpop.f32.mrb[0].mxu0
    %1427 = vmatprep.mubr.bf16.mxu0 0
    %1428 = vmatmul.mubr.bf16.gmra.mrb[0].mxu0 %v1231
    %v1429 = vpop.f32.mrb[0].mxu0
    %v1430 = vadd.f32 0.0, %v1429
    %v1431 = vpop.f32.mrb[0].mxu0
    %v1432 = vpop.f32.mrb[0].mxu0
    %v1433 = vadd.f32 0.0, %v1432
    %v1434 = vpop.f32.mrb[0].mxu0
    %1435 = vmatprep.mubr.bf16.mxu0 0
    %1436 = vmatmul.mubr.bf16.gmra.mrb[0].mxu0 %v1233
    %v1437 = vpop.f32.mrb[0].mxu0
    %v1438 = vadd.f32 0.0, %v1437
    %v1439 = vpop.f32.mrb[0].mxu0
    %v1440 = vpop.f32.mrb[0].mxu0
    %v1441 = vadd.f32 0.0, %v1440
    %v1442 = vpop.f32.mrb[0].mxu0
    %1443 = vmatprep.mubr.bf16.mxu0 0
    %1444 = vmatmul.mubr.bf16.gmra.mrb[0].mxu0 %v1235
    %v1445 = vpop.f32.mrb[0].mxu0
    %v1446 = vadd.f32 0.0, %v1445
    %v1447 = vpop.f32.mrb[0].mxu0
    %v1448 = vpop.f32.mrb[0].mxu0
    %v1449 = vadd.f32 0.0, %v1448
    %v1450 = vpop.f32.mrb[0].mxu0
    %1451 = vmatprep.mubr.bf16.mxu0 0
    %1452 = vmatmul.mubr.bf16.gmra.mrb[0].mxu0 %v1237
    %v1453 = vpop.f32.mrb[0].mxu0
    %v1454 = vadd.f32 0.0, %v1453
    %v1455 = vpop.f32.mrb[0].mxu0
    %v1456 = vpop.f32.mrb[0].mxu0
    %v1457 = vadd.f32 0.0, %v1456
    %v1458 = vpop.f32.mrb[0].mxu0
    %1459 = vmatprep.mubr.bf16.mxu0 0
    %1460 = vmatmul.mubr.bf16.gmra.mrb[0].mxu0 %v1239
    %v1461 = vpop.f32.mrb[0].mxu0
    %v1462 = vadd.f32 0.0, %v1461
    %v1463 = vpop.f32.mrb[0].mxu0
    %v1464 = vpop.f32.mrb[0].mxu0
    %v1465 = vadd.f32 0.0, %v1464
    %v1466 = vpop.f32.mrb[0].mxu0
    %1467 = vmatprep.mubr.bf16.mxu0 0
    %1468 = vmatmul.mubr.bf16.gmra.mrb[0].mxu0 %v1241
    %v1469 = vpop.f32.mrb[0].mxu0
    %v1470 = vadd.f32 0.0, %v1469
    %v1471 = vpop.f32.mrb[0].mxu0
    %v1472 = vpop.f32.mrb[0].mxu0
    %v1473 = vadd.f32 0.0, %v1472
    %v1474 = vpop.f32.mrb[0].mxu0
    %1475 = vmatprep.mubr.bf16.mxu0 0
    %1476 = vmatmul.mubr.bf16.gmra.mrb[0].mxu0 %v1243
    %v1477 = vpop.f32.mrb[0].mxu0
    %v1478 = vadd.f32 0.0, %v1477
    %v1479 = vpop.f32.mrb[0].mxu0
    %v1480 = vpop.f32.mrb[0].mxu0
    %v1481 = vadd.f32 0.0, %v1480
    %v1482 = vpop.f32.mrb[0].mxu0
    %1483 = vmatprep.mubr.bf16.mxu0 0
    %1484 = vmatmul.mubr.bf16.gmra.mrb[0].mxu0 %v1245
    %v1485 = vpop.f32.mrb[0].mxu0
    %v1486 = vadd.f32 0.0, %v1485
    %v1487 = vpop.f32.mrb[0].mxu0
    %v1488 = vpop.f32.mrb[0].mxu0
    %v1489 = vadd.f32 0.0, %v1488
    %v1490 = vpop.f32.mrb[0].mxu0
    %1491 = vmatprep.mubr.bf16.mxu0 0
    %1492 = vmatmul.mubr.bf16.gmra.mrb[0].mxu0 %v1247
    %v1493 = vpop.f32.mrb[0].mxu0
    %v1494 = vadd.f32 0.0, %v1493
    %v1495 = vpop.f32.mrb[0].mxu0
    %v1496 = vpop.f32.mrb[0].mxu0
    %v1497 = vadd.f32 0.0, %v1496
    %v1498 = vpop.f32.mrb[0].mxu0
    %1499 = vmatprep.mubr.bf16.mxu0 0
    %1500 = vmatmul.mubr.bf16.gmra.mrb[0].mxu0 %v1249
    %v1501 = vpop.f32.mrb[0].mxu0
    %v1502 = vadd.f32 0.0, %v1501
    %v1503 = vpop.f32.mrb[0].mxu0
    %v1504 = vpop.f32.mrb[0].mxu0
    %v1505 = vadd.f32 0.0, %v1504
    %v1506 = vpop.f32.mrb[0].mxu0
    %1507 = vmatprep.mubr.bf16.mxu0 0
    %1508 = vmatmul.mubr.bf16.gmra.mrb[0].mxu0 %v1251
    %v1509 = vpop.f32.mrb[0].mxu0
    %v1510 = vadd.f32 0.0, %v1509
    %v1511 = vpop.f32.mrb[0].mxu0
    %v1512 = vpop.f32.mrb[0].mxu0
    %v1513 = vadd.f32 0.0, %v1512
    %v1514 = vpop.f32.mrb[0].mxu0
    %1515 = vmatprep.mubr.bf16.mxu0 0
    %1516 = vmatmul.mubr.bf16.gmra.mrb[0].mxu0 %v1253
    %v1517 = vpop.f32.mrb[0].mxu0
    %v1518 = vadd.f32 0.0, %v1517
    %v1519 = vpop.f32.mrb[0].mxu0
    %v1520 = vpop.f32.mrb[0].mxu0
    %v1521 = vadd.f32 0.0, %v1520
    %v1522 = vpop.f32.mrb[0].mxu0
    %1523 = vmatprep.mubr.bf16.mxu0 0
    %1524 = vmatmul.mubr.bf16.gmra.mrb[0].mxu0 %v1255
    %v1525 = vpop.f32.mrb[0].mxu0
    %v1526 = vadd.f32 0.0, %v1525
    %v1527 = vpop.f32.mrb[0].mxu0
    %v1528 = vpop.f32.mrb[0].mxu0
    %v1529 = vadd.f32 0.0, %v1528
    %v1530 = vpop.f32.mrb[0].mxu0
    %1531 = vmatprep.mubr.bf16.mxu0 0
    %1532 = vmatmul.mubr.bf16.gmra.mrb[0].mxu0 %v1257
    %v1533 = vpop.f32.mrb[0].mxu0
    %v1534 = vadd.f32 0.0, %v1533
    %v1535 = vpop.f32.mrb[0].mxu0
    %v1536 = vpop.f32.mrb[0].mxu0
    %v1537 = vadd.f32 0.0, %v1536
    %v1538 = vpop.f32.mrb[0].mxu0
    %1539 = vmatprep.mubr.bf16.mxu0 0
    %1540 = vmatmul.mubr.bf16.gmra.mrb[0].mxu0 %v1259
    %v1541 = vpop.f32.mrb[0].mxu0
    %v1542 = vadd.f32 0.0, %v1541
    %v1543 = vpop.f32.mrb[0].mxu0
    %v1544 = vpop.f32.mrb[0].mxu0
    %v1545 = vadd.f32 0.0, %v1544
    %v1546 = vpop.f32.mrb[0].mxu0
    %1547 = vmatprep.mubr.bf16.mxu0 0
    %1548 = vmatmul.mubr.bf16.gmra.mrb[0].mxu0 %v1261
    %v1549 = vpop.f32.mrb[0].mxu0
    %v1550 = vadd.f32 0.0, %v1549
    %v1551 = vpop.f32.mrb[0].mxu0
    %v1552 = vpop.f32.mrb[0].mxu0
    %v1553 = vadd.f32 0.0, %v1552
    %v1554 = vpop.f32.mrb[0].mxu0
    %1555 = vdwg.mxu0
    %v1559 = vunpack.c.l.b16 %v1120
    %v1560 = vunpack.c.l.b16 %v1121
    %v1561 = vunpack.c.l.b16 %v1122
    %v1562 = vpack.c.b16 %v1560, %v1559
    %v1563 = vpack.c.b16 %v1561, %v1561
    %v1565 = vsel %vm1198, %v1057, 0
    %v1567 = vsel %vm1198, %v1089, 0
    %v1570 = vsel %vm1263, %v1563, 0
    %1572 = vmatprep.subr.bf16.mxu0 0
    %1573 = vmatpush1.bf16.msra.mxu0 %v1562
    %1574 = vmatprep.subr.bf16.mxu0 0
    %1575 = vmatpush1.bf16.msra.mxu0 %v1570
    %1576 = vmatprep.subr.bf16.mxu0 0
    %1577 = vmatpush1.bf16.msra.mxu0 0
    %1578 = vmatprep.subr.bf16.mxu0 0
    %1579 = vmatpush1.bf16.msra.mxu0 0
    %1580 = vmatprep.subr.bf16.mxu0 0
    %1581 = vmatpush1.bf16.msra.mxu0 0
    %1582 = vmatprep.subr.bf16.mxu0 0
    %1583 = vmatpush1.bf16.msra.mxu0 0
    %1584 = vmatprep.subr.bf16.mxu0 0
    %1585 = vmatpush1.bf16.msra.mxu0 0
    %1586 = vmatprep.subr.bf16.mxu0 0
    %1587 = vmatpush1.bf16.msra.mxu0 0
    %1588 = vmatprep.subr.bf16.mxu0 0
    %1589 = vmatpush1.bf16.msra.mxu0 0
    %1590 = vmatprep.subr.bf16.mxu0 0
    %1591 = vmatpush1.bf16.msra.mxu0 0
    %1592 = vmatprep.subr.bf16.mxu0 0
    %1593 = vmatpush1.bf16.msra.mxu0 0
    %1594 = vmatprep.subr.bf16.mxu0 0
    %1595 = vmatpush1.bf16.msra.mxu0 0
    %1596 = vmatprep.subr.bf16.mxu0 0
    %1597 = vmatpush1.bf16.msra.mxu0 0
    %1598 = vmatprep.subr.bf16.mxu0 0
    %1599 = vmatpush1.bf16.msra.mxu0 0
    %1600 = vmatprep.subr.bf16.mxu0 0
    %1601 = vmatpush1.bf16.msra.mxu0 0
    %1602 = vmatprep.subr.bf16.mxu0 0
    %1603 = vmatpush1.bf16.msra.mxu0 0
    %1604 = vmatprep.mubr.bf16.mxu0 0
    %1605 = vmatmul.mubr.bf16.gmra.mrb[0].mxu0 %v1565
    %v1606 = vpop.f32.mrb[0].mxu0
    %v1607 = vadd.f32 %v1302, %v1606
    %v1608 = vpop.f32.mrb[0].mxu0
    %v1609 = vpop.f32.mrb[0].mxu0
    %v1610 = vadd.f32 %v1305, %v1609
    %v1611 = vpop.f32.mrb[0].mxu0
    %1612 = vmatprep.mubr.bf16.mxu0 0
    %1613 = vmatmul.mubr.bf16.gmra.mrb[0].mxu0 %v1199
    %v1614 = vpop.f32.mrb[0].mxu0
    %v1615 = vadd.f32 %v1310, %v1614
    %v1616 = vpop.f32.mrb[0].mxu0
    %v1617 = vpop.f32.mrb[0].mxu0
    %v1618 = vadd.f32 %v1313, %v1617
    %v1619 = vpop.f32.mrb[0].mxu0
    %1620 = vmatprep.mubr.bf16.mxu0 0
    %1621 = vmatmul.mubr.bf16.gmra.mrb[0].mxu0 %v1201
    %v1622 = vpop.f32.mrb[0].mxu0
    %v1623 = vadd.f32 %v1318, %v1622
    %v1624 = vpop.f32.mrb[0].mxu0
    %v1625 = vpop.f32.mrb[0].mxu0
    %v1626 = vadd.f32 %v1321, %v1625
    %v1627 = vpop.f32.mrb[0].mxu0
    %1628 = vmatprep.mubr.bf16.mxu0 0
    %1629 = vmatmul.mubr.bf16.gmra.mrb[0].mxu0 %v1203
    %v1630 = vpop.f32.mrb[0].mxu0
    %v1631 = vadd.f32 %v1326, %v1630
    %v1632 = vpop.f32.mrb[0].mxu0
    %v1633 = vpop.f32.mrb[0].mxu0
    %v1634 = vadd.f32 %v1329, %v1633
    %v1635 = vpop.f32.mrb[0].mxu0
    %1636 = vmatprep.mubr.bf16.mxu0 0
    %1637 = vmatmul.mubr.bf16.gmra.mrb[0].mxu0 %v1205
    %v1638 = vpop.f32.mrb[0].mxu0
    %v1639 = vadd.f32 %v1334, %v1638
    %v1640 = vpop.f32.mrb[0].mxu0
    %v1641 = vpop.f32.mrb[0].mxu0
    %v1642 = vadd.f32 %v1337, %v1641
    %v1643 = vpop.f32.mrb[0].mxu0
    %1644 = vmatprep.mubr.bf16.mxu0 0
    %1645 = vmatmul.mubr.bf16.gmra.mrb[0].mxu0 %v1207
    %v1646 = vpop.f32.mrb[0].mxu0
    %v1647 = vadd.f32 %v1342, %v1646
    %v1648 = vpop.f32.mrb[0].mxu0
    %v1649 = vpop.f32.mrb[0].mxu0
    %v1650 = vadd.f32 %v1345, %v1649
    %v1651 = vpop.f32.mrb[0].mxu0
    %1652 = vmatprep.mubr.bf16.mxu0 0
    %1653 = vmatmul.mubr.bf16.gmra.mrb[0].mxu0 %v1209
    %v1654 = vpop.f32.mrb[0].mxu0
    %v1655 = vadd.f32 %v1350, %v1654
    %v1656 = vpop.f32.mrb[0].mxu0
    %v1657 = vpop.f32.mrb[0].mxu0
    %v1658 = vadd.f32 %v1353, %v1657
    %v1659 = vpop.f32.mrb[0].mxu0
    %1660 = vmatprep.mubr.bf16.mxu0 0
    %1661 = vmatmul.mubr.bf16.gmra.mrb[0].mxu0 %v1211
    %v1662 = vpop.f32.mrb[0].mxu0
    %v1663 = vadd.f32 %v1358, %v1662
    %v1664 = vpop.f32.mrb[0].mxu0
    %v1665 = vpop.f32.mrb[0].mxu0
    %v1666 = vadd.f32 %v1361, %v1665
    %v1667 = vpop.f32.mrb[0].mxu0
    %1668 = vmatprep.mubr.bf16.mxu0 0
    %1669 = vmatmul.mubr.bf16.gmra.mrb[0].mxu0 %v1213
    %v1670 = vpop.f32.mrb[0].mxu0
    %v1671 = vadd.f32 %v1366, %v1670
    %v1672 = vpop.f32.mrb[0].mxu0
    %v1673 = vpop.f32.mrb[0].mxu0
    %v1674 = vadd.f32 %v1369, %v1673
    %v1675 = vpop.f32.mrb[0].mxu0
    %1676 = vmatprep.mubr.bf16.mxu0 0
    %1677 = vmatmul.mubr.bf16.gmra.mrb[0].mxu0 %v1215
    %v1678 = vpop.f32.mrb[0].mxu0
    %v1679 = vadd.f32 %v1374, %v1678
    %v1680 = vpop.f32.mrb[0].mxu0
    %v1681 = vpop.f32.mrb[0].mxu0
    %v1682 = vadd.f32 %v1377, %v1681
    %v1683 = vpop.f32.mrb[0].mxu0
    %1684 = vmatprep.mubr.bf16.mxu0 0
    %1685 = vmatmul.mubr.bf16.gmra.mrb[0].mxu0 %v1217
    %v1686 = vpop.f32.mrb[0].mxu0
    %v1687 = vadd.f32 %v1382, %v1686
    %v1688 = vpop.f32.mrb[0].mxu0
    %v1689 = vpop.f32.mrb[0].mxu0
    %v1690 = vadd.f32 %v1385, %v1689
    %v1691 = vpop.f32.mrb[0].mxu0
    %1692 = vmatprep.mubr.bf16.mxu0 0
    %1693 = vmatmul.mubr.bf16.gmra.mrb[0].mxu0 %v1219
    %v1694 = vpop.f32.mrb[0].mxu0
    %v1695 = vadd.f32 %v1390, %v1694
    %v1696 = vpop.f32.mrb[0].mxu0
    %v1697 = vpop.f32.mrb[0].mxu0
    %v1698 = vadd.f32 %v1393, %v1697
    %v1699 = vpop.f32.mrb[0].mxu0
    %1700 = vmatprep.mubr.bf16.mxu0 0
    %1701 = vmatmul.mubr.bf16.gmra.mrb[0].mxu0 %v1221
    %v1702 = vpop.f32.mrb[0].mxu0
    %v1703 = vadd.f32 %v1398, %v1702
    %v1704 = vpop.f32.mrb[0].mxu0
    %v1705 = vpop.f32.mrb[0].mxu0
    %v1706 = vadd.f32 %v1401, %v1705
    %v1707 = vpop.f32.mrb[0].mxu0
    %1708 = vmatprep.mubr.bf16.mxu0 0
    %1709 = vmatmul.mubr.bf16.gmra.mrb[0].mxu0 %v1223
    %v1710 = vpop.f32.mrb[0].mxu0
    %v1711 = vadd.f32 %v1406, %v1710
    %v1712 = vpop.f32.mrb[0].mxu0
    %v1713 = vpop.f32.mrb[0].mxu0
    %v1714 = vadd.f32 %v1409, %v1713
    %v1715 = vpop.f32.mrb[0].mxu0
    %1716 = vmatprep.mubr.bf16.mxu0 0
    %1717 = vmatmul.mubr.bf16.gmra.mrb[0].mxu0 %v1225
    %v1718 = vpop.f32.mrb[0].mxu0
    %v1719 = vadd.f32 %v1414, %v1718
    %v1720 = vpop.f32.mrb[0].mxu0
    %v1721 = vpop.f32.mrb[0].mxu0
    %v1722 = vadd.f32 %v1417, %v1721
    %v1723 = vpop.f32.mrb[0].mxu0
    %1724 = vmatprep.mubr.bf16.mxu0 0
    %1725 = vmatmul.mubr.bf16.gmra.mrb[0].mxu0 %v1227
    %v1726 = vpop.f32.mrb[0].mxu0
    %v1727 = vadd.f32 %v1422, %v1726
    %v1728 = vpop.f32.mrb[0].mxu0
    %v1729 = vpop.f32.mrb[0].mxu0
    %v1730 = vadd.f32 %v1425, %v1729
    %v1731 = vpop.f32.mrb[0].mxu0
    %1732 = vmatprep.mubr.bf16.mxu0 0
    %1733 = vmatmul.mubr.bf16.gmra.mrb[0].mxu0 %v1567
    %v1734 = vpop.f32.mrb[0].mxu0
    %v1735 = vadd.f32 %v1430, %v1734
    %v1736 = vpop.f32.mrb[0].mxu0
    %v1737 = vpop.f32.mrb[0].mxu0
    %v1738 = vadd.f32 %v1433, %v1737
    %v1739 = vpop.f32.mrb[0].mxu0
    %1740 = vmatprep.mubr.bf16.mxu0 0
    %1741 = vmatmul.mubr.bf16.gmra.mrb[0].mxu0 %v1231
    %v1742 = vpop.f32.mrb[0].mxu0
    %v1743 = vadd.f32 %v1438, %v1742
    %v1744 = vpop.f32.mrb[0].mxu0
    %v1745 = vpop.f32.mrb[0].mxu0
    %v1746 = vadd.f32 %v1441, %v1745
    %v1747 = vpop.f32.mrb[0].mxu0
    %1748 = vmatprep.mubr.bf16.mxu0 0
    %1749 = vmatmul.mubr.bf16.gmra.mrb[0].mxu0 %v1233
    %v1750 = vpop.f32.mrb[0].mxu0
    %v1751 = vadd.f32 %v1446, %v1750
    %v1752 = vpop.f32.mrb[0].mxu0
    %v1753 = vpop.f32.mrb[0].mxu0
    %v1754 = vadd.f32 %v1449, %v1753
    %v1755 = vpop.f32.mrb[0].mxu0
    %1756 = vmatprep.mubr.bf16.mxu0 0
    %1757 = vmatmul.mubr.bf16.gmra.mrb[0].mxu0 %v1235
    %v1758 = vpop.f32.mrb[0].mxu0
    %v1759 = vadd.f32 %v1454, %v1758
    %v1760 = vpop.f32.mrb[0].mxu0
    %v1761 = vpop.f32.mrb[0].mxu0
    %v1762 = vadd.f32 %v1457, %v1761
    %v1763 = vpop.f32.mrb[0].mxu0
    %1764 = vmatprep.mubr.bf16.mxu0 0
    %1765 = vmatmul.mubr.bf16.gmra.mrb[0].mxu0 %v1237
    %v1766 = vpop.f32.mrb[0].mxu0
    %v1767 = vadd.f32 %v1462, %v1766
    %v1768 = vpop.f32.mrb[0].mxu0
    %v1769 = vpop.f32.mrb[0].mxu0
    %v1770 = vadd.f32 %v1465, %v1769
    %v1771 = vpop.f32.mrb[0].mxu0
    %1772 = vmatprep.mubr.bf16.mxu0 0
    %1773 = vmatmul.mubr.bf16.gmra.mrb[0].mxu0 %v1239
    %v1774 = vpop.f32.mrb[0].mxu0
    %v1775 = vadd.f32 %v1470, %v1774
    %v1776 = vpop.f32.mrb[0].mxu0
    %v1777 = vpop.f32.mrb[0].mxu0
    %v1778 = vadd.f32 %v1473, %v1777
    %v1779 = vpop.f32.mrb[0].mxu0
    %1780 = vmatprep.mubr.bf16.mxu0 0
    %1781 = vmatmul.mubr.bf16.gmra.mrb[0].mxu0 %v1241
    %v1782 = vpop.f32.mrb[0].mxu0
    %v1783 = vadd.f32 %v1478, %v1782
    %v1784 = vpop.f32.mrb[0].mxu0
    %v1785 = vpop.f32.mrb[0].mxu0
    %v1786 = vadd.f32 %v1481, %v1785
    %v1787 = vpop.f32.mrb[0].mxu0
    %1788 = vmatprep.mubr.bf16.mxu0 0
    %1789 = vmatmul.mubr.bf16.gmra.mrb[0].mxu0 %v1243
    %v1790 = vpop.f32.mrb[0].mxu0
    %v1791 = vadd.f32 %v1486, %v1790
    %v1792 = vpop.f32.mrb[0].mxu0
    %v1793 = vpop.f32.mrb[0].mxu0
    %v1794 = vadd.f32 %v1489, %v1793
    %v1795 = vpop.f32.mrb[0].mxu0
    %1796 = vmatprep.mubr.bf16.mxu0 0
    %1797 = vmatmul.mubr.bf16.gmra.mrb[0].mxu0 %v1245
    %v1798 = vpop.f32.mrb[0].mxu0
    %v1799 = vadd.f32 %v1494, %v1798
    %v1800 = vpop.f32.mrb[0].mxu0
    %v1801 = vpop.f32.mrb[0].mxu0
    %v1802 = vadd.f32 %v1497, %v1801
    %v1803 = vpop.f32.mrb[0].mxu0
    %1804 = vmatprep.mubr.bf16.mxu0 0
    %1805 = vmatmul.mubr.bf16.gmra.mrb[0].mxu0 %v1247
    %v1806 = vpop.f32.mrb[0].mxu0
    %v1807 = vadd.f32 %v1502, %v1806
    %v1808 = vpop.f32.mrb[0].mxu0
    %v1809 = vpop.f32.mrb[0].mxu0
    %v1810 = vadd.f32 %v1505, %v1809
    %v1811 = vpop.f32.mrb[0].mxu0
    %1812 = vmatprep.mubr.bf16.mxu0 0
    %1813 = vmatmul.mubr.bf16.gmra.mrb[0].mxu0 %v1249
    %v1814 = vpop.f32.mrb[0].mxu0
    %v1815 = vadd.f32 %v1510, %v1814
    %v1816 = vpop.f32.mrb[0].mxu0
    %v1817 = vpop.f32.mrb[0].mxu0
    %v1818 = vadd.f32 %v1513, %v1817
    %v1819 = vpop.f32.mrb[0].mxu0
    %1820 = vmatprep.mubr.bf16.mxu0 0
    %1821 = vmatmul.mubr.bf16.gmra.mrb[0].mxu0 %v1251
    %v1822 = vpop.f32.mrb[0].mxu0
    %v1823 = vadd.f32 %v1518, %v1822
    %v1824 = vpop.f32.mrb[0].mxu0
    %v1825 = vpop.f32.mrb[0].mxu0
    %v1826 = vadd.f32 %v1521, %v1825
    %v1827 = vpop.f32.mrb[0].mxu0
    %1828 = vmatprep.mubr.bf16.mxu0 0
    %1829 = vmatmul.mubr.bf16.gmra.mrb[0].mxu0 %v1253
    %v1830 = vpop.f32.mrb[0].mxu0
    %v1831 = vadd.f32 %v1526, %v1830
    %v1832 = vpop.f32.mrb[0].mxu0
    %v1833 = vpop.f32.mrb[0].mxu0
    %v1834 = vadd.f32 %v1529, %v1833
    %v1835 = vpop.f32.mrb[0].mxu0
    %1836 = vmatprep.mubr.bf16.mxu0 0
    %1837 = vmatmul.mubr.bf16.gmra.mrb[0].mxu0 %v1255
    %v1838 = vpop.f32.mrb[0].mxu0
    %v1839 = vadd.f32 %v1534, %v1838
    %v1840 = vpop.f32.mrb[0].mxu0
    %v1841 = vpop.f32.mrb[0].mxu0
    %v1842 = vadd.f32 %v1537, %v1841
    %v1843 = vpop.f32.mrb[0].mxu0
    %1844 = vmatprep.mubr.bf16.mxu0 0
    %1845 = vmatmul.mubr.bf16.gmra.mrb[0].mxu0 %v1257
    %v1846 = vpop.f32.mrb[0].mxu0
    %v1847 = vadd.f32 %v1542, %v1846
    %v1848 = vpop.f32.mrb[0].mxu0
    %v1849 = vpop.f32.mrb[0].mxu0
    %v1850 = vadd.f32 %v1545, %v1849
    %v1851 = vpop.f32.mrb[0].mxu0
    %1852 = vmatprep.mubr.bf16.mxu0 0
    %1853 = vmatmul.mubr.bf16.gmra.mrb[0].mxu0 %v1259
    %v1854 = vpop.f32.mrb[0].mxu0
    %v1855 = vadd.f32 %v1550, %v1854
    %v1856 = vpop.f32.mrb[0].mxu0
    %v1857 = vpop.f32.mrb[0].mxu0
    %v1858 = vadd.f32 %v1553, %v1857
    %v1859 = vpop.f32.mrb[0].mxu0
    %1860 = vdwg.mxu0
    %v1865 = vunpack.c.l.b16 %v67
    %v1866 = vunpack.c.l.b16 %v68
    %v1867 = vunpack.c.l.b16 %v121
    %v1868 = vunpack.c.l.b16 %v122
    %v1869 = vpack.c.b16 %v1866, %v1865
    %v1870 = vpack.c.b16 %v1868, %v1867
    %v1873 = vunpack.c.l.b16 %v69
    %v1874 = vunpack.c.l.b16 %v123
    %v1875 = vpack.c.b16 %v1873, %v1873
    %v1876 = vpack.c.b16 %v1874, %v1874
    %v1878 = vshrl.u32 %v1869, 16
    %v1880 = vshll.u32 %v1869, 16
    %v1882 = vrot.slane %v1880, 1
    %v1883 = vor.u32 %v1878, %v1882
    %v1885 = vshll.u32 %v1875, 16
    %v1887 = vrot.slane %v1885, 1
    %v1888 = vsel %vm380, %v1883, %v1887
    %v1890 = vshrl.u32 %v1870, 16
    %v1892 = vshll.u32 %v1870, 16
    %v1894 = vrot.slane %v1892, 1
    %v1895 = vor.u32 %v1890, %v1894
    %v1897 = vshll.u32 %v1876, 16
    %v1899 = vrot.slane %v1897, 1
    %v1900 = vsel %vm380, %v1895, %v1899
    %1901 = vrot.lane.b32.xlu0 %v1888, 8
    %v1902 = vpop.permute.xlu0 %1901
    %1903 = vrot.lane.b32.xlu0 %v1900, 8
    %v1904 = vpop.permute.xlu0 %1903
    %v1905 = vrot.slane %v1869, 1
    %v1906 = vrot.slane %v1875, 1
    %v1907 = vsel %vm829, %v1905, %v1906
    %v1908 = vrot.slane %v1870, 1
    %v1909 = vrot.slane %v1876, 1
    %v1910 = vsel %vm829, %v1908, %v1909
    %1911 = vrot.lane.b32.xlu0 %v1907, 16
    %v1912 = vpop.permute.xlu0 %1911
    %1913 = vrot.lane.b32.xlu0 %v1910, 16
    %v1914 = vpop.permute.xlu0 %1913
    %v1916 = vsel %vm990, %v1869, %v1902
    %v1918 = vsel %vm990, %v1870, %v1904
    %v1920 = vsel %vm1055, %v1916, %v1912
    %v1922 = vsel %vm1055, %v1918, %v1914
    %s1923 = scalar_lea.vmem %s1, 24
    %v1924 = vld [vmem:[%s1923] sm:$0xf]
    %v1925 = vld [vmem:[%s1923 + $0x4] sm:$0xf]
    %v1926 = vld [vmem:[%s1923 + $0x8] sm:$0xf]
    %v1930 = vunpack.c.l.b16 %v1924
    %v1931 = vunpack.c.l.b16 %v1925
    %v1932 = vunpack.c.l.b16 %v1926
    %v1933 = vpack.c.b16 %v1931, %v1930
    %v1934 = vpack.c.b16 %v1932, %v1932
    %v1936 = vsel %vm1198, %v1920, 0
    %v1938 = vsel %vm1198, %v1922, 0
    %v1941 = vsel %vm1263, %v1934, 0
    %1943 = vmatprep.subr.bf16.mxu0 0
    %1944 = vmatpush1.bf16.msra.mxu0 %v1933
    %1945 = vmatprep.subr.bf16.mxu0 0
    %1946 = vmatpush1.bf16.msra.mxu0 %v1941
    %1947 = vmatprep.subr.bf16.mxu0 0
    %1948 = vmatpush1.bf16.msra.mxu0 0
    %1949 = vmatprep.subr.bf16.mxu0 0
    %1950 = vmatpush1.bf16.msra.mxu0 0
    %1951 = vmatprep.subr.bf16.mxu0 0
    %1952 = vmatpush1.bf16.msra.mxu0 0
    %1953 = vmatprep.subr.bf16.mxu0 0
    %1954 = vmatpush1.bf16.msra.mxu0 0
    %1955 = vmatprep.subr.bf16.mxu0 0
    %1956 = vmatpush1.bf16.msra.mxu0 0
    %1957 = vmatprep.subr.bf16.mxu0 0
    %1958 = vmatpush1.bf16.msra.mxu0 0
    %1959 = vmatprep.subr.bf16.mxu0 0
    %1960 = vmatpush1.bf16.msra.mxu0 0
    %1961 = vmatprep.subr.bf16.mxu0 0
    %1962 = vmatpush1.bf16.msra.mxu0 0
    %1963 = vmatprep.subr.bf16.mxu0 0
    %1964 = vmatpush1.bf16.msra.mxu0 0
    %1965 = vmatprep.subr.bf16.mxu0 0
    %1966 = vmatpush1.bf16.msra.mxu0 0
    %1967 = vmatprep.subr.bf16.mxu0 0
    %1968 = vmatpush1.bf16.msra.mxu0 0
    %1969 = vmatprep.subr.bf16.mxu0 0
    %1970 = vmatpush1.bf16.msra.mxu0 0
    %1971 = vmatprep.subr.bf16.mxu0 0
    %1972 = vmatpush1.bf16.msra.mxu0 0
    %1973 = vmatprep.subr.bf16.mxu0 0
    %1974 = vmatpush1.bf16.msra.mxu0 0
    %1975 = vmatprep.mubr.bf16.mxu0 0
    %1976 = vmatmul.mubr.bf16.gmra.mrb[0].mxu0 %v1201
    %v1977 = vpop.f32.mrb[0].mxu0
    %v1978 = vadd.f32 0.0, %v1977
    %v1979 = vpop.f32.mrb[0].mxu0
    %v1980 = vpop.f32.mrb[0].mxu0
    %v1981 = vadd.f32 0.0, %v1980
    %v1982 = vpop.f32.mrb[0].mxu0
    %1983 = vmatprep.mubr.bf16.mxu0 0
    %1984 = vmatmul.mubr.bf16.gmra.mrb[0].mxu0 %v1203
    %v1985 = vpop.f32.mrb[0].mxu0
    %v1986 = vadd.f32 0.0, %v1985
    %v1987 = vpop.f32.mrb[0].mxu0
    %v1988 = vpop.f32.mrb[0].mxu0
    %v1989 = vadd.f32 0.0, %v1988
    %v1990 = vpop.f32.mrb[0].mxu0
    %1991 = vmatprep.mubr.bf16.mxu0 0
    %1992 = vmatmul.mubr.bf16.gmra.mrb[0].mxu0 %v1205
    %v1993 = vpop.f32.mrb[0].mxu0
    %v1994 = vadd.f32 0.0, %v1993
    %v1995 = vpop.f32.mrb[0].mxu0
    %v1996 = vpop.f32.mrb[0].mxu0
    %v1997 = vadd.f32 0.0, %v1996
    %v1998 = vpop.f32.mrb[0].mxu0
    %1999 = vmatprep.mubr.bf16.mxu0 0
    %2000 = vmatmul.mubr.bf16.gmra.mrb[0].mxu0 %v1207
    %v2001 = vpop.f32.mrb[0].mxu0
    %v2002 = vadd.f32 0.0, %v2001
    %v2003 = vpop.f32.mrb[0].mxu0
    %v2004 = vpop.f32.mrb[0].mxu0
    %v2005 = vadd.f32 0.0, %v2004
    %v2006 = vpop.f32.mrb[0].mxu0
    %2007 = vmatprep.mubr.bf16.mxu0 0
    %2008 = vmatmul.mubr.bf16.gmra.mrb[0].mxu0 %v1209
    %v2009 = vpop.f32.mrb[0].mxu0
    %v2010 = vadd.f32 0.0, %v2009
    %v2011 = vpop.f32.mrb[0].mxu0
    %v2012 = vpop.f32.mrb[0].mxu0
    %v2013 = vadd.f32 0.0, %v2012
    %v2014 = vpop.f32.mrb[0].mxu0
    %2015 = vmatprep.mubr.bf16.mxu0 0
    %2016 = vmatmul.mubr.bf16.gmra.mrb[0].mxu0 %v1211
    %v2017 = vpop.f32.mrb[0].mxu0
    %v2018 = vadd.f32 0.0, %v2017
    %v2019 = vpop.f32.mrb[0].mxu0
    %v2020 = vpop.f32.mrb[0].mxu0
    %v2021 = vadd.f32 0.0, %v2020
    %v2022 = vpop.f32.mrb[0].mxu0
    %2023 = vmatprep.mubr.bf16.mxu0 0
    %2024 = vmatmul.mubr.bf16.gmra.mrb[0].mxu0 %v1213
    %v2025 = vpop.f32.mrb[0].mxu0
    %v2026 = vadd.f32 0.0, %v2025
    %v2027 = vpop.f32.mrb[0].mxu0
    %v2028 = vpop.f32.mrb[0].mxu0
    %v2029 = vadd.f32 0.0, %v2028
    %v2030 = vpop.f32.mrb[0].mxu0
    %2031 = vmatprep.mubr.bf16.mxu0 0
    %2032 = vmatmul.mubr.bf16.gmra.mrb[0].mxu0 %v1215
    %v2033 = vpop.f32.mrb[0].mxu0
    %v2034 = vadd.f32 0.0, %v2033
    %v2035 = vpop.f32.mrb[0].mxu0
    %v2036 = vpop.f32.mrb[0].mxu0
    %v2037 = vadd.f32 0.0, %v2036
    %v2038 = vpop.f32.mrb[0].mxu0
    %2039 = vmatprep.mubr.bf16.mxu0 0
    %2040 = vmatmul.mubr.bf16.gmra.mrb[0].mxu0 %v1217
    %v2041 = vpop.f32.mrb[0].mxu0
    %v2042 = vadd.f32 0.0, %v2041
    %v2043 = vpop.f32.mrb[0].mxu0
    %v2044 = vpop.f32.mrb[0].mxu0
    %v2045 = vadd.f32 0.0, %v2044
    %v2046 = vpop.f32.mrb[0].mxu0
    %2047 = vmatprep.mubr.bf16.mxu0 0
    %2048 = vmatmul.mubr.bf16.gmra.mrb[0].mxu0 %v1219
    %v2049 = vpop.f32.mrb[0].mxu0
    %v2050 = vadd.f32 0.0, %v2049
    %v2051 = vpop.f32.mrb[0].mxu0
    %v2052 = vpop.f32.mrb[0].mxu0
    %v2053 = vadd.f32 0.0, %v2052
    %v2054 = vpop.f32.mrb[0].mxu0
    %2055 = vmatprep.mubr.bf16.mxu0 0
    %2056 = vmatmul.mubr.bf16.gmra.mrb[0].mxu0 %v1221
    %v2057 = vpop.f32.mrb[0].mxu0
    %v2058 = vadd.f32 0.0, %v2057
    %v2059 = vpop.f32.mrb[0].mxu0
    %v2060 = vpop.f32.mrb[0].mxu0
    %v2061 = vadd.f32 0.0, %v2060
    %v2062 = vpop.f32.mrb[0].mxu0
    %2063 = vmatprep.mubr.bf16.mxu0 0
    %2064 = vmatmul.mubr.bf16.gmra.mrb[0].mxu0 %v1223
    %v2065 = vpop.f32.mrb[0].mxu0
    %v2066 = vadd.f32 0.0, %v2065
    %v2067 = vpop.f32.mrb[0].mxu0
    %v2068 = vpop.f32.mrb[0].mxu0
    %v2069 = vadd.f32 0.0, %v2068
    %v2070 = vpop.f32.mrb[0].mxu0
    %2071 = vmatprep.mubr.bf16.mxu0 0
    %2072 = vmatmul.mubr.bf16.gmra.mrb[0].mxu0 %v1225
    %v2073 = vpop.f32.mrb[0].mxu0
    %v2074 = vadd.f32 0.0, %v2073
    %v2075 = vpop.f32.mrb[0].mxu0
    %v2076 = vpop.f32.mrb[0].mxu0
    %v2077 = vadd.f32 0.0, %v2076
    %v2078 = vpop.f32.mrb[0].mxu0
    %2079 = vmatprep.mubr.bf16.mxu0 0
    %2080 = vmatmul.mubr.bf16.gmra.mrb[0].mxu0 %v1227
    %v2081 = vpop.f32.mrb[0].mxu0
    %v2082 = vadd.f32 0.0, %v2081
    %v2083 = vpop.f32.mrb[0].mxu0
    %v2084 = vpop.f32.mrb[0].mxu0
    %v2085 = vadd.f32 0.0, %v2084
    %v2086 = vpop.f32.mrb[0].mxu0
    %2087 = vmatprep.mubr.bf16.mxu0 0
    %2088 = vmatmul.mubr.bf16.gmra.mrb[0].mxu0 %v1229
    %v2089 = vpop.f32.mrb[0].mxu0
    %v2090 = vadd.f32 0.0, %v2089
    %v2091 = vpop.f32.mrb[0].mxu0
    %v2092 = vpop.f32.mrb[0].mxu0
    %v2093 = vadd.f32 0.0, %v2092
    %v2094 = vpop.f32.mrb[0].mxu0
    %2095 = vmatprep.mubr.bf16.mxu0 0
    %2096 = vmatmul.mubr.bf16.gmra.mrb[0].mxu0 %v1936
    %v2097 = vpop.f32.mrb[0].mxu0
    %v2098 = vadd.f32 0.0, %v2097
    %v2099 = vpop.f32.mrb[0].mxu0
    %v2100 = vpop.f32.mrb[0].mxu0
    %v2101 = vadd.f32 0.0, %v2100
    %v2102 = vpop.f32.mrb[0].mxu0
    %2103 = vmatprep.mubr.bf16.mxu0 0
    %2104 = vmatmul.mubr.bf16.gmra.mrb[0].mxu0 %v1233
    %v2105 = vpop.f32.mrb[0].mxu0
    %v2106 = vadd.f32 0.0, %v2105
    %v2107 = vpop.f32.mrb[0].mxu0
    %v2108 = vpop.f32.mrb[0].mxu0
    %v2109 = vadd.f32 0.0, %v2108
    %v2110 = vpop.f32.mrb[0].mxu0
    %2111 = vmatprep.mubr.bf16.mxu0 0
    %2112 = vmatmul.mubr.bf16.gmra.mrb[0].mxu0 %v1235
    %v2113 = vpop.f32.mrb[0].mxu0
    %v2114 = vadd.f32 0.0, %v2113
    %v2115 = vpop.f32.mrb[0].mxu0
    %v2116 = vpop.f32.mrb[0].mxu0
    %v2117 = vadd.f32 0.0, %v2116
    %v2118 = vpop.f32.mrb[0].mxu0
    %2119 = vmatprep.mubr.bf16.mxu0 0
    %2120 = vmatmul.mubr.bf16.gmra.mrb[0].mxu0 %v1237
    %v2121 = vpop.f32.mrb[0].mxu0
    %v2122 = vadd.f32 0.0, %v2121
    %v2123 = vpop.f32.mrb[0].mxu0
    %v2124 = vpop.f32.mrb[0].mxu0
    %v2125 = vadd.f32 0.0, %v2124
    %v2126 = vpop.f32.mrb[0].mxu0
    %2127 = vmatprep.mubr.bf16.mxu0 0
    %2128 = vmatmul.mubr.bf16.gmra.mrb[0].mxu0 %v1239
    %v2129 = vpop.f32.mrb[0].mxu0
    %v2130 = vadd.f32 0.0, %v2129
    %v2131 = vpop.f32.mrb[0].mxu0
    %v2132 = vpop.f32.mrb[0].mxu0
    %v2133 = vadd.f32 0.0, %v2132
    %v2134 = vpop.f32.mrb[0].mxu0
    %2135 = vmatprep.mubr.bf16.mxu0 0
    %2136 = vmatmul.mubr.bf16.gmra.mrb[0].mxu0 %v1241
    %v2137 = vpop.f32.mrb[0].mxu0
    %v2138 = vadd.f32 0.0, %v2137
    %v2139 = vpop.f32.mrb[0].mxu0
    %v2140 = vpop.f32.mrb[0].mxu0
    %v2141 = vadd.f32 0.0, %v2140
    %v2142 = vpop.f32.mrb[0].mxu0
    %2143 = vmatprep.mubr.bf16.mxu0 0
    %2144 = vmatmul.mubr.bf16.gmra.mrb[0].mxu0 %v1243
    %v2145 = vpop.f32.mrb[0].mxu0
    %v2146 = vadd.f32 0.0, %v2145
    %v2147 = vpop.f32.mrb[0].mxu0
    %v2148 = vpop.f32.mrb[0].mxu0
    %v2149 = vadd.f32 0.0, %v2148
    %v2150 = vpop.f32.mrb[0].mxu0
    %2151 = vmatprep.mubr.bf16.mxu0 0
    %2152 = vmatmul.mubr.bf16.gmra.mrb[0].mxu0 %v1245
    %v2153 = vpop.f32.mrb[0].mxu0
    %v2154 = vadd.f32 0.0, %v2153
    %v2155 = vpop.f32.mrb[0].mxu0
    %v2156 = vpop.f32.mrb[0].mxu0
    %v2157 = vadd.f32 0.0, %v2156
    %v2158 = vpop.f32.mrb[0].mxu0
    %2159 = vmatprep.mubr.bf16.mxu0 0
    %2160 = vmatmul.mubr.bf16.gmra.mrb[0].mxu0 %v1247
    %v2161 = vpop.f32.mrb[0].mxu0
    %v2162 = vadd.f32 0.0, %v2161
    %v2163 = vpop.f32.mrb[0].mxu0
    %v2164 = vpop.f32.mrb[0].mxu0
    %v2165 = vadd.f32 0.0, %v2164
    %v2166 = vpop.f32.mrb[0].mxu0
    %2167 = vmatprep.mubr.bf16.mxu0 0
    %2168 = vmatmul.mubr.bf16.gmra.mrb[0].mxu0 %v1249
    %v2169 = vpop.f32.mrb[0].mxu0
    %v2170 = vadd.f32 0.0, %v2169
    %v2171 = vpop.f32.mrb[0].mxu0
    %v2172 = vpop.f32.mrb[0].mxu0
    %v2173 = vadd.f32 0.0, %v2172
    %v2174 = vpop.f32.mrb[0].mxu0
    %2175 = vmatprep.mubr.bf16.mxu0 0
    %2176 = vmatmul.mubr.bf16.gmra.mrb[0].mxu0 %v1251
    %v2177 = vpop.f32.mrb[0].mxu0
    %v2178 = vadd.f32 0.0, %v2177
    %v2179 = vpop.f32.mrb[0].mxu0
    %v2180 = vpop.f32.mrb[0].mxu0
    %v2181 = vadd.f32 0.0, %v2180
    %v2182 = vpop.f32.mrb[0].mxu0
    %2183 = vmatprep.mubr.bf16.mxu0 0
    %2184 = vmatmul.mubr.bf16.gmra.mrb[0].mxu0 %v1253
    %v2185 = vpop.f32.mrb[0].mxu0
    %v2186 = vadd.f32 0.0, %v2185
    %v2187 = vpop.f32.mrb[0].mxu0
    %v2188 = vpop.f32.mrb[0].mxu0
    %v2189 = vadd.f32 0.0, %v2188
    %v2190 = vpop.f32.mrb[0].mxu0
    %2191 = vmatprep.mubr.bf16.mxu0 0
    %2192 = vmatmul.mubr.bf16.gmra.mrb[0].mxu0 %v1255
    %v2193 = vpop.f32.mrb[0].mxu0
    %v2194 = vadd.f32 0.0, %v2193
    %v2195 = vpop.f32.mrb[0].mxu0
    %v2196 = vpop.f32.mrb[0].mxu0
    %v2197 = vadd.f32 0.0, %v2196
    %v2198 = vpop.f32.mrb[0].mxu0
    %2199 = vmatprep.mubr.bf16.mxu0 0
    %2200 = vmatmul.mubr.bf16.gmra.mrb[0].mxu0 %v1257
    %v2201 = vpop.f32.mrb[0].mxu0
    %v2202 = vadd.f32 0.0, %v2201
    %v2203 = vpop.f32.mrb[0].mxu0
    %v2204 = vpop.f32.mrb[0].mxu0
    %v2205 = vadd.f32 0.0, %v2204
    %v2206 = vpop.f32.mrb[0].mxu0
    %2207 = vmatprep.mubr.bf16.mxu0 0
    %2208 = vmatmul.mubr.bf16.gmra.mrb[0].mxu0 %v1259
    %v2209 = vpop.f32.mrb[0].mxu0
    %v2210 = vadd.f32 0.0, %v2209
    %v2211 = vpop.f32.mrb[0].mxu0
    %v2212 = vpop.f32.mrb[0].mxu0
    %v2213 = vadd.f32 0.0, %v2212
    %v2214 = vpop.f32.mrb[0].mxu0
    %2215 = vmatprep.mubr.bf16.mxu0 0
    %2216 = vmatmul.mubr.bf16.gmra.mrb[0].mxu0 %v1261
    %v2217 = vpop.f32.mrb[0].mxu0
    %v2218 = vadd.f32 0.0, %v2217
    %v2219 = vpop.f32.mrb[0].mxu0
    %v2220 = vpop.f32.mrb[0].mxu0
    %v2221 = vadd.f32 0.0, %v2220
    %v2222 = vpop.f32.mrb[0].mxu0
    %2223 = vmatprep.mubr.bf16.mxu0 0
    %2224 = vmatmul.mubr.bf16.gmra.mrb[0].mxu0 %v1938
    %v2225 = vpop.f32.mrb[0].mxu0
    %v2226 = vadd.f32 0.0, %v2225
    %v2227 = vpop.f32.mrb[0].mxu0
    %v2228 = vpop.f32.mrb[0].mxu0
    %v2229 = vadd.f32 0.0, %v2228
    %v2230 = vpop.f32.mrb[0].mxu0
    %2231 = vdwg.mxu0
    %v2232 = vadd.f32 %v1607, %v1978
    %v2233 = vadd.f32 %v1610, %v1981
    %v2234 = vadd.f32 %v1615, %v1986
    %v2235 = vadd.f32 %v1618, %v1989
    %v2236 = vadd.f32 %v1623, %v1994
    %v2237 = vadd.f32 %v1626, %v1997
    %v2238 = vadd.f32 %v1631, %v2002
    %v2239 = vadd.f32 %v1634, %v2005
    %v2240 = vadd.f32 %v1639, %v2010
    %v2241 = vadd.f32 %v1642, %v2013
    %v2242 = vadd.f32 %v1647, %v2018
    %v2243 = vadd.f32 %v1650, %v2021
    %v2244 = vadd.f32 %v1655, %v2026
    %v2245 = vadd.f32 %v1658, %v2029
    %v2246 = vadd.f32 %v1663, %v2034
    %v2247 = vadd.f32 %v1666, %v2037
    %v2248 = vadd.f32 %v1671, %v2042
    %v2249 = vadd.f32 %v1674, %v2045
    %v2250 = vadd.f32 %v1679, %v2050
    %v2251 = vadd.f32 %v1682, %v2053
    %v2252 = vadd.f32 %v1687, %v2058
    %v2253 = vadd.f32 %v1690, %v2061
    %v2254 = vadd.f32 %v1695, %v2066
    %v2255 = vadd.f32 %v1698, %v2069
    %v2256 = vadd.f32 %v1703, %v2074
    %v2257 = vadd.f32 %v1706, %v2077
    %v2258 = vadd.f32 %v1711, %v2082
    %v2259 = vadd.f32 %v1714, %v2085
    %v2260 = vadd.f32 %v1719, %v2090
    %v2261 = vadd.f32 %v1722, %v2093
    %v2262 = vadd.f32 %v1727, %v2098
    %v2263 = vadd.f32 %v1730, %v2101
    %v2264 = vadd.f32 %v1735, %v2106
    %v2265 = vadd.f32 %v1738, %v2109
    %v2266 = vadd.f32 %v1743, %v2114
    %v2267 = vadd.f32 %v1746, %v2117
    %v2268 = vadd.f32 %v1751, %v2122
    %v2269 = vadd.f32 %v1754, %v2125
    %v2270 = vadd.f32 %v1759, %v2130
    %v2271 = vadd.f32 %v1762, %v2133
    %v2272 = vadd.f32 %v1767, %v2138
    %v2273 = vadd.f32 %v1770, %v2141
    %v2274 = vadd.f32 %v1775, %v2146
    %v2275 = vadd.f32 %v1778, %v2149
    %v2276 = vadd.f32 %v1783, %v2154
    %v2277 = vadd.f32 %v1786, %v2157
    %v2278 = vadd.f32 %v1791, %v2162
    %v2279 = vadd.f32 %v1794, %v2165
    %v2280 = vadd.f32 %v1799, %v2170
    %v2281 = vadd.f32 %v1802, %v2173
    %v2282 = vadd.f32 %v1807, %v2178
    %v2283 = vadd.f32 %v1810, %v2181
    %v2284 = vadd.f32 %v1815, %v2186
    %v2285 = vadd.f32 %v1818, %v2189
    %v2286 = vadd.f32 %v1823, %v2194
    %v2287 = vadd.f32 %v1826, %v2197
    %v2288 = vadd.f32 %v1831, %v2202
    %v2289 = vadd.f32 %v1834, %v2205
    %v2290 = vadd.f32 %v1839, %v2210
    %v2291 = vadd.f32 %v1842, %v2213
    %v2292 = vadd.f32 %v1847, %v2218
    %v2293 = vadd.f32 %v1850, %v2221
    %v2294 = vadd.f32 %v1855, %v2226
    %v2295 = vadd.f32 %v1858, %v2229
    %v2296 = vld [vmem:[%s2] sm:$0x1]
    %v2298 = vlaneseq
    %v2299 = vshrl.u32 %v2298, 7
    %v2300 = vsub.s32 0, %v2299
    %v2301 = vrot.slane %v2296, %v2300
    %v2303 = vadd.f32 %v2232, %v2301
    %v2304 = vadd.f32 %v2233, %v2301
    %v2305 = vadd.f32 %v2234, %v2301
    %v2306 = vadd.f32 %v2235, %v2301
    %v2307 = vadd.f32 %v2236, %v2301
    %v2308 = vadd.f32 %v2237, %v2301
    %v2309 = vadd.f32 %v2238, %v2301
    %v2310 = vadd.f32 %v2239, %v2301
    %v2311 = vadd.f32 %v2240, %v2301
    %v2312 = vadd.f32 %v2241, %v2301
    %v2313 = vadd.f32 %v2242, %v2301
    %v2314 = vadd.f32 %v2243, %v2301
    %v2315 = vadd.f32 %v2244, %v2301
    %v2316 = vadd.f32 %v2245, %v2301
    %v2317 = vadd.f32 %v2246, %v2301
    %v2318 = vadd.f32 %v2247, %v2301
    %v2319 = vadd.f32 %v2248, %v2301
    %v2320 = vadd.f32 %v2249, %v2301
    %v2321 = vadd.f32 %v2250, %v2301
    %v2322 = vadd.f32 %v2251, %v2301
    %v2323 = vadd.f32 %v2252, %v2301
    %v2324 = vadd.f32 %v2253, %v2301
    %v2325 = vadd.f32 %v2254, %v2301
    %v2326 = vadd.f32 %v2255, %v2301
    %v2327 = vadd.f32 %v2256, %v2301
    %v2328 = vadd.f32 %v2257, %v2301
    %v2329 = vadd.f32 %v2258, %v2301
    %v2330 = vadd.f32 %v2259, %v2301
    %v2331 = vadd.f32 %v2260, %v2301
    %v2332 = vadd.f32 %v2261, %v2301
    %v2333 = vadd.f32 %v2262, %v2301
    %v2334 = vadd.f32 %v2263, %v2301
    %v2335 = vadd.f32 %v2264, %v2301
    %v2336 = vadd.f32 %v2265, %v2301
    %v2337 = vadd.f32 %v2266, %v2301
    %v2338 = vadd.f32 %v2267, %v2301
    %v2339 = vadd.f32 %v2268, %v2301
    %v2340 = vadd.f32 %v2269, %v2301
    %v2341 = vadd.f32 %v2270, %v2301
    %v2342 = vadd.f32 %v2271, %v2301
    %v2343 = vadd.f32 %v2272, %v2301
    %v2344 = vadd.f32 %v2273, %v2301
    %v2345 = vadd.f32 %v2274, %v2301
    %v2346 = vadd.f32 %v2275, %v2301
    %v2347 = vadd.f32 %v2276, %v2301
    %v2348 = vadd.f32 %v2277, %v2301
    %v2349 = vadd.f32 %v2278, %v2301
    %v2350 = vadd.f32 %v2279, %v2301
    %v2351 = vadd.f32 %v2280, %v2301
    %v2352 = vadd.f32 %v2281, %v2301
    %v2353 = vadd.f32 %v2282, %v2301
    %v2354 = vadd.f32 %v2283, %v2301
    %v2355 = vadd.f32 %v2284, %v2301
    %v2356 = vadd.f32 %v2285, %v2301
    %v2357 = vadd.f32 %v2286, %v2301
    %v2358 = vadd.f32 %v2287, %v2301
    %v2359 = vadd.f32 %v2288, %v2301
    %v2360 = vadd.f32 %v2289, %v2301
    %v2361 = vadd.f32 %v2290, %v2301
    %v2362 = vadd.f32 %v2291, %v2301
    %v2363 = vadd.f32 %v2292, %v2301
    %v2364 = vadd.f32 %v2293, %v2301
    %v2365 = vadd.f32 %v2294, %v2301
    %v2366 = vadd.f32 %v2295, %v2301
    %vm2367 = vcmp.ge.f32.partialorder %v2303, 0.0
    %vm2368 = vcmp.ge.f32.partialorder %v2304, 0.0
    %vm2369 = vcmp.ge.f32.partialorder %v2305, 0.0
    %vm2370 = vcmp.ge.f32.partialorder %v2306, 0.0
    %vm2371 = vcmp.ge.f32.partialorder %v2307, 0.0
    %vm2372 = vcmp.ge.f32.partialorder %v2308, 0.0
    %vm2373 = vcmp.ge.f32.partialorder %v2309, 0.0
    %vm2374 = vcmp.ge.f32.partialorder %v2310, 0.0
    %vm2375 = vcmp.ge.f32.partialorder %v2311, 0.0
    %vm2376 = vcmp.ge.f32.partialorder %v2312, 0.0
    %vm2377 = vcmp.ge.f32.partialorder %v2313, 0.0
    %vm2378 = vcmp.ge.f32.partialorder %v2314, 0.0
    %vm2379 = vcmp.ge.f32.partialorder %v2315, 0.0
    %vm2380 = vcmp.ge.f32.partialorder %v2316, 0.0
    %vm2381 = vcmp.ge.f32.partialorder %v2317, 0.0
    %vm2382 = vcmp.ge.f32.partialorder %v2318, 0.0
    %vm2383 = vcmp.ge.f32.partialorder %v2319, 0.0
    %vm2384 = vcmp.ge.f32.partialorder %v2320, 0.0
    %vm2385 = vcmp.ge.f32.partialorder %v2321, 0.0
    %vm2386 = vcmp.ge.f32.partialorder %v2322, 0.0
    %vm2387 = vcmp.ge.f32.partialorder %v2323, 0.0
    %vm2388 = vcmp.ge.f32.partialorder %v2324, 0.0
    %vm2389 = vcmp.ge.f32.partialorder %v2325, 0.0
    %vm2390 = vcmp.ge.f32.partialorder %v2326, 0.0
    %vm2391 = vcmp.ge.f32.partialorder %v2327, 0.0
    %vm2392 = vcmp.ge.f32.partialorder %v2328, 0.0
    %vm2393 = vcmp.ge.f32.partialorder %v2329, 0.0
    %vm2394 = vcmp.ge.f32.partialorder %v2330, 0.0
    %vm2395 = vcmp.ge.f32.partialorder %v2331, 0.0
    %vm2396 = vcmp.ge.f32.partialorder %v2332, 0.0
    %vm2397 = vcmp.ge.f32.partialorder %v2333, 0.0
    %vm2398 = vcmp.ge.f32.partialorder %v2334, 0.0
    %vm2399 = vcmp.ge.f32.partialorder %v2335, 0.0
    %vm2400 = vcmp.ge.f32.partialorder %v2336, 0.0
    %vm2401 = vcmp.ge.f32.partialorder %v2337, 0.0
    %vm2402 = vcmp.ge.f32.partialorder %v2338, 0.0
    %vm2403 = vcmp.ge.f32.partialorder %v2339, 0.0
    %vm2404 = vcmp.ge.f32.partialorder %v2340, 0.0
    %vm2405 = vcmp.ge.f32.partialorder %v2341, 0.0
    %vm2406 = vcmp.ge.f32.partialorder %v2342, 0.0
    %vm2407 = vcmp.ge.f32.partialorder %v2343, 0.0
    %vm2408 = vcmp.ge.f32.partialorder %v2344, 0.0
    %vm2409 = vcmp.ge.f32.partialorder %v2345, 0.0
    %vm2410 = vcmp.ge.f32.partialorder %v2346, 0.0
    %vm2411 = vcmp.ge.f32.partialorder %v2347, 0.0
    %vm2412 = vcmp.ge.f32.partialorder %v2348, 0.0
    %vm2413 = vcmp.ge.f32.partialorder %v2349, 0.0
    %vm2414 = vcmp.ge.f32.partialorder %v2350, 0.0
    %vm2415 = vcmp.ge.f32.partialorder %v2351, 0.0
    %vm2416 = vcmp.ge.f32.partialorder %v2352, 0.0
    %vm2417 = vcmp.ge.f32.partialorder %v2353, 0.0
    %vm2418 = vcmp.ge.f32.partialorder %v2354, 0.0
    %vm2419 = vcmp.ge.f32.partialorder %v2355, 0.0
    %vm2420 = vcmp.ge.f32.partialorder %v2356, 0.0
    %vm2421 = vcmp.ge.f32.partialorder %v2357, 0.0
    %vm2422 = vcmp.ge.f32.partialorder %v2358, 0.0
    %vm2423 = vcmp.ge.f32.partialorder %v2359, 0.0
    %vm2424 = vcmp.ge.f32.partialorder %v2360, 0.0
    %vm2425 = vcmp.ge.f32.partialorder %v2361, 0.0
    %vm2426 = vcmp.ge.f32.partialorder %v2362, 0.0
    %vm2427 = vcmp.ge.f32.partialorder %v2363, 0.0
    %vm2428 = vcmp.ge.f32.partialorder %v2364, 0.0
    %vm2429 = vcmp.ge.f32.partialorder %v2365, 0.0
    %vm2430 = vcmp.ge.f32.partialorder %v2366, 0.0
    %v2431 = vmul.f32 %v2303, 0.1
    %v2432 = vmul.f32 %v2304, 0.1
    %v2433 = vmul.f32 %v2305, 0.1
    %v2434 = vmul.f32 %v2306, 0.1
    %v2435 = vmul.f32 %v2307, 0.1
    %v2436 = vmul.f32 %v2308, 0.1
    %v2437 = vmul.f32 %v2309, 0.1
    %v2438 = vmul.f32 %v2310, 0.1
    %v2439 = vmul.f32 %v2311, 0.1
    %v2440 = vmul.f32 %v2312, 0.1
    %v2441 = vmul.f32 %v2313, 0.1
    %v2442 = vmul.f32 %v2314, 0.1
    %v2443 = vmul.f32 %v2315, 0.1
    %v2444 = vmul.f32 %v2316, 0.1
    %v2445 = vmul.f32 %v2317, 0.1
    %v2446 = vmul.f32 %v2318, 0.1
    %v2447 = vmul.f32 %v2319, 0.1
    %v2448 = vmul.f32 %v2320, 0.1
    %v2449 = vmul.f32 %v2321, 0.1
    %v2450 = vmul.f32 %v2322, 0.1
    %v2451 = vmul.f32 %v2323, 0.1
    %v2452 = vmul.f32 %v2324, 0.1
    %v2453 = vmul.f32 %v2325, 0.1
    %v2454 = vmul.f32 %v2326, 0.1
    %v2455 = vmul.f32 %v2327, 0.1
    %v2456 = vmul.f32 %v2328, 0.1
    %v2457 = vmul.f32 %v2329, 0.1
    %v2458 = vmul.f32 %v2330, 0.1
    %v2459 = vmul.f32 %v2331, 0.1
    %v2460 = vmul.f32 %v2332, 0.1
    %v2461 = vmul.f32 %v2333, 0.1
    %v2462 = vmul.f32 %v2334, 0.1
    %v2463 = vmul.f32 %v2335, 0.1
    %v2464 = vmul.f32 %v2336, 0.1
    %v2465 = vmul.f32 %v2337, 0.1
    %v2466 = vmul.f32 %v2338, 0.1
    %v2467 = vmul.f32 %v2339, 0.1
    %v2468 = vmul.f32 %v2340, 0.1
    %v2469 = vmul.f32 %v2341, 0.1
    %v2470 = vmul.f32 %v2342, 0.1
    %v2471 = vmul.f32 %v2343, 0.1
    %v2472 = vmul.f32 %v2344, 0.1
    %v2473 = vmul.f32 %v2345, 0.1
    %v2474 = vmul.f32 %v2346, 0.1
    %v2475 = vmul.f32 %v2347, 0.1
    %v2476 = vmul.f32 %v2348, 0.1
    %v2477 = vmul.f32 %v2349, 0.1
    %v2478 = vmul.f32 %v2350, 0.1
    %v2479 = vmul.f32 %v2351, 0.1
    %v2480 = vmul.f32 %v2352, 0.1
    %v2481 = vmul.f32 %v2353, 0.1
    %v2482 = vmul.f32 %v2354, 0.1
    %v2483 = vmul.f32 %v2355, 0.1
    %v2484 = vmul.f32 %v2356, 0.1
    %v2485 = vmul.f32 %v2357, 0.1
    %v2486 = vmul.f32 %v2358, 0.1
    %v2487 = vmul.f32 %v2359, 0.1
    %v2488 = vmul.f32 %v2360, 0.1
    %v2489 = vmul.f32 %v2361, 0.1
    %v2490 = vmul.f32 %v2362, 0.1
    %v2491 = vmul.f32 %v2363, 0.1
    %v2492 = vmul.f32 %v2364, 0.1
    %v2493 = vmul.f32 %v2365, 0.1
    %v2494 = vmul.f32 %v2366, 0.1
    %v2495 = vsel %vm2367, %v2303, %v2431
    %v2496 = vsel %vm2368, %v2304, %v2432
    %v2497 = vsel %vm2369, %v2305, %v2433
    %v2498 = vsel %vm2370, %v2306, %v2434
    %v2499 = vsel %vm2371, %v2307, %v2435
    %v2500 = vsel %vm2372, %v2308, %v2436
    %v2501 = vsel %vm2373, %v2309, %v2437
    %v2502 = vsel %vm2374, %v2310, %v2438
    %v2503 = vsel %vm2375, %v2311, %v2439
    %v2504 = vsel %vm2376, %v2312, %v2440
    %v2505 = vsel %vm2377, %v2313, %v2441
    %v2506 = vsel %vm2378, %v2314, %v2442
    %v2507 = vsel %vm2379, %v2315, %v2443
    %v2508 = vsel %vm2380, %v2316, %v2444
    %v2509 = vsel %vm2381, %v2317, %v2445
    %v2510 = vsel %vm2382, %v2318, %v2446
    %v2511 = vsel %vm2383, %v2319, %v2447
    %v2512 = vsel %vm2384, %v2320, %v2448
    %v2513 = vsel %vm2385, %v2321, %v2449
    %v2514 = vsel %vm2386, %v2322, %v2450
    %v2515 = vsel %vm2387, %v2323, %v2451
    %v2516 = vsel %vm2388, %v2324, %v2452
    %v2517 = vsel %vm2389, %v2325, %v2453
    %v2518 = vsel %vm2390, %v2326, %v2454
    %v2519 = vsel %vm2391, %v2327, %v2455
    %v2520 = vsel %vm2392, %v2328, %v2456
    %v2521 = vsel %vm2393, %v2329, %v2457
    %v2522 = vsel %vm2394, %v2330, %v2458
    %v2523 = vsel %vm2395, %v2331, %v2459
    %v2524 = vsel %vm2396, %v2332, %v2460
    %v2525 = vsel %vm2397, %v2333, %v2461
    %v2526 = vsel %vm2398, %v2334, %v2462
    %v2527 = vsel %vm2399, %v2335, %v2463
    %v2528 = vsel %vm2400, %v2336, %v2464
    %v2529 = vsel %vm2401, %v2337, %v2465
    %v2530 = vsel %vm2402, %v2338, %v2466
    %v2531 = vsel %vm2403, %v2339, %v2467
    %v2532 = vsel %vm2404, %v2340, %v2468
    %v2533 = vsel %vm2405, %v2341, %v2469
    %v2534 = vsel %vm2406, %v2342, %v2470
    %v2535 = vsel %vm2407, %v2343, %v2471
    %v2536 = vsel %vm2408, %v2344, %v2472
    %v2537 = vsel %vm2409, %v2345, %v2473
    %v2538 = vsel %vm2410, %v2346, %v2474
    %v2539 = vsel %vm2411, %v2347, %v2475
    %v2540 = vsel %vm2412, %v2348, %v2476
    %v2541 = vsel %vm2413, %v2349, %v2477
    %v2542 = vsel %vm2414, %v2350, %v2478
    %v2543 = vsel %vm2415, %v2351, %v2479
    %v2544 = vsel %vm2416, %v2352, %v2480
    %v2545 = vsel %vm2417, %v2353, %v2481
    %v2546 = vsel %vm2418, %v2354, %v2482
    %v2547 = vsel %vm2419, %v2355, %v2483
    %v2548 = vsel %vm2420, %v2356, %v2484
    %v2549 = vsel %vm2421, %v2357, %v2485
    %v2550 = vsel %vm2422, %v2358, %v2486
    %v2551 = vsel %vm2423, %v2359, %v2487
    %v2552 = vsel %vm2424, %v2360, %v2488
    %v2553 = vsel %vm2425, %v2361, %v2489
    %v2554 = vsel %vm2426, %v2362, %v2490
    %v2555 = vsel %vm2427, %v2363, %v2491
    %v2556 = vsel %vm2428, %v2364, %v2492
    %v2557 = vsel %vm2429, %v2365, %v2493
    %v2558 = vsel %vm2430, %v2366, %v2494
    %v2559 = vmax.f32 %v2495, %v2497
    %v2560 = vmax.f32 %v2496, %v2498
    %v2561 = vmax.f32 %v2499, %v2501
    %v2562 = vmax.f32 %v2500, %v2502
    %v2563 = vmax.f32 %v2503, %v2505
    %v2564 = vmax.f32 %v2504, %v2506
    %v2565 = vmax.f32 %v2507, %v2509
    %v2566 = vmax.f32 %v2508, %v2510
    %v2567 = vmax.f32 %v2511, %v2513
    %v2568 = vmax.f32 %v2512, %v2514
    %v2569 = vmax.f32 %v2515, %v2517
    %v2570 = vmax.f32 %v2516, %v2518
    %v2571 = vmax.f32 %v2519, %v2521
    %v2572 = vmax.f32 %v2520, %v2522
    %v2573 = vmax.f32 %v2523, %v2525
    %v2574 = vmax.f32 %v2524, %v2526
    %v2575 = vmax.f32 %v2527, %v2529
    %v2576 = vmax.f32 %v2528, %v2530
    %v2577 = vmax.f32 %v2531, %v2533
    %v2578 = vmax.f32 %v2532, %v2534
    %v2579 = vmax.f32 %v2535, %v2537
    %v2580 = vmax.f32 %v2536, %v2538
    %v2581 = vmax.f32 %v2539, %v2541
    %v2582 = vmax.f32 %v2540, %v2542
    %v2583 = vmax.f32 %v2543, %v2545
    %v2584 = vmax.f32 %v2544, %v2546
    %v2585 = vmax.f32 %v2547, %v2549
    %v2586 = vmax.f32 %v2548, %v2550
    %v2587 = vmax.f32 %v2551, %v2553
    %v2588 = vmax.f32 %v2552, %v2554
    %v2589 = vmax.f32 %v2555, %v2557
    %v2590 = vmax.f32 %v2556, %v2558
    %v2623 = vcombine.high %v2559, %v2559
    %v2625 = vunpack.c.l.s4 1983009808
    %v2626 = vunpack.c.0.s8 %v2625
    %v2627 = vlaneseq
    %v2628 = vshrl.u32 %v2627, 7
    %v2629 = vsub.s32 %v2626, %v2628
    %v2630 = vrot.slane %v2559, %v2629
    %v2632 = vunpack.c.l.s4 1983009808
    %v2633 = vunpack.c.0.s8 %v2632
    %v2634 = vlaneseq
    %v2635 = vshrl.u32 %v2634, 7
    %v2636 = vsub.s32 %v2633, %v2635
    %v2637 = vrot.slane %v2623, %v2636
    %v2638 = vcombine.high %v2630, %v2630
    %v2639 = vcombine.high %v2637, %v2637
    %v2640 = vcombine.high %v2560, %v2560
    %v2642 = vunpack.c.l.s4 1983009808
    %v2643 = vunpack.c.0.s8 %v2642
    %v2644 = vlaneseq
    %v2645 = vshrl.u32 %v2644, 7
    %v2646 = vsub.s32 %v2643, %v2645
    %v2647 = vrot.slane %v2560, %v2646
    %v2649 = vunpack.c.l.s4 1983009808
    %v2650 = vunpack.c.0.s8 %v2649
    %v2651 = vlaneseq
    %v2652 = vshrl.u32 %v2651, 7
    %v2653 = vsub.s32 %v2650, %v2652
    %v2654 = vrot.slane %v2640, %v2653
    %v2655 = vcombine.high %v2647, %v2647
    %v2656 = vcombine.high %v2654, %v2654
    %v2657 = vcombine.high %v2561, %v2561
    %v2659 = vunpack.c.l.s4 1983009808
    %v2660 = vunpack.c.0.s8 %v2659
    %v2661 = vlaneseq
    %v2662 = vshrl.u32 %v2661, 7
    %v2663 = vsub.s32 %v2660, %v2662
    %v2664 = vrot.slane %v2561, %v2663
    %v2666 = vunpack.c.l.s4 1983009808
    %v2667 = vunpack.c.0.s8 %v2666
    %v2668 = vlaneseq
    %v2669 = vshrl.u32 %v2668, 7
    %v2670 = vsub.s32 %v2667, %v2669
    %v2671 = vrot.slane %v2657, %v2670
    %v2672 = vcombine.high %v2664, %v2664
    %v2673 = vcombine.high %v2671, %v2671
    %v2674 = vcombine.high %v2562, %v2562
    %v2676 = vunpack.c.l.s4 1983009808
    %v2677 = vunpack.c.0.s8 %v2676
    %v2678 = vlaneseq
    %v2679 = vshrl.u32 %v2678, 7
    %v2680 = vsub.s32 %v2677, %v2679
    %v2681 = vrot.slane %v2562, %v2680
    %v2683 = vunpack.c.l.s4 1983009808
    %v2684 = vunpack.c.0.s8 %v2683
    %v2685 = vlaneseq
    %v2686 = vshrl.u32 %v2685, 7
    %v2687 = vsub.s32 %v2684, %v2686
    %v2688 = vrot.slane %v2674, %v2687
    %v2689 = vcombine.high %v2681, %v2681
    %v2690 = vcombine.high %v2688, %v2688
    %v2691 = vcombine.high %v2563, %v2563
    %v2693 = vunpack.c.l.s4 1983009808
    %v2694 = vunpack.c.0.s8 %v2693
    %v2695 = vlaneseq
    %v2696 = vshrl.u32 %v2695, 7
    %v2697 = vsub.s32 %v2694, %v2696
    %v2698 = vrot.slane %v2563, %v2697
    %v2700 = vunpack.c.l.s4 1983009808
    %v2701 = vunpack.c.0.s8 %v2700
    %v2702 = vlaneseq
    %v2703 = vshrl.u32 %v2702, 7
    %v2704 = vsub.s32 %v2701, %v2703
    %v2705 = vrot.slane %v2691, %v2704
    %v2706 = vcombine.high %v2698, %v2698
    %v2707 = vcombine.high %v2705, %v2705
    %v2708 = vcombine.high %v2564, %v2564
    %v2710 = vunpack.c.l.s4 1983009808
    %v2711 = vunpack.c.0.s8 %v2710
    %v2712 = vlaneseq
    %v2713 = vshrl.u32 %v2712, 7
    %v2714 = vsub.s32 %v2711, %v2713
    %v2715 = vrot.slane %v2564, %v2714
    %v2717 = vunpack.c.l.s4 1983009808
    %v2718 = vunpack.c.0.s8 %v2717
    %v2719 = vlaneseq
    %v2720 = vshrl.u32 %v2719, 7
    %v2721 = vsub.s32 %v2718, %v2720
    %v2722 = vrot.slane %v2708, %v2721
    %v2723 = vcombine.high %v2715, %v2715
    %v2724 = vcombine.high %v2722, %v2722
    %v2725 = vcombine.high %v2565, %v2565
    %v2727 = vunpack.c.l.s4 1983009808
    %v2728 = vunpack.c.0.s8 %v2727
    %v2729 = vlaneseq
    %v2730 = vshrl.u32 %v2729, 7
    %v2731 = vsub.s32 %v2728, %v2730
    %v2732 = vrot.slane %v2565, %v2731
    %v2734 = vunpack.c.l.s4 1983009808
    %v2735 = vunpack.c.0.s8 %v2734
    %v2736 = vlaneseq
    %v2737 = vshrl.u32 %v2736, 7
    %v2738 = vsub.s32 %v2735, %v2737
    %v2739 = vrot.slane %v2725, %v2738
    %v2740 = vcombine.high %v2732, %v2732
    %v2741 = vcombine.high %v2739, %v2739
    %v2742 = vcombine.high %v2566, %v2566
    %v2744 = vunpack.c.l.s4 1983009808
    %v2745 = vunpack.c.0.s8 %v2744
    %v2746 = vlaneseq
    %v2747 = vshrl.u32 %v2746, 7
    %v2748 = vsub.s32 %v2745, %v2747
    %v2749 = vrot.slane %v2566, %v2748
    %v2751 = vunpack.c.l.s4 1983009808
    %v2752 = vunpack.c.0.s8 %v2751
    %v2753 = vlaneseq
    %v2754 = vshrl.u32 %v2753, 7
    %v2755 = vsub.s32 %v2752, %v2754
    %v2756 = vrot.slane %v2742, %v2755
    %v2757 = vcombine.high %v2749, %v2749
    %v2758 = vcombine.high %v2756, %v2756
    %v2759 = vcombine.high %v2567, %v2567
    %v2761 = vunpack.c.l.s4 1983009808
    %v2762 = vunpack.c.0.s8 %v2761
    %v2763 = vlaneseq
    %v2764 = vshrl.u32 %v2763, 7
    %v2765 = vsub.s32 %v2762, %v2764
    %v2766 = vrot.slane %v2567, %v2765
    %v2768 = vunpack.c.l.s4 1983009808
    %v2769 = vunpack.c.0.s8 %v2768
    %v2770 = vlaneseq
    %v2771 = vshrl.u32 %v2770, 7
    %v2772 = vsub.s32 %v2769, %v2771
    %v2773 = vrot.slane %v2759, %v2772
    %v2774 = vcombine.high %v2766, %v2766
    %v2775 = vcombine.high %v2773, %v2773
    %v2776 = vcombine.high %v2568, %v2568
    %v2778 = vunpack.c.l.s4 1983009808
    %v2779 = vunpack.c.0.s8 %v2778
    %v2780 = vlaneseq
    %v2781 = vshrl.u32 %v2780, 7
    %v2782 = vsub.s32 %v2779, %v2781
    %v2783 = vrot.slane %v2568, %v2782
    %v2785 = vunpack.c.l.s4 1983009808
    %v2786 = vunpack.c.0.s8 %v2785
    %v2787 = vlaneseq
    %v2788 = vshrl.u32 %v2787, 7
    %v2789 = vsub.s32 %v2786, %v2788
    %v2790 = vrot.slane %v2776, %v2789
    %v2791 = vcombine.high %v2783, %v2783
    %v2792 = vcombine.high %v2790, %v2790
    %v2793 = vcombine.high %v2569, %v2569
    %v2795 = vunpack.c.l.s4 1983009808
    %v2796 = vunpack.c.0.s8 %v2795
    %v2797 = vlaneseq
    %v2798 = vshrl.u32 %v2797, 7
    %v2799 = vsub.s32 %v2796, %v2798
    %v2800 = vrot.slane %v2569, %v2799
    %v2802 = vunpack.c.l.s4 1983009808
    %v2803 = vunpack.c.0.s8 %v2802
    %v2804 = vlaneseq
    %v2805 = vshrl.u32 %v2804, 7
    %v2806 = vsub.s32 %v2803, %v2805
    %v2807 = vrot.slane %v2793, %v2806
    %v2808 = vcombine.high %v2800, %v2800
    %v2809 = vcombine.high %v2807, %v2807
    %v2810 = vcombine.high %v2570, %v2570
    %v2812 = vunpack.c.l.s4 1983009808
    %v2813 = vunpack.c.0.s8 %v2812
    %v2814 = vlaneseq
    %v2815 = vshrl.u32 %v2814, 7
    %v2816 = vsub.s32 %v2813, %v2815
    %v2817 = vrot.slane %v2570, %v2816
    %v2819 = vunpack.c.l.s4 1983009808
    %v2820 = vunpack.c.0.s8 %v2819
    %v2821 = vlaneseq
    %v2822 = vshrl.u32 %v2821, 7
    %v2823 = vsub.s32 %v2820, %v2822
    %v2824 = vrot.slane %v2810, %v2823
    %v2825 = vcombine.high %v2817, %v2817
    %v2826 = vcombine.high %v2824, %v2824
    %v2827 = vcombine.high %v2571, %v2571
    %v2829 = vunpack.c.l.s4 1983009808
    %v2830 = vunpack.c.0.s8 %v2829
    %v2831 = vlaneseq
    %v2832 = vshrl.u32 %v2831, 7
    %v2833 = vsub.s32 %v2830, %v2832
    %v2834 = vrot.slane %v2571, %v2833
    %v2836 = vunpack.c.l.s4 1983009808
    %v2837 = vunpack.c.0.s8 %v2836
    %v2838 = vlaneseq
    %v2839 = vshrl.u32 %v2838, 7
    %v2840 = vsub.s32 %v2837, %v2839
    %v2841 = vrot.slane %v2827, %v2840
    %v2842 = vcombine.high %v2834, %v2834
    %v2843 = vcombine.high %v2841, %v2841
    %v2844 = vcombine.high %v2572, %v2572
    %v2846 = vunpack.c.l.s4 1983009808
    %v2847 = vunpack.c.0.s8 %v2846
    %v2848 = vlaneseq
    %v2849 = vshrl.u32 %v2848, 7
    %v2850 = vsub.s32 %v2847, %v2849
    %v2851 = vrot.slane %v2572, %v2850
    %v2853 = vunpack.c.l.s4 1983009808
    %v2854 = vunpack.c.0.s8 %v2853
    %v2855 = vlaneseq
    %v2856 = vshrl.u32 %v2855, 7
    %v2857 = vsub.s32 %v2854, %v2856
    %v2858 = vrot.slane %v2844, %v2857
    %v2859 = vcombine.high %v2851, %v2851
    %v2860 = vcombine.high %v2858, %v2858
    %v2861 = vcombine.high %v2573, %v2573
    %v2863 = vunpack.c.l.s4 1983009808
    %v2864 = vunpack.c.0.s8 %v2863
    %v2865 = vlaneseq
    %v2866 = vshrl.u32 %v2865, 7
    %v2867 = vsub.s32 %v2864, %v2866
    %v2868 = vrot.slane %v2573, %v2867
    %v2870 = vunpack.c.l.s4 1983009808
    %v2871 = vunpack.c.0.s8 %v2870
    %v2872 = vlaneseq
    %v2873 = vshrl.u32 %v2872, 7
    %v2874 = vsub.s32 %v2871, %v2873
    %v2875 = vrot.slane %v2861, %v2874
    %v2876 = vcombine.high %v2868, %v2868
    %v2877 = vcombine.high %v2875, %v2875
    %v2878 = vcombine.high %v2574, %v2574
    %v2880 = vunpack.c.l.s4 1983009808
    %v2881 = vunpack.c.0.s8 %v2880
    %v2882 = vlaneseq
    %v2883 = vshrl.u32 %v2882, 7
    %v2884 = vsub.s32 %v2881, %v2883
    %v2885 = vrot.slane %v2574, %v2884
    %v2887 = vunpack.c.l.s4 1983009808
    %v2888 = vunpack.c.0.s8 %v2887
    %v2889 = vlaneseq
    %v2890 = vshrl.u32 %v2889, 7
    %v2891 = vsub.s32 %v2888, %v2890
    %v2892 = vrot.slane %v2878, %v2891
    %v2893 = vcombine.high %v2885, %v2885
    %v2894 = vcombine.high %v2892, %v2892
    %v2895 = vcombine.high %v2575, %v2575
    %v2897 = vunpack.c.l.s4 1983009808
    %v2898 = vunpack.c.0.s8 %v2897
    %v2899 = vlaneseq
    %v2900 = vshrl.u32 %v2899, 7
    %v2901 = vsub.s32 %v2898, %v2900
    %v2902 = vrot.slane %v2575, %v2901
    %v2904 = vunpack.c.l.s4 1983009808
    %v2905 = vunpack.c.0.s8 %v2904
    %v2906 = vlaneseq
    %v2907 = vshrl.u32 %v2906, 7
    %v2908 = vsub.s32 %v2905, %v2907
    %v2909 = vrot.slane %v2895, %v2908
    %v2910 = vcombine.high %v2902, %v2902
    %v2911 = vcombine.high %v2909, %v2909
    %v2912 = vcombine.high %v2576, %v2576
    %v2914 = vunpack.c.l.s4 1983009808
    %v2915 = vunpack.c.0.s8 %v2914
    %v2916 = vlaneseq
    %v2917 = vshrl.u32 %v2916, 7
    %v2918 = vsub.s32 %v2915, %v2917
    %v2919 = vrot.slane %v2576, %v2918
    %v2921 = vunpack.c.l.s4 1983009808
    %v2922 = vunpack.c.0.s8 %v2921
    %v2923 = vlaneseq
    %v2924 = vshrl.u32 %v2923, 7
    %v2925 = vsub.s32 %v2922, %v2924
    %v2926 = vrot.slane %v2912, %v2925
    %v2927 = vcombine.high %v2919, %v2919
    %v2928 = vcombine.high %v2926, %v2926
    %v2929 = vcombine.high %v2577, %v2577
    %v2931 = vunpack.c.l.s4 1983009808
    %v2932 = vunpack.c.0.s8 %v2931
    %v2933 = vlaneseq
    %v2934 = vshrl.u32 %v2933, 7
    %v2935 = vsub.s32 %v2932, %v2934
    %v2936 = vrot.slane %v2577, %v2935
    %v2938 = vunpack.c.l.s4 1983009808
    %v2939 = vunpack.c.0.s8 %v2938
    %v2940 = vlaneseq
    %v2941 = vshrl.u32 %v2940, 7
    %v2942 = vsub.s32 %v2939, %v2941
    %v2943 = vrot.slane %v2929, %v2942
    %v2944 = vcombine.high %v2936, %v2936
    %v2945 = vcombine.high %v2943, %v2943
    %v2946 = vcombine.high %v2578, %v2578
    %v2948 = vunpack.c.l.s4 1983009808
    %v2949 = vunpack.c.0.s8 %v2948
    %v2950 = vlaneseq
    %v2951 = vshrl.u32 %v2950, 7
    %v2952 = vsub.s32 %v2949, %v2951
    %v2953 = vrot.slane %v2578, %v2952
    %v2955 = vunpack.c.l.s4 1983009808
    %v2956 = vunpack.c.0.s8 %v2955
    %v2957 = vlaneseq
    %v2958 = vshrl.u32 %v2957, 7
    %v2959 = vsub.s32 %v2956, %v2958
    %v2960 = vrot.slane %v2946, %v2959
    %v2961 = vcombine.high %v2953, %v2953
    %v2962 = vcombine.high %v2960, %v2960
    %v2963 = vcombine.high %v2579, %v2579
    %v2965 = vunpack.c.l.s4 1983009808
    %v2966 = vunpack.c.0.s8 %v2965
    %v2967 = vlaneseq
    %v2968 = vshrl.u32 %v2967, 7
    %v2969 = vsub.s32 %v2966, %v2968
    %v2970 = vrot.slane %v2579, %v2969
    %v2972 = vunpack.c.l.s4 1983009808
    %v2973 = vunpack.c.0.s8 %v2972
    %v2974 = vlaneseq
    %v2975 = vshrl.u32 %v2974, 7
    %v2976 = vsub.s32 %v2973, %v2975
    %v2977 = vrot.slane %v2963, %v2976
    %v2978 = vcombine.high %v2970, %v2970
    %v2979 = vcombine.high %v2977, %v2977
    %v2980 = vcombine.high %v2580, %v2580
    %v2982 = vunpack.c.l.s4 1983009808
    %v2983 = vunpack.c.0.s8 %v2982
    %v2984 = vlaneseq
    %v2985 = vshrl.u32 %v2984, 7
    %v2986 = vsub.s32 %v2983, %v2985
    %v2987 = vrot.slane %v2580, %v2986
    %v2989 = vunpack.c.l.s4 1983009808
    %v2990 = vunpack.c.0.s8 %v2989
    %v2991 = vlaneseq
    %v2992 = vshrl.u32 %v2991, 7
    %v2993 = vsub.s32 %v2990, %v2992
    %v2994 = vrot.slane %v2980, %v2993
    %v2995 = vcombine.high %v2987, %v2987
    %v2996 = vcombine.high %v2994, %v2994
    %v2997 = vcombine.high %v2581, %v2581
    %v2999 = vunpack.c.l.s4 1983009808
    %v3000 = vunpack.c.0.s8 %v2999
    %v3001 = vlaneseq
    %v3002 = vshrl.u32 %v3001, 7
    %v3003 = vsub.s32 %v3000, %v3002
    %v3004 = vrot.slane %v2581, %v3003
    %v3006 = vunpack.c.l.s4 1983009808
    %v3007 = vunpack.c.0.s8 %v3006
    %v3008 = vlaneseq
    %v3009 = vshrl.u32 %v3008, 7
    %v3010 = vsub.s32 %v3007, %v3009
    %v3011 = vrot.slane %v2997, %v3010
    %v3012 = vcombine.high %v3004, %v3004
    %v3013 = vcombine.high %v3011, %v3011
    %v3014 = vcombine.high %v2582, %v2582
    %v3016 = vunpack.c.l.s4 1983009808
    %v3017 = vunpack.c.0.s8 %v3016
    %v3018 = vlaneseq
    %v3019 = vshrl.u32 %v3018, 7
    %v3020 = vsub.s32 %v3017, %v3019
    %v3021 = vrot.slane %v2582, %v3020
    %v3023 = vunpack.c.l.s4 1983009808
    %v3024 = vunpack.c.0.s8 %v3023
    %v3025 = vlaneseq
    %v3026 = vshrl.u32 %v3025, 7
    %v3027 = vsub.s32 %v3024, %v3026
    %v3028 = vrot.slane %v3014, %v3027
    %v3029 = vcombine.high %v3021, %v3021
    %v3030 = vcombine.high %v3028, %v3028
    %v3031 = vcombine.high %v2583, %v2583
    %v3033 = vunpack.c.l.s4 1983009808
    %v3034 = vunpack.c.0.s8 %v3033
    %v3035 = vlaneseq
    %v3036 = vshrl.u32 %v3035, 7
    %v3037 = vsub.s32 %v3034, %v3036
    %v3038 = vrot.slane %v2583, %v3037
    %v3040 = vunpack.c.l.s4 1983009808
    %v3041 = vunpack.c.0.s8 %v3040
    %v3042 = vlaneseq
    %v3043 = vshrl.u32 %v3042, 7
    %v3044 = vsub.s32 %v3041, %v3043
    %v3045 = vrot.slane %v3031, %v3044
    %v3046 = vcombine.high %v3038, %v3038
    %v3047 = vcombine.high %v3045, %v3045
    %v3048 = vcombine.high %v2584, %v2584
    %v3050 = vunpack.c.l.s4 1983009808
    %v3051 = vunpack.c.0.s8 %v3050
    %v3052 = vlaneseq
    %v3053 = vshrl.u32 %v3052, 7
    %v3054 = vsub.s32 %v3051, %v3053
    %v3055 = vrot.slane %v2584, %v3054
    %v3057 = vunpack.c.l.s4 1983009808
    %v3058 = vunpack.c.0.s8 %v3057
    %v3059 = vlaneseq
    %v3060 = vshrl.u32 %v3059, 7
    %v3061 = vsub.s32 %v3058, %v3060
    %v3062 = vrot.slane %v3048, %v3061
    %v3063 = vcombine.high %v3055, %v3055
    %v3064 = vcombine.high %v3062, %v3062
    %v3065 = vcombine.high %v2585, %v2585
    %v3067 = vunpack.c.l.s4 1983009808
    %v3068 = vunpack.c.0.s8 %v3067
    %v3069 = vlaneseq
    %v3070 = vshrl.u32 %v3069, 7
    %v3071 = vsub.s32 %v3068, %v3070
    %v3072 = vrot.slane %v2585, %v3071
    %v3074 = vunpack.c.l.s4 1983009808
    %v3075 = vunpack.c.0.s8 %v3074
    %v3076 = vlaneseq
    %v3077 = vshrl.u32 %v3076, 7
    %v3078 = vsub.s32 %v3075, %v3077
    %v3079 = vrot.slane %v3065, %v3078
    %v3080 = vcombine.high %v3072, %v3072
    %v3081 = vcombine.high %v3079, %v3079
    %v3082 = vcombine.high %v2586, %v2586
    %v3084 = vunpack.c.l.s4 1983009808
    %v3085 = vunpack.c.0.s8 %v3084
    %v3086 = vlaneseq
    %v3087 = vshrl.u32 %v3086, 7
    %v3088 = vsub.s32 %v3085, %v3087
    %v3089 = vrot.slane %v2586, %v3088
    %v3091 = vunpack.c.l.s4 1983009808
    %v3092 = vunpack.c.0.s8 %v3091
    %v3093 = vlaneseq
    %v3094 = vshrl.u32 %v3093, 7
    %v3095 = vsub.s32 %v3092, %v3094
    %v3096 = vrot.slane %v3082, %v3095
    %v3097 = vcombine.high %v3089, %v3089
    %v3098 = vcombine.high %v3096, %v3096
    %v3099 = vcombine.high %v2587, %v2587
    %v3101 = vunpack.c.l.s4 1983009808
    %v3102 = vunpack.c.0.s8 %v3101
    %v3103 = vlaneseq
    %v3104 = vshrl.u32 %v3103, 7
    %v3105 = vsub.s32 %v3102, %v3104
    %v3106 = vrot.slane %v2587, %v3105
    %v3108 = vunpack.c.l.s4 1983009808
    %v3109 = vunpack.c.0.s8 %v3108
    %v3110 = vlaneseq
    %v3111 = vshrl.u32 %v3110, 7
    %v3112 = vsub.s32 %v3109, %v3111
    %v3113 = vrot.slane %v3099, %v3112
    %v3114 = vcombine.high %v3106, %v3106
    %v3115 = vcombine.high %v3113, %v3113
    %v3116 = vcombine.high %v2588, %v2588
    %v3118 = vunpack.c.l.s4 1983009808
    %v3119 = vunpack.c.0.s8 %v3118
    %v3120 = vlaneseq
    %v3121 = vshrl.u32 %v3120, 7
    %v3122 = vsub.s32 %v3119, %v3121
    %v3123 = vrot.slane %v2588, %v3122
    %v3125 = vunpack.c.l.s4 1983009808
    %v3126 = vunpack.c.0.s8 %v3125
    %v3127 = vlaneseq
    %v3128 = vshrl.u32 %v3127, 7
    %v3129 = vsub.s32 %v3126, %v3128
    %v3130 = vrot.slane %v3116, %v3129
    %v3131 = vcombine.high %v3123, %v3123
    %v3132 = vcombine.high %v3130, %v3130
    %v3133 = vcombine.high %v2589, %v2589
    %v3135 = vunpack.c.l.s4 1983009808
    %v3136 = vunpack.c.0.s8 %v3135
    %v3137 = vlaneseq
    %v3138 = vshrl.u32 %v3137, 7
    %v3139 = vsub.s32 %v3136, %v3138
    %v3140 = vrot.slane %v2589, %v3139
    %v3142 = vunpack.c.l.s4 1983009808
    %v3143 = vunpack.c.0.s8 %v3142
    %v3144 = vlaneseq
    %v3145 = vshrl.u32 %v3144, 7
    %v3146 = vsub.s32 %v3143, %v3145
    %v3147 = vrot.slane %v3133, %v3146
    %v3148 = vcombine.high %v3140, %v3140
    %v3149 = vcombine.high %v3147, %v3147
    %v3150 = vcombine.high %v2590, %v2590
    %v3152 = vunpack.c.l.s4 1983009808
    %v3153 = vunpack.c.0.s8 %v3152
    %v3154 = vlaneseq
    %v3155 = vshrl.u32 %v3154, 7
    %v3156 = vsub.s32 %v3153, %v3155
    %v3157 = vrot.slane %v2590, %v3156
    %v3159 = vunpack.c.l.s4 1983009808
    %v3160 = vunpack.c.0.s8 %v3159
    %v3161 = vlaneseq
    %v3162 = vshrl.u32 %v3161, 7
    %v3163 = vsub.s32 %v3160, %v3162
    %v3164 = vrot.slane %v3150, %v3163
    %v3165 = vcombine.high %v3157, %v3157
    %v3166 = vcombine.high %v3164, %v3164
    %vm3295 = vcmask 254976
    %v3296 = vsel %vm3295, %v2630, -inf
    %v3297 = vrot.slane %v3296, 4
    %v3298 = vmax.f32 %v3296, %v3297
    %v3299 = vrot.slane %v3298, 2
    %v3300 = vmax.f32 %v3298, %v3299
    %v3301 = vrot.slane %v3300, 1
    %v3302 = vmax.f32 %v3300, %v3301
    %v3303 = vsel %vm3295, %v2638, -inf
    %v3304 = vrot.slane %v3303, 4
    %v3305 = vmax.f32 %v3303, %v3304
    %v3306 = vrot.slane %v3305, 2
    %v3307 = vmax.f32 %v3305, %v3306
    %v3308 = vrot.slane %v3307, 1
    %v3309 = vmax.f32 %v3307, %v3308
    %v3310 = vsel %vm3295, %v2637, -inf
    %v3311 = vrot.slane %v3310, 4
    %v3312 = vmax.f32 %v3310, %v3311
    %v3313 = vrot.slane %v3312, 2
    %v3314 = vmax.f32 %v3312, %v3313
    %v3315 = vrot.slane %v3314, 1
    %v3316 = vmax.f32 %v3314, %v3315
    %v3317 = vsel %vm3295, %v2639, -inf
    %v3318 = vrot.slane %v3317, 4
    %v3319 = vmax.f32 %v3317, %v3318
    %v3320 = vrot.slane %v3319, 2
    %v3321 = vmax.f32 %v3319, %v3320
    %v3322 = vrot.slane %v3321, 1
    %v3323 = vmax.f32 %v3321, %v3322
    %v3324 = vsel %vm3295, %v2647, -inf
    %v3325 = vrot.slane %v3324, 4
    %v3326 = vmax.f32 %v3324, %v3325
    %v3327 = vrot.slane %v3326, 2
    %v3328 = vmax.f32 %v3326, %v3327
    %v3329 = vrot.slane %v3328, 1
    %v3330 = vmax.f32 %v3328, %v3329
    %v3331 = vsel %vm3295, %v2655, -inf
    %v3332 = vrot.slane %v3331, 4
    %v3333 = vmax.f32 %v3331, %v3332
    %v3334 = vrot.slane %v3333, 2
    %v3335 = vmax.f32 %v3333, %v3334
    %v3336 = vrot.slane %v3335, 1
    %v3337 = vmax.f32 %v3335, %v3336
    %v3338 = vsel %vm3295, %v2654, -inf
    %v3339 = vrot.slane %v3338, 4
    %v3340 = vmax.f32 %v3338, %v3339
    %v3341 = vrot.slane %v3340, 2
    %v3342 = vmax.f32 %v3340, %v3341
    %v3343 = vrot.slane %v3342, 1
    %v3344 = vmax.f32 %v3342, %v3343
    %v3345 = vsel %vm3295, %v2656, -inf
    %v3346 = vrot.slane %v3345, 4
    %v3347 = vmax.f32 %v3345, %v3346
    %v3348 = vrot.slane %v3347, 2
    %v3349 = vmax.f32 %v3347, %v3348
    %v3350 = vrot.slane %v3349, 1
    %v3351 = vmax.f32 %v3349, %v3350
    %v3352 = vsel %vm3295, %v2664, -inf
    %v3353 = vrot.slane %v3352, 4
    %v3354 = vmax.f32 %v3352, %v3353
    %v3355 = vrot.slane %v3354, 2
    %v3356 = vmax.f32 %v3354, %v3355
    %v3357 = vrot.slane %v3356, 1
    %v3358 = vmax.f32 %v3356, %v3357
    %v3359 = vsel %vm3295, %v2672, -inf
    %v3360 = vrot.slane %v3359, 4
    %v3361 = vmax.f32 %v3359, %v3360
    %v3362 = vrot.slane %v3361, 2
    %v3363 = vmax.f32 %v3361, %v3362
    %v3364 = vrot.slane %v3363, 1
    %v3365 = vmax.f32 %v3363, %v3364
    %v3366 = vsel %vm3295, %v2671, -inf
    %v3367 = vrot.slane %v3366, 4
    %v3368 = vmax.f32 %v3366, %v3367
    %v3369 = vrot.slane %v3368, 2
    %v3370 = vmax.f32 %v3368, %v3369
    %v3371 = vrot.slane %v3370, 1
    %v3372 = vmax.f32 %v3370, %v3371
    %v3373 = vsel %vm3295, %v2673, -inf
    %v3374 = vrot.slane %v3373, 4
    %v3375 = vmax.f32 %v3373, %v3374
    %v3376 = vrot.slane %v3375, 2
    %v3377 = vmax.f32 %v3375, %v3376
    %v3378 = vrot.slane %v3377, 1
    %v3379 = vmax.f32 %v3377, %v3378
    %v3380 = vsel %vm3295, %v2681, -inf
    %v3381 = vrot.slane %v3380, 4
    %v3382 = vmax.f32 %v3380, %v3381
    %v3383 = vrot.slane %v3382, 2
    %v3384 = vmax.f32 %v3382, %v3383
    %v3385 = vrot.slane %v3384, 1
    %v3386 = vmax.f32 %v3384, %v3385
    %v3387 = vsel %vm3295, %v2689, -inf
    %v3388 = vrot.slane %v3387, 4
    %v3389 = vmax.f32 %v3387, %v3388
    %v3390 = vrot.slane %v3389, 2
    %v3391 = vmax.f32 %v3389, %v3390
    %v3392 = vrot.slane %v3391, 1
    %v3393 = vmax.f32 %v3391, %v3392
    %v3394 = vsel %vm3295, %v2688, -inf
    %v3395 = vrot.slane %v3394, 4
    %v3396 = vmax.f32 %v3394, %v3395
    %v3397 = vrot.slane %v3396, 2
    %v3398 = vmax.f32 %v3396, %v3397
    %v3399 = vrot.slane %v3398, 1
    %v3400 = vmax.f32 %v3398, %v3399
    %v3401 = vsel %vm3295, %v2690, -inf
    %v3402 = vrot.slane %v3401, 4
    %v3403 = vmax.f32 %v3401, %v3402
    %v3404 = vrot.slane %v3403, 2
    %v3405 = vmax.f32 %v3403, %v3404
    %v3406 = vrot.slane %v3405, 1
    %v3407 = vmax.f32 %v3405, %v3406
    %v3408 = vsel %vm3295, %v2698, -inf
    %v3409 = vrot.slane %v3408, 4
    %v3410 = vmax.f32 %v3408, %v3409
    %v3411 = vrot.slane %v3410, 2
    %v3412 = vmax.f32 %v3410, %v3411
    %v3413 = vrot.slane %v3412, 1
    %v3414 = vmax.f32 %v3412, %v3413
    %v3415 = vsel %vm3295, %v2706, -inf
    %v3416 = vrot.slane %v3415, 4
    %v3417 = vmax.f32 %v3415, %v3416
    %v3418 = vrot.slane %v3417, 2
    %v3419 = vmax.f32 %v3417, %v3418
    %v3420 = vrot.slane %v3419, 1
    %v3421 = vmax.f32 %v3419, %v3420
    %v3422 = vsel %vm3295, %v2705, -inf
    %v3423 = vrot.slane %v3422, 4
    %v3424 = vmax.f32 %v3422, %v3423
    %v3425 = vrot.slane %v3424, 2
    %v3426 = vmax.f32 %v3424, %v3425
    %v3427 = vrot.slane %v3426, 1
    %v3428 = vmax.f32 %v3426, %v3427
    %v3429 = vsel %vm3295, %v2707, -inf
    %v3430 = vrot.slane %v3429, 4
    %v3431 = vmax.f32 %v3429, %v3430
    %v3432 = vrot.slane %v3431, 2
    %v3433 = vmax.f32 %v3431, %v3432
    %v3434 = vrot.slane %v3433, 1
    %v3435 = vmax.f32 %v3433, %v3434
    %v3436 = vsel %vm3295, %v2715, -inf
    %v3437 = vrot.slane %v3436, 4
    %v3438 = vmax.f32 %v3436, %v3437
    %v3439 = vrot.slane %v3438, 2
    %v3440 = vmax.f32 %v3438, %v3439
    %v3441 = vrot.slane %v3440, 1
    %v3442 = vmax.f32 %v3440, %v3441
    %v3443 = vsel %vm3295, %v2723, -inf
    %v3444 = vrot.slane %v3443, 4
    %v3445 = vmax.f32 %v3443, %v3444
    %v3446 = vrot.slane %v3445, 2
    %v3447 = vmax.f32 %v3445, %v3446
    %v3448 = vrot.slane %v3447, 1
    %v3449 = vmax.f32 %v3447, %v3448
    %v3450 = vsel %vm3295, %v2722, -inf
    %v3451 = vrot.slane %v3450, 4
    %v3452 = vmax.f32 %v3450, %v3451
    %v3453 = vrot.slane %v3452, 2
    %v3454 = vmax.f32 %v3452, %v3453
    %v3455 = vrot.slane %v3454, 1
    %v3456 = vmax.f32 %v3454, %v3455
    %v3457 = vsel %vm3295, %v2724, -inf
    %v3458 = vrot.slane %v3457, 4
    %v3459 = vmax.f32 %v3457, %v3458
    %v3460 = vrot.slane %v3459, 2
    %v3461 = vmax.f32 %v3459, %v3460
    %v3462 = vrot.slane %v3461, 1
    %v3463 = vmax.f32 %v3461, %v3462
    %v3464 = vsel %vm3295, %v2732, -inf
    %v3465 = vrot.slane %v3464, 4
    %v3466 = vmax.f32 %v3464, %v3465
    %v3467 = vrot.slane %v3466, 2
    %v3468 = vmax.f32 %v3466, %v3467
    %v3469 = vrot.slane %v3468, 1
    %v3470 = vmax.f32 %v3468, %v3469
    %v3471 = vsel %vm3295, %v2740, -inf
    %v3472 = vrot.slane %v3471, 4
    %v3473 = vmax.f32 %v3471, %v3472
    %v3474 = vrot.slane %v3473, 2
    %v3475 = vmax.f32 %v3473, %v3474
    %v3476 = vrot.slane %v3475, 1
    %v3477 = vmax.f32 %v3475, %v3476
    %v3478 = vsel %vm3295, %v2739, -inf
    %v3479 = vrot.slane %v3478, 4
    %v3480 = vmax.f32 %v3478, %v3479
    %v3481 = vrot.slane %v3480, 2
    %v3482 = vmax.f32 %v3480, %v3481
    %v3483 = vrot.slane %v3482, 1
    %v3484 = vmax.f32 %v3482, %v3483
    %v3485 = vsel %vm3295, %v2741, -inf
    %v3486 = vrot.slane %v3485, 4
    %v3487 = vmax.f32 %v3485, %v3486
    %v3488 = vrot.slane %v3487, 2
    %v3489 = vmax.f32 %v3487, %v3488
    %v3490 = vrot.slane %v3489, 1
    %v3491 = vmax.f32 %v3489, %v3490
    %v3492 = vsel %vm3295, %v2749, -inf
    %v3493 = vrot.slane %v3492, 4
    %v3494 = vmax.f32 %v3492, %v3493
    %v3495 = vrot.slane %v3494, 2
    %v3496 = vmax.f32 %v3494, %v3495
    %v3497 = vrot.slane %v3496, 1
    %v3498 = vmax.f32 %v3496, %v3497
    %v3499 = vsel %vm3295, %v2757, -inf
    %v3500 = vrot.slane %v3499, 4
    %v3501 = vmax.f32 %v3499, %v3500
    %v3502 = vrot.slane %v3501, 2
    %v3503 = vmax.f32 %v3501, %v3502
    %v3504 = vrot.slane %v3503, 1
    %v3505 = vmax.f32 %v3503, %v3504
    %v3506 = vsel %vm3295, %v2756, -inf
    %v3507 = vrot.slane %v3506, 4
    %v3508 = vmax.f32 %v3506, %v3507
    %v3509 = vrot.slane %v3508, 2
    %v3510 = vmax.f32 %v3508, %v3509
    %v3511 = vrot.slane %v3510, 1
    %v3512 = vmax.f32 %v3510, %v3511
    %v3513 = vsel %vm3295, %v2758, -inf
    %v3514 = vrot.slane %v3513, 4
    %v3515 = vmax.f32 %v3513, %v3514
    %v3516 = vrot.slane %v3515, 2
    %v3517 = vmax.f32 %v3515, %v3516
    %v3518 = vrot.slane %v3517, 1
    %v3519 = vmax.f32 %v3517, %v3518
    %v3520 = vsel %vm3295, %v2766, -inf
    %v3521 = vrot.slane %v3520, 4
    %v3522 = vmax.f32 %v3520, %v3521
    %v3523 = vrot.slane %v3522, 2
    %v3524 = vmax.f32 %v3522, %v3523
    %v3525 = vrot.slane %v3524, 1
    %v3526 = vmax.f32 %v3524, %v3525
    %v3527 = vsel %vm3295, %v2774, -inf
    %v3528 = vrot.slane %v3527, 4
    %v3529 = vmax.f32 %v3527, %v3528
    %v3530 = vrot.slane %v3529, 2
    %v3531 = vmax.f32 %v3529, %v3530
    %v3532 = vrot.slane %v3531, 1
    %v3533 = vmax.f32 %v3531, %v3532
    %v3534 = vsel %vm3295, %v2773, -inf
    %v3535 = vrot.slane %v3534, 4
    %v3536 = vmax.f32 %v3534, %v3535
    %v3537 = vrot.slane %v3536, 2
    %v3538 = vmax.f32 %v3536, %v3537
    %v3539 = vrot.slane %v3538, 1
    %v3540 = vmax.f32 %v3538, %v3539
    %v3541 = vsel %vm3295, %v2775, -inf
    %v3542 = vrot.slane %v3541, 4
    %v3543 = vmax.f32 %v3541, %v3542
    %v3544 = vrot.slane %v3543, 2
    %v3545 = vmax.f32 %v3543, %v3544
    %v3546 = vrot.slane %v3545, 1
    %v3547 = vmax.f32 %v3545, %v3546
    %v3548 = vsel %vm3295, %v2783, -inf
    %v3549 = vrot.slane %v3548, 4
    %v3550 = vmax.f32 %v3548, %v3549
    %v3551 = vrot.slane %v3550, 2
    %v3552 = vmax.f32 %v3550, %v3551
    %v3553 = vrot.slane %v3552, 1
    %v3554 = vmax.f32 %v3552, %v3553
    %v3555 = vsel %vm3295, %v2791, -inf
    %v3556 = vrot.slane %v3555, 4
    %v3557 = vmax.f32 %v3555, %v3556
    %v3558 = vrot.slane %v3557, 2
    %v3559 = vmax.f32 %v3557, %v3558
    %v3560 = vrot.slane %v3559, 1
    %v3561 = vmax.f32 %v3559, %v3560
    %v3562 = vsel %vm3295, %v2790, -inf
    %v3563 = vrot.slane %v3562, 4
    %v3564 = vmax.f32 %v3562, %v3563
    %v3565 = vrot.slane %v3564, 2
    %v3566 = vmax.f32 %v3564, %v3565
    %v3567 = vrot.slane %v3566, 1
    %v3568 = vmax.f32 %v3566, %v3567
    %v3569 = vsel %vm3295, %v2792, -inf
    %v3570 = vrot.slane %v3569, 4
    %v3571 = vmax.f32 %v3569, %v3570
    %v3572 = vrot.slane %v3571, 2
    %v3573 = vmax.f32 %v3571, %v3572
    %v3574 = vrot.slane %v3573, 1
    %v3575 = vmax.f32 %v3573, %v3574
    %v3576 = vsel %vm3295, %v2800, -inf
    %v3577 = vrot.slane %v3576, 4
    %v3578 = vmax.f32 %v3576, %v3577
    %v3579 = vrot.slane %v3578, 2
    %v3580 = vmax.f32 %v3578, %v3579
    %v3581 = vrot.slane %v3580, 1
    %v3582 = vmax.f32 %v3580, %v3581
    %v3583 = vsel %vm3295, %v2808, -inf
    %v3584 = vrot.slane %v3583, 4
    %v3585 = vmax.f32 %v3583, %v3584
    %v3586 = vrot.slane %v3585, 2
    %v3587 = vmax.f32 %v3585, %v3586
    %v3588 = vrot.slane %v3587, 1
    %v3589 = vmax.f32 %v3587, %v3588
    %v3590 = vsel %vm3295, %v2807, -inf
    %v3591 = vrot.slane %v3590, 4
    %v3592 = vmax.f32 %v3590, %v3591
    %v3593 = vrot.slane %v3592, 2
    %v3594 = vmax.f32 %v3592, %v3593
    %v3595 = vrot.slane %v3594, 1
    %v3596 = vmax.f32 %v3594, %v3595
    %v3597 = vsel %vm3295, %v2809, -inf
    %v3598 = vrot.slane %v3597, 4
    %v3599 = vmax.f32 %v3597, %v3598
    %v3600 = vrot.slane %v3599, 2
    %v3601 = vmax.f32 %v3599, %v3600
    %v3602 = vrot.slane %v3601, 1
    %v3603 = vmax.f32 %v3601, %v3602
    %v3604 = vsel %vm3295, %v2817, -inf
    %v3605 = vrot.slane %v3604, 4
    %v3606 = vmax.f32 %v3604, %v3605
    %v3607 = vrot.slane %v3606, 2
    %v3608 = vmax.f32 %v3606, %v3607
    %v3609 = vrot.slane %v3608, 1
    %v3610 = vmax.f32 %v3608, %v3609
    %v3611 = vsel %vm3295, %v2825, -inf
    %v3612 = vrot.slane %v3611, 4
    %v3613 = vmax.f32 %v3611, %v3612
    %v3614 = vrot.slane %v3613, 2
    %v3615 = vmax.f32 %v3613, %v3614
    %v3616 = vrot.slane %v3615, 1
    %v3617 = vmax.f32 %v3615, %v3616
    %v3618 = vsel %vm3295, %v2824, -inf
    %v3619 = vrot.slane %v3618, 4
    %v3620 = vmax.f32 %v3618, %v3619
    %v3621 = vrot.slane %v3620, 2
    %v3622 = vmax.f32 %v3620, %v3621
    %v3623 = vrot.slane %v3622, 1
    %v3624 = vmax.f32 %v3622, %v3623
    %v3625 = vsel %vm3295, %v2826, -inf
    %v3626 = vrot.slane %v3625, 4
    %v3627 = vmax.f32 %v3625, %v3626
    %v3628 = vrot.slane %v3627, 2
    %v3629 = vmax.f32 %v3627, %v3628
    %v3630 = vrot.slane %v3629, 1
    %v3631 = vmax.f32 %v3629, %v3630
    %v3632 = vsel %vm3295, %v2834, -inf
    %v3633 = vrot.slane %v3632, 4
    %v3634 = vmax.f32 %v3632, %v3633
    %v3635 = vrot.slane %v3634, 2
    %v3636 = vmax.f32 %v3634, %v3635
    %v3637 = vrot.slane %v3636, 1
    %v3638 = vmax.f32 %v3636, %v3637
    %v3639 = vsel %vm3295, %v2842, -inf
    %v3640 = vrot.slane %v3639, 4
    %v3641 = vmax.f32 %v3639, %v3640
    %v3642 = vrot.slane %v3641, 2
    %v3643 = vmax.f32 %v3641, %v3642
    %v3644 = vrot.slane %v3643, 1
    %v3645 = vmax.f32 %v3643, %v3644
    %v3646 = vsel %vm3295, %v2841, -inf
    %v3647 = vrot.slane %v3646, 4
    %v3648 = vmax.f32 %v3646, %v3647
    %v3649 = vrot.slane %v3648, 2
    %v3650 = vmax.f32 %v3648, %v3649
    %v3651 = vrot.slane %v3650, 1
    %v3652 = vmax.f32 %v3650, %v3651
    %v3653 = vsel %vm3295, %v2843, -inf
    %v3654 = vrot.slane %v3653, 4
    %v3655 = vmax.f32 %v3653, %v3654
    %v3656 = vrot.slane %v3655, 2
    %v3657 = vmax.f32 %v3655, %v3656
    %v3658 = vrot.slane %v3657, 1
    %v3659 = vmax.f32 %v3657, %v3658
    %v3660 = vsel %vm3295, %v2851, -inf
    %v3661 = vrot.slane %v3660, 4
    %v3662 = vmax.f32 %v3660, %v3661
    %v3663 = vrot.slane %v3662, 2
    %v3664 = vmax.f32 %v3662, %v3663
    %v3665 = vrot.slane %v3664, 1
    %v3666 = vmax.f32 %v3664, %v3665
    %v3667 = vsel %vm3295, %v2859, -inf
    %v3668 = vrot.slane %v3667, 4
    %v3669 = vmax.f32 %v3667, %v3668
    %v3670 = vrot.slane %v3669, 2
    %v3671 = vmax.f32 %v3669, %v3670
    %v3672 = vrot.slane %v3671, 1
    %v3673 = vmax.f32 %v3671, %v3672
    %v3674 = vsel %vm3295, %v2858, -inf
    %v3675 = vrot.slane %v3674, 4
    %v3676 = vmax.f32 %v3674, %v3675
    %v3677 = vrot.slane %v3676, 2
    %v3678 = vmax.f32 %v3676, %v3677
    %v3679 = vrot.slane %v3678, 1
    %v3680 = vmax.f32 %v3678, %v3679
    %v3681 = vsel %vm3295, %v2860, -inf
    %v3682 = vrot.slane %v3681, 4
    %v3683 = vmax.f32 %v3681, %v3682
    %v3684 = vrot.slane %v3683, 2
    %v3685 = vmax.f32 %v3683, %v3684
    %v3686 = vrot.slane %v3685, 1
    %v3687 = vmax.f32 %v3685, %v3686
    %v3688 = vsel %vm3295, %v2868, -inf
    %v3689 = vrot.slane %v3688, 4
    %v3690 = vmax.f32 %v3688, %v3689
    %v3691 = vrot.slane %v3690, 2
    %v3692 = vmax.f32 %v3690, %v3691
    %v3693 = vrot.slane %v3692, 1
    %v3694 = vmax.f32 %v3692, %v3693
    %v3695 = vsel %vm3295, %v2876, -inf
    %v3696 = vrot.slane %v3695, 4
    %v3697 = vmax.f32 %v3695, %v3696
    %v3698 = vrot.slane %v3697, 2
    %v3699 = vmax.f32 %v3697, %v3698
    %v3700 = vrot.slane %v3699, 1
    %v3701 = vmax.f32 %v3699, %v3700
    %v3702 = vsel %vm3295, %v2875, -inf
    %v3703 = vrot.slane %v3702, 4
    %v3704 = vmax.f32 %v3702, %v3703
    %v3705 = vrot.slane %v3704, 2
    %v3706 = vmax.f32 %v3704, %v3705
    %v3707 = vrot.slane %v3706, 1
    %v3708 = vmax.f32 %v3706, %v3707
    %v3709 = vsel %vm3295, %v2877, -inf
    %v3710 = vrot.slane %v3709, 4
    %v3711 = vmax.f32 %v3709, %v3710
    %v3712 = vrot.slane %v3711, 2
    %v3713 = vmax.f32 %v3711, %v3712
    %v3714 = vrot.slane %v3713, 1
    %v3715 = vmax.f32 %v3713, %v3714
    %v3716 = vsel %vm3295, %v2885, -inf
    %v3717 = vrot.slane %v3716, 4
    %v3718 = vmax.f32 %v3716, %v3717
    %v3719 = vrot.slane %v3718, 2
    %v3720 = vmax.f32 %v3718, %v3719
    %v3721 = vrot.slane %v3720, 1
    %v3722 = vmax.f32 %v3720, %v3721
    %v3723 = vsel %vm3295, %v2893, -inf
    %v3724 = vrot.slane %v3723, 4
    %v3725 = vmax.f32 %v3723, %v3724
    %v3726 = vrot.slane %v3725, 2
    %v3727 = vmax.f32 %v3725, %v3726
    %v3728 = vrot.slane %v3727, 1
    %v3729 = vmax.f32 %v3727, %v3728
    %v3730 = vsel %vm3295, %v2892, -inf
    %v3731 = vrot.slane %v3730, 4
    %v3732 = vmax.f32 %v3730, %v3731
    %v3733 = vrot.slane %v3732, 2
    %v3734 = vmax.f32 %v3732, %v3733
    %v3735 = vrot.slane %v3734, 1
    %v3736 = vmax.f32 %v3734, %v3735
    %v3737 = vsel %vm3295, %v2894, -inf
    %v3738 = vrot.slane %v3737, 4
    %v3739 = vmax.f32 %v3737, %v3738
    %v3740 = vrot.slane %v3739, 2
    %v3741 = vmax.f32 %v3739, %v3740
    %v3742 = vrot.slane %v3741, 1
    %v3743 = vmax.f32 %v3741, %v3742
    %v3744 = vsel %vm3295, %v2902, -inf
    %v3745 = vrot.slane %v3744, 4
    %v3746 = vmax.f32 %v3744, %v3745
    %v3747 = vrot.slane %v3746, 2
    %v3748 = vmax.f32 %v3746, %v3747
    %v3749 = vrot.slane %v3748, 1
    %v3750 = vmax.f32 %v3748, %v3749
    %v3751 = vsel %vm3295, %v2910, -inf
    %v3752 = vrot.slane %v3751, 4
    %v3753 = vmax.f32 %v3751, %v3752
    %v3754 = vrot.slane %v3753, 2
    %v3755 = vmax.f32 %v3753, %v3754
    %v3756 = vrot.slane %v3755, 1
    %v3757 = vmax.f32 %v3755, %v3756
    %v3758 = vsel %vm3295, %v2909, -inf
    %v3759 = vrot.slane %v3758, 4
    %v3760 = vmax.f32 %v3758, %v3759
    %v3761 = vrot.slane %v3760, 2
    %v3762 = vmax.f32 %v3760, %v3761
    %v3763 = vrot.slane %v3762, 1
    %v3764 = vmax.f32 %v3762, %v3763
    %v3765 = vsel %vm3295, %v2911, -inf
    %v3766 = vrot.slane %v3765, 4
    %v3767 = vmax.f32 %v3765, %v3766
    %v3768 = vrot.slane %v3767, 2
    %v3769 = vmax.f32 %v3767, %v3768
    %v3770 = vrot.slane %v3769, 1
    %v3771 = vmax.f32 %v3769, %v3770
    %v3772 = vsel %vm3295, %v2919, -inf
    %v3773 = vrot.slane %v3772, 4
    %v3774 = vmax.f32 %v3772, %v3773
    %v3775 = vrot.slane %v3774, 2
    %v3776 = vmax.f32 %v3774, %v3775
    %v3777 = vrot.slane %v3776, 1
    %v3778 = vmax.f32 %v3776, %v3777
    %v3779 = vsel %vm3295, %v2927, -inf
    %v3780 = vrot.slane %v3779, 4
    %v3781 = vmax.f32 %v3779, %v3780
    %v3782 = vrot.slane %v3781, 2
    %v3783 = vmax.f32 %v3781, %v3782
    %v3784 = vrot.slane %v3783, 1
    %v3785 = vmax.f32 %v3783, %v3784
    %v3786 = vsel %vm3295, %v2926, -inf
    %v3787 = vrot.slane %v3786, 4
    %v3788 = vmax.f32 %v3786, %v3787
    %v3789 = vrot.slane %v3788, 2
    %v3790 = vmax.f32 %v3788, %v3789
    %v3791 = vrot.slane %v3790, 1
    %v3792 = vmax.f32 %v3790, %v3791
    %v3793 = vsel %vm3295, %v2928, -inf
    %v3794 = vrot.slane %v3793, 4
    %v3795 = vmax.f32 %v3793, %v3794
    %v3796 = vrot.slane %v3795, 2
    %v3797 = vmax.f32 %v3795, %v3796
    %v3798 = vrot.slane %v3797, 1
    %v3799 = vmax.f32 %v3797, %v3798
    %v3800 = vsel %vm3295, %v2936, -inf
    %v3801 = vrot.slane %v3800, 4
    %v3802 = vmax.f32 %v3800, %v3801
    %v3803 = vrot.slane %v3802, 2
    %v3804 = vmax.f32 %v3802, %v3803
    %v3805 = vrot.slane %v3804, 1
    %v3806 = vmax.f32 %v3804, %v3805
    %v3807 = vsel %vm3295, %v2944, -inf
    %v3808 = vrot.slane %v3807, 4
    %v3809 = vmax.f32 %v3807, %v3808
    %v3810 = vrot.slane %v3809, 2
    %v3811 = vmax.f32 %v3809, %v3810
    %v3812 = vrot.slane %v3811, 1
    %v3813 = vmax.f32 %v3811, %v3812
    %v3814 = vsel %vm3295, %v2943, -inf
    %v3815 = vrot.slane %v3814, 4
    %v3816 = vmax.f32 %v3814, %v3815
    %v3817 = vrot.slane %v3816, 2
    %v3818 = vmax.f32 %v3816, %v3817
    %v3819 = vrot.slane %v3818, 1
    %v3820 = vmax.f32 %v3818, %v3819
    %v3821 = vsel %vm3295, %v2945, -inf
    %v3822 = vrot.slane %v3821, 4
    %v3823 = vmax.f32 %v3821, %v3822
    %v3824 = vrot.slane %v3823, 2
    %v3825 = vmax.f32 %v3823, %v3824
    %v3826 = vrot.slane %v3825, 1
    %v3827 = vmax.f32 %v3825, %v3826
    %v3828 = vsel %vm3295, %v2953, -inf
    %v3829 = vrot.slane %v3828, 4
    %v3830 = vmax.f32 %v3828, %v3829
    %v3831 = vrot.slane %v3830, 2
    %v3832 = vmax.f32 %v3830, %v3831
    %v3833 = vrot.slane %v3832, 1
    %v3834 = vmax.f32 %v3832, %v3833
    %v3835 = vsel %vm3295, %v2961, -inf
    %v3836 = vrot.slane %v3835, 4
    %v3837 = vmax.f32 %v3835, %v3836
    %v3838 = vrot.slane %v3837, 2
    %v3839 = vmax.f32 %v3837, %v3838
    %v3840 = vrot.slane %v3839, 1
    %v3841 = vmax.f32 %v3839, %v3840
    %v3842 = vsel %vm3295, %v2960, -inf
    %v3843 = vrot.slane %v3842, 4
    %v3844 = vmax.f32 %v3842, %v3843
    %v3845 = vrot.slane %v3844, 2
    %v3846 = vmax.f32 %v3844, %v3845
    %v3847 = vrot.slane %v3846, 1
    %v3848 = vmax.f32 %v3846, %v3847
    %v3849 = vsel %vm3295, %v2962, -inf
    %v3850 = vrot.slane %v3849, 4
    %v3851 = vmax.f32 %v3849, %v3850
    %v3852 = vrot.slane %v3851, 2
    %v3853 = vmax.f32 %v3851, %v3852
    %v3854 = vrot.slane %v3853, 1
    %v3855 = vmax.f32 %v3853, %v3854
    %v3856 = vsel %vm3295, %v2970, -inf
    %v3857 = vrot.slane %v3856, 4
    %v3858 = vmax.f32 %v3856, %v3857
    %v3859 = vrot.slane %v3858, 2
    %v3860 = vmax.f32 %v3858, %v3859
    %v3861 = vrot.slane %v3860, 1
    %v3862 = vmax.f32 %v3860, %v3861
    %v3863 = vsel %vm3295, %v2978, -inf
    %v3864 = vrot.slane %v3863, 4
    %v3865 = vmax.f32 %v3863, %v3864
    %v3866 = vrot.slane %v3865, 2
    %v3867 = vmax.f32 %v3865, %v3866
    %v3868 = vrot.slane %v3867, 1
    %v3869 = vmax.f32 %v3867, %v3868
    %v3870 = vsel %vm3295, %v2977, -inf
    %v3871 = vrot.slane %v3870, 4
    %v3872 = vmax.f32 %v3870, %v3871
    %v3873 = vrot.slane %v3872, 2
    %v3874 = vmax.f32 %v3872, %v3873
    %v3875 = vrot.slane %v3874, 1
    %v3876 = vmax.f32 %v3874, %v3875
    %v3877 = vsel %vm3295, %v2979, -inf
    %v3878 = vrot.slane %v3877, 4
    %v3879 = vmax.f32 %v3877, %v3878
    %v3880 = vrot.slane %v3879, 2
    %v3881 = vmax.f32 %v3879, %v3880
    %v3882 = vrot.slane %v3881, 1
    %v3883 = vmax.f32 %v3881, %v3882
    %v3884 = vsel %vm3295, %v2987, -inf
    %v3885 = vrot.slane %v3884, 4
    %v3886 = vmax.f32 %v3884, %v3885
    %v3887 = vrot.slane %v3886, 2
    %v3888 = vmax.f32 %v3886, %v3887
    %v3889 = vrot.slane %v3888, 1
    %v3890 = vmax.f32 %v3888, %v3889
    %v3891 = vsel %vm3295, %v2995, -inf
    %v3892 = vrot.slane %v3891, 4
    %v3893 = vmax.f32 %v3891, %v3892
    %v3894 = vrot.slane %v3893, 2
    %v3895 = vmax.f32 %v3893, %v3894
    %v3896 = vrot.slane %v3895, 1
    %v3897 = vmax.f32 %v3895, %v3896
    %v3898 = vsel %vm3295, %v2994, -inf
    %v3899 = vrot.slane %v3898, 4
    %v3900 = vmax.f32 %v3898, %v3899
    %v3901 = vrot.slane %v3900, 2
    %v3902 = vmax.f32 %v3900, %v3901
    %v3903 = vrot.slane %v3902, 1
    %v3904 = vmax.f32 %v3902, %v3903
    %v3905 = vsel %vm3295, %v2996, -inf
    %v3906 = vrot.slane %v3905, 4
    %v3907 = vmax.f32 %v3905, %v3906
    %v3908 = vrot.slane %v3907, 2
    %v3909 = vmax.f32 %v3907, %v3908
    %v3910 = vrot.slane %v3909, 1
    %v3911 = vmax.f32 %v3909, %v3910
    %v3912 = vsel %vm3295, %v3004, -inf
    %v3913 = vrot.slane %v3912, 4
    %v3914 = vmax.f32 %v3912, %v3913
    %v3915 = vrot.slane %v3914, 2
    %v3916 = vmax.f32 %v3914, %v3915
    %v3917 = vrot.slane %v3916, 1
    %v3918 = vmax.f32 %v3916, %v3917
    %v3919 = vsel %vm3295, %v3012, -inf
    %v3920 = vrot.slane %v3919, 4
    %v3921 = vmax.f32 %v3919, %v3920
    %v3922 = vrot.slane %v3921, 2
    %v3923 = vmax.f32 %v3921, %v3922
    %v3924 = vrot.slane %v3923, 1
    %v3925 = vmax.f32 %v3923, %v3924
    %v3926 = vsel %vm3295, %v3011, -inf
    %v3927 = vrot.slane %v3926, 4
    %v3928 = vmax.f32 %v3926, %v3927
    %v3929 = vrot.slane %v3928, 2
    %v3930 = vmax.f32 %v3928, %v3929
    %v3931 = vrot.slane %v3930, 1
    %v3932 = vmax.f32 %v3930, %v3931
    %v3933 = vsel %vm3295, %v3013, -inf
    %v3934 = vrot.slane %v3933, 4
    %v3935 = vmax.f32 %v3933, %v3934
    %v3936 = vrot.slane %v3935, 2
    %v3937 = vmax.f32 %v3935, %v3936
    %v3938 = vrot.slane %v3937, 1
    %v3939 = vmax.f32 %v3937, %v3938
    %v3940 = vsel %vm3295, %v3021, -inf
    %v3941 = vrot.slane %v3940, 4
    %v3942 = vmax.f32 %v3940, %v3941
    %v3943 = vrot.slane %v3942, 2
    %v3944 = vmax.f32 %v3942, %v3943
    %v3945 = vrot.slane %v3944, 1
    %v3946 = vmax.f32 %v3944, %v3945
    %v3947 = vsel %vm3295, %v3029, -inf
    %v3948 = vrot.slane %v3947, 4
    %v3949 = vmax.f32 %v3947, %v3948
    %v3950 = vrot.slane %v3949, 2
    %v3951 = vmax.f32 %v3949, %v3950
    %v3952 = vrot.slane %v3951, 1
    %v3953 = vmax.f32 %v3951, %v3952
    %v3954 = vsel %vm3295, %v3028, -inf
    %v3955 = vrot.slane %v3954, 4
    %v3956 = vmax.f32 %v3954, %v3955
    %v3957 = vrot.slane %v3956, 2
    %v3958 = vmax.f32 %v3956, %v3957
    %v3959 = vrot.slane %v3958, 1
    %v3960 = vmax.f32 %v3958, %v3959
    %v3961 = vsel %vm3295, %v3030, -inf
    %v3962 = vrot.slane %v3961, 4
    %v3963 = vmax.f32 %v3961, %v3962
    %v3964 = vrot.slane %v3963, 2
    %v3965 = vmax.f32 %v3963, %v3964
    %v3966 = vrot.slane %v3965, 1
    %v3967 = vmax.f32 %v3965, %v3966
    %v3968 = vsel %vm3295, %v3038, -inf
    %v3969 = vrot.slane %v3968, 4
    %v3970 = vmax.f32 %v3968, %v3969
    %v3971 = vrot.slane %v3970, 2
    %v3972 = vmax.f32 %v3970, %v3971
    %v3973 = vrot.slane %v3972, 1
    %v3974 = vmax.f32 %v3972, %v3973
    %v3975 = vsel %vm3295, %v3046, -inf
    %v3976 = vrot.slane %v3975, 4
    %v3977 = vmax.f32 %v3975, %v3976
    %v3978 = vrot.slane %v3977, 2
    %v3979 = vmax.f32 %v3977, %v3978
    %v3980 = vrot.slane %v3979, 1
    %v3981 = vmax.f32 %v3979, %v3980
    %v3982 = vsel %vm3295, %v3045, -inf
    %v3983 = vrot.slane %v3982, 4
    %v3984 = vmax.f32 %v3982, %v3983
    %v3985 = vrot.slane %v3984, 2
    %v3986 = vmax.f32 %v3984, %v3985
    %v3987 = vrot.slane %v3986, 1
    %v3988 = vmax.f32 %v3986, %v3987
    %v3989 = vsel %vm3295, %v3047, -inf
    %v3990 = vrot.slane %v3989, 4
    %v3991 = vmax.f32 %v3989, %v3990
    %v3992 = vrot.slane %v3991, 2
    %v3993 = vmax.f32 %v3991, %v3992
    %v3994 = vrot.slane %v3993, 1
    %v3995 = vmax.f32 %v3993, %v3994
    %v3996 = vsel %vm3295, %v3055, -inf
    %v3997 = vrot.slane %v3996, 4
    %v3998 = vmax.f32 %v3996, %v3997
    %v3999 = vrot.slane %v3998, 2
    %v4000 = vmax.f32 %v3998, %v3999
    %v4001 = vrot.slane %v4000, 1
    %v4002 = vmax.f32 %v4000, %v4001
    %v4003 = vsel %vm3295, %v3063, -inf
    %v4004 = vrot.slane %v4003, 4
    %v4005 = vmax.f32 %v4003, %v4004
    %v4006 = vrot.slane %v4005, 2
    %v4007 = vmax.f32 %v4005, %v4006
    %v4008 = vrot.slane %v4007, 1
    %v4009 = vmax.f32 %v4007, %v4008
    %v4010 = vsel %vm3295, %v3062, -inf
    %v4011 = vrot.slane %v4010, 4
    %v4012 = vmax.f32 %v4010, %v4011
    %v4013 = vrot.slane %v4012, 2
    %v4014 = vmax.f32 %v4012, %v4013
    %v4015 = vrot.slane %v4014, 1
    %v4016 = vmax.f32 %v4014, %v4015
    %v4017 = vsel %vm3295, %v3064, -inf
    %v4018 = vrot.slane %v4017, 4
    %v4019 = vmax.f32 %v4017, %v4018
    %v4020 = vrot.slane %v4019, 2
    %v4021 = vmax.f32 %v4019, %v4020
    %v4022 = vrot.slane %v4021, 1
    %v4023 = vmax.f32 %v4021, %v4022
    %v4024 = vsel %vm3295, %v3072, -inf
    %v4025 = vrot.slane %v4024, 4
    %v4026 = vmax.f32 %v4024, %v4025
    %v4027 = vrot.slane %v4026, 2
    %v4028 = vmax.f32 %v4026, %v4027
    %v4029 = vrot.slane %v4028, 1
    %v4030 = vmax.f32 %v4028, %v4029
    %v4031 = vsel %vm3295, %v3080, -inf
    %v4032 = vrot.slane %v4031, 4
    %v4033 = vmax.f32 %v4031, %v4032
    %v4034 = vrot.slane %v4033, 2
    %v4035 = vmax.f32 %v4033, %v4034
    %v4036 = vrot.slane %v4035, 1
    %v4037 = vmax.f32 %v4035, %v4036
    %v4038 = vsel %vm3295, %v3079, -inf
    %v4039 = vrot.slane %v4038, 4
    %v4040 = vmax.f32 %v4038, %v4039
    %v4041 = vrot.slane %v4040, 2
    %v4042 = vmax.f32 %v4040, %v4041
    %v4043 = vrot.slane %v4042, 1
    %v4044 = vmax.f32 %v4042, %v4043
    %v4045 = vsel %vm3295, %v3081, -inf
    %v4046 = vrot.slane %v4045, 4
    %v4047 = vmax.f32 %v4045, %v4046
    %v4048 = vrot.slane %v4047, 2
    %v4049 = vmax.f32 %v4047, %v4048
    %v4050 = vrot.slane %v4049, 1
    %v4051 = vmax.f32 %v4049, %v4050
    %v4052 = vsel %vm3295, %v3089, -inf
    %v4053 = vrot.slane %v4052, 4
    %v4054 = vmax.f32 %v4052, %v4053
    %v4055 = vrot.slane %v4054, 2
    %v4056 = vmax.f32 %v4054, %v4055
    %v4057 = vrot.slane %v4056, 1
    %v4058 = vmax.f32 %v4056, %v4057
    %v4059 = vsel %vm3295, %v3097, -inf
    %v4060 = vrot.slane %v4059, 4
    %v4061 = vmax.f32 %v4059, %v4060
    %v4062 = vrot.slane %v4061, 2
    %v4063 = vmax.f32 %v4061, %v4062
    %v4064 = vrot.slane %v4063, 1
    %v4065 = vmax.f32 %v4063, %v4064
    %v4066 = vsel %vm3295, %v3096, -inf
    %v4067 = vrot.slane %v4066, 4
    %v4068 = vmax.f32 %v4066, %v4067
    %v4069 = vrot.slane %v4068, 2
    %v4070 = vmax.f32 %v4068, %v4069
    %v4071 = vrot.slane %v4070, 1
    %v4072 = vmax.f32 %v4070, %v4071
    %v4073 = vsel %vm3295, %v3098, -inf
    %v4074 = vrot.slane %v4073, 4
    %v4075 = vmax.f32 %v4073, %v4074
    %v4076 = vrot.slane %v4075, 2
    %v4077 = vmax.f32 %v4075, %v4076
    %v4078 = vrot.slane %v4077, 1
    %v4079 = vmax.f32 %v4077, %v4078
    %v4080 = vsel %vm3295, %v3106, -inf
    %v4081 = vrot.slane %v4080, 4
    %v4082 = vmax.f32 %v4080, %v4081
    %v4083 = vrot.slane %v4082, 2
    %v4084 = vmax.f32 %v4082, %v4083
    %v4085 = vrot.slane %v4084, 1
    %v4086 = vmax.f32 %v4084, %v4085
    %v4087 = vsel %vm3295, %v3114, -inf
    %v4088 = vrot.slane %v4087, 4
    %v4089 = vmax.f32 %v4087, %v4088
    %v4090 = vrot.slane %v4089, 2
    %v4091 = vmax.f32 %v4089, %v4090
    %v4092 = vrot.slane %v4091, 1
    %v4093 = vmax.f32 %v4091, %v4092
    %v4094 = vsel %vm3295, %v3113, -inf
    %v4095 = vrot.slane %v4094, 4
    %v4096 = vmax.f32 %v4094, %v4095
    %v4097 = vrot.slane %v4096, 2
    %v4098 = vmax.f32 %v4096, %v4097
    %v4099 = vrot.slane %v4098, 1
    %v4100 = vmax.f32 %v4098, %v4099
    %v4101 = vsel %vm3295, %v3115, -inf
    %v4102 = vrot.slane %v4101, 4
    %v4103 = vmax.f32 %v4101, %v4102
    %v4104 = vrot.slane %v4103, 2
    %v4105 = vmax.f32 %v4103, %v4104
    %v4106 = vrot.slane %v4105, 1
    %v4107 = vmax.f32 %v4105, %v4106
    %v4108 = vsel %vm3295, %v3123, -inf
    %v4109 = vrot.slane %v4108, 4
    %v4110 = vmax.f32 %v4108, %v4109
    %v4111 = vrot.slane %v4110, 2
    %v4112 = vmax.f32 %v4110, %v4111
    %v4113 = vrot.slane %v4112, 1
    %v4114 = vmax.f32 %v4112, %v4113
    %v4115 = vsel %vm3295, %v3131, -inf
    %v4116 = vrot.slane %v4115, 4
    %v4117 = vmax.f32 %v4115, %v4116
    %v4118 = vrot.slane %v4117, 2
    %v4119 = vmax.f32 %v4117, %v4118
    %v4120 = vrot.slane %v4119, 1
    %v4121 = vmax.f32 %v4119, %v4120
    %v4122 = vsel %vm3295, %v3130, -inf
    %v4123 = vrot.slane %v4122, 4
    %v4124 = vmax.f32 %v4122, %v4123
    %v4125 = vrot.slane %v4124, 2
    %v4126 = vmax.f32 %v4124, %v4125
    %v4127 = vrot.slane %v4126, 1
    %v4128 = vmax.f32 %v4126, %v4127
    %v4129 = vsel %vm3295, %v3132, -inf
    %v4130 = vrot.slane %v4129, 4
    %v4131 = vmax.f32 %v4129, %v4130
    %v4132 = vrot.slane %v4131, 2
    %v4133 = vmax.f32 %v4131, %v4132
    %v4134 = vrot.slane %v4133, 1
    %v4135 = vmax.f32 %v4133, %v4134
    %v4136 = vsel %vm3295, %v3140, -inf
    %v4137 = vrot.slane %v4136, 4
    %v4138 = vmax.f32 %v4136, %v4137
    %v4139 = vrot.slane %v4138, 2
    %v4140 = vmax.f32 %v4138, %v4139
    %v4141 = vrot.slane %v4140, 1
    %v4142 = vmax.f32 %v4140, %v4141
    %v4143 = vsel %vm3295, %v3148, -inf
    %v4144 = vrot.slane %v4143, 4
    %v4145 = vmax.f32 %v4143, %v4144
    %v4146 = vrot.slane %v4145, 2
    %v4147 = vmax.f32 %v4145, %v4146
    %v4148 = vrot.slane %v4147, 1
    %v4149 = vmax.f32 %v4147, %v4148
    %v4150 = vsel %vm3295, %v3147, -inf
    %v4151 = vrot.slane %v4150, 4
    %v4152 = vmax.f32 %v4150, %v4151
    %v4153 = vrot.slane %v4152, 2
    %v4154 = vmax.f32 %v4152, %v4153
    %v4155 = vrot.slane %v4154, 1
    %v4156 = vmax.f32 %v4154, %v4155
    %v4157 = vsel %vm3295, %v3149, -inf
    %v4158 = vrot.slane %v4157, 4
    %v4159 = vmax.f32 %v4157, %v4158
    %v4160 = vrot.slane %v4159, 2
    %v4161 = vmax.f32 %v4159, %v4160
    %v4162 = vrot.slane %v4161, 1
    %v4163 = vmax.f32 %v4161, %v4162
    %v4164 = vsel %vm3295, %v3157, -inf
    %v4165 = vrot.slane %v4164, 4
    %v4166 = vmax.f32 %v4164, %v4165
    %v4167 = vrot.slane %v4166, 2
    %v4168 = vmax.f32 %v4166, %v4167
    %v4169 = vrot.slane %v4168, 1
    %v4170 = vmax.f32 %v4168, %v4169
    %v4171 = vsel %vm3295, %v3165, -inf
    %v4172 = vrot.slane %v4171, 4
    %v4173 = vmax.f32 %v4171, %v4172
    %v4174 = vrot.slane %v4173, 2
    %v4175 = vmax.f32 %v4173, %v4174
    %v4176 = vrot.slane %v4175, 1
    %v4177 = vmax.f32 %v4175, %v4176
    %v4178 = vsel %vm3295, %v3164, -inf
    %v4179 = vrot.slane %v4178, 4
    %v4180 = vmax.f32 %v4178, %v4179
    %v4181 = vrot.slane %v4180, 2
    %v4182 = vmax.f32 %v4180, %v4181
    %v4183 = vrot.slane %v4182, 1
    %v4184 = vmax.f32 %v4182, %v4183
    %v4185 = vsel %vm3295, %v3166, -inf
    %v4186 = vrot.slane %v4185, 4
    %v4187 = vmax.f32 %v4185, %v4186
    %v4188 = vrot.slane %v4187, 2
    %v4189 = vmax.f32 %v4187, %v4188
    %v4190 = vrot.slane %v4189, 1
    %v4191 = vmax.f32 %v4189, %v4190
    %v4192 = vpack.c.bf16 %v3302, %v3302
    %v4193 = vpack.c.bf16 %v3309, %v3309
    %v4194 = vpack.c.bf16 %v3316, %v3316
    %v4195 = vpack.c.bf16 %v3323, %v3323
    %v4196 = vpack.c.bf16 %v3330, %v3330
    %v4197 = vpack.c.bf16 %v3337, %v3337
    %v4198 = vpack.c.bf16 %v3344, %v3344
    %v4199 = vpack.c.bf16 %v3351, %v3351
    %v4200 = vpack.c.bf16 %v3358, %v3358
    %v4201 = vpack.c.bf16 %v3365, %v3365
    %v4202 = vpack.c.bf16 %v3372, %v3372
    %v4203 = vpack.c.bf16 %v3379, %v3379
    %v4204 = vpack.c.bf16 %v3386, %v3386
    %v4205 = vpack.c.bf16 %v3393, %v3393
    %v4206 = vpack.c.bf16 %v3400, %v3400
    %v4207 = vpack.c.bf16 %v3407, %v3407
    %v4208 = vpack.c.bf16 %v3414, %v3414
    %v4209 = vpack.c.bf16 %v3421, %v3421
    %v4210 = vpack.c.bf16 %v3428, %v3428
    %v4211 = vpack.c.bf16 %v3435, %v3435
    %v4212 = vpack.c.bf16 %v3442, %v3442
    %v4213 = vpack.c.bf16 %v3449, %v3449
    %v4214 = vpack.c.bf16 %v3456, %v3456
    %v4215 = vpack.c.bf16 %v3463, %v3463
    %v4216 = vpack.c.bf16 %v3470, %v3470
    %v4217 = vpack.c.bf16 %v3477, %v3477
    %v4218 = vpack.c.bf16 %v3484, %v3484
    %v4219 = vpack.c.bf16 %v3491, %v3491
    %v4220 = vpack.c.bf16 %v3498, %v3498
    %v4221 = vpack.c.bf16 %v3505, %v3505
    %v4222 = vpack.c.bf16 %v3512, %v3512
    %v4223 = vpack.c.bf16 %v3519, %v3519
    %v4224 = vpack.c.bf16 %v3526, %v3526
    %v4225 = vpack.c.bf16 %v3533, %v3533
    %v4226 = vpack.c.bf16 %v3540, %v3540
    %v4227 = vpack.c.bf16 %v3547, %v3547
    %v4228 = vpack.c.bf16 %v3554, %v3554
    %v4229 = vpack.c.bf16 %v3561, %v3561
    %v4230 = vpack.c.bf16 %v3568, %v3568
    %v4231 = vpack.c.bf16 %v3575, %v3575
    %v4232 = vpack.c.bf16 %v3582, %v3582
    %v4233 = vpack.c.bf16 %v3589, %v3589
    %v4234 = vpack.c.bf16 %v3596, %v3596
    %v4235 = vpack.c.bf16 %v3603, %v3603
    %v4236 = vpack.c.bf16 %v3610, %v3610
    %v4237 = vpack.c.bf16 %v3617, %v3617
    %v4238 = vpack.c.bf16 %v3624, %v3624
    %v4239 = vpack.c.bf16 %v3631, %v3631
    %v4240 = vpack.c.bf16 %v3638, %v3638
    %v4241 = vpack.c.bf16 %v3645, %v3645
    %v4242 = vpack.c.bf16 %v3652, %v3652
    %v4243 = vpack.c.bf16 %v3659, %v3659
    %v4244 = vpack.c.bf16 %v3666, %v3666
    %v4245 = vpack.c.bf16 %v3673, %v3673
    %v4246 = vpack.c.bf16 %v3680, %v3680
    %v4247 = vpack.c.bf16 %v3687, %v3687
    %v4248 = vpack.c.bf16 %v3694, %v3694
    %v4249 = vpack.c.bf16 %v3701, %v3701
    %v4250 = vpack.c.bf16 %v3708, %v3708
    %v4251 = vpack.c.bf16 %v3715, %v3715
    %v4252 = vpack.c.bf16 %v3722, %v3722
    %v4253 = vpack.c.bf16 %v3729, %v3729
    %v4254 = vpack.c.bf16 %v3736, %v3736
    %v4255 = vpack.c.bf16 %v3743, %v3743
    %v4256 = vpack.c.bf16 %v3750, %v3750
    %v4257 = vpack.c.bf16 %v3757, %v3757
    %v4258 = vpack.c.bf16 %v3764, %v3764
    %v4259 = vpack.c.bf16 %v3771, %v3771
    %v4260 = vpack.c.bf16 %v3778, %v3778
    %v4261 = vpack.c.bf16 %v3785, %v3785
    %v4262 = vpack.c.bf16 %v3792, %v3792
    %v4263 = vpack.c.bf16 %v3799, %v3799
    %v4264 = vpack.c.bf16 %v3806, %v3806
    %v4265 = vpack.c.bf16 %v3813, %v3813
    %v4266 = vpack.c.bf16 %v3820, %v3820
    %v4267 = vpack.c.bf16 %v3827, %v3827
    %v4268 = vpack.c.bf16 %v3834, %v3834
    %v4269 = vpack.c.bf16 %v3841, %v3841
    %v4270 = vpack.c.bf16 %v3848, %v3848
    %v4271 = vpack.c.bf16 %v3855, %v3855
    %v4272 = vpack.c.bf16 %v3862, %v3862
    %v4273 = vpack.c.bf16 %v3869, %v3869
    %v4274 = vpack.c.bf16 %v3876, %v3876
    %v4275 = vpack.c.bf16 %v3883, %v3883
    %v4276 = vpack.c.bf16 %v3890, %v3890
    %v4277 = vpack.c.bf16 %v3897, %v3897
    %v4278 = vpack.c.bf16 %v3904, %v3904
    %v4279 = vpack.c.bf16 %v3911, %v3911
    %v4280 = vpack.c.bf16 %v3918, %v3918
    %v4281 = vpack.c.bf16 %v3925, %v3925
    %v4282 = vpack.c.bf16 %v3932, %v3932
    %v4283 = vpack.c.bf16 %v3939, %v3939
    %v4284 = vpack.c.bf16 %v3946, %v3946
    %v4285 = vpack.c.bf16 %v3953, %v3953
    %v4286 = vpack.c.bf16 %v3960, %v3960
    %v4287 = vpack.c.bf16 %v3967, %v3967
    %v4288 = vpack.c.bf16 %v3974, %v3974
    %v4289 = vpack.c.bf16 %v3981, %v3981
    %v4290 = vpack.c.bf16 %v3988, %v3988
    %v4291 = vpack.c.bf16 %v3995, %v3995
    %v4292 = vpack.c.bf16 %v4002, %v4002
    %v4293 = vpack.c.bf16 %v4009, %v4009
    %v4294 = vpack.c.bf16 %v4016, %v4016
    %v4295 = vpack.c.bf16 %v4023, %v4023
    %v4296 = vpack.c.bf16 %v4030, %v4030
    %v4297 = vpack.c.bf16 %v4037, %v4037
    %v4298 = vpack.c.bf16 %v4044, %v4044
    %v4299 = vpack.c.bf16 %v4051, %v4051
    %v4300 = vpack.c.bf16 %v4058, %v4058
    %v4301 = vpack.c.bf16 %v4065, %v4065
    %v4302 = vpack.c.bf16 %v4072, %v4072
    %v4303 = vpack.c.bf16 %v4079, %v4079
    %v4304 = vpack.c.bf16 %v4086, %v4086
    %v4305 = vpack.c.bf16 %v4093, %v4093
    %v4306 = vpack.c.bf16 %v4100, %v4100
    %v4307 = vpack.c.bf16 %v4107, %v4107
    %v4308 = vpack.c.bf16 %v4114, %v4114
    %v4309 = vpack.c.bf16 %v4121, %v4121
    %v4310 = vpack.c.bf16 %v4128, %v4128
    %v4311 = vpack.c.bf16 %v4135, %v4135
    %v4312 = vpack.c.bf16 %v4142, %v4142
    %v4313 = vpack.c.bf16 %v4149, %v4149
    %v4314 = vpack.c.bf16 %v4156, %v4156
    %v4315 = vpack.c.bf16 %v4163, %v4163
    %v4316 = vpack.c.bf16 %v4170, %v4170
    %v4317 = vpack.c.bf16 %v4177, %v4177
    %v4318 = vpack.c.bf16 %v4184, %v4184
    %v4319 = vpack.c.bf16 %v4191, %v4191
    %v4448 = vunpack.c.l.b16 %v4192
    %v4449 = vunpack.c.l.b16 %v4193
    %v4450 = vunpack.c.l.b16 %v4194
    %v4451 = vunpack.c.l.b16 %v4195
    %v4452 = vunpack.c.l.b16 %v4196
    %v4453 = vunpack.c.l.b16 %v4197
    %v4454 = vunpack.c.l.b16 %v4198
    %v4455 = vunpack.c.l.b16 %v4199
    %v4456 = vunpack.c.l.b16 %v4200
    %v4457 = vunpack.c.l.b16 %v4201
    %v4458 = vunpack.c.l.b16 %v4202
    %v4459 = vunpack.c.l.b16 %v4203
    %v4460 = vunpack.c.l.b16 %v4204
    %v4461 = vunpack.c.l.b16 %v4205
    %v4462 = vunpack.c.l.b16 %v4206
    %v4463 = vunpack.c.l.b16 %v4207
    %v4464 = vunpack.c.l.b16 %v4208
    %v4465 = vunpack.c.l.b16 %v4209
    %v4466 = vunpack.c.l.b16 %v4210
    %v4467 = vunpack.c.l.b16 %v4211
    %v4468 = vunpack.c.l.b16 %v4212
    %v4469 = vunpack.c.l.b16 %v4213
    %v4470 = vunpack.c.l.b16 %v4214
    %v4471 = vunpack.c.l.b16 %v4215
    %v4472 = vunpack.c.l.b16 %v4216
    %v4473 = vunpack.c.l.b16 %v4217
    %v4474 = vunpack.c.l.b16 %v4218
    %v4475 = vunpack.c.l.b16 %v4219
    %v4476 = vunpack.c.l.b16 %v4220
    %v4477 = vunpack.c.l.b16 %v4221
    %v4478 = vunpack.c.l.b16 %v4222
    %v4479 = vunpack.c.l.b16 %v4223
    %v4480 = vunpack.c.l.b16 %v4224
    %v4481 = vunpack.c.l.b16 %v4225
    %v4482 = vunpack.c.l.b16 %v4226
    %v4483 = vunpack.c.l.b16 %v4227
    %v4484 = vunpack.c.l.b16 %v4228
    %v4485 = vunpack.c.l.b16 %v4229
    %v4486 = vunpack.c.l.b16 %v4230
    %v4487 = vunpack.c.l.b16 %v4231
    %v4488 = vunpack.c.l.b16 %v4232
    %v4489 = vunpack.c.l.b16 %v4233
    %v4490 = vunpack.c.l.b16 %v4234
    %v4491 = vunpack.c.l.b16 %v4235
    %v4492 = vunpack.c.l.b16 %v4236
    %v4493 = vunpack.c.l.b16 %v4237
    %v4494 = vunpack.c.l.b16 %v4238
    %v4495 = vunpack.c.l.b16 %v4239
    %v4496 = vunpack.c.l.b16 %v4240
    %v4497 = vunpack.c.l.b16 %v4241
    %v4498 = vunpack.c.l.b16 %v4242
    %v4499 = vunpack.c.l.b16 %v4243
    %v4500 = vunpack.c.l.b16 %v4244
    %v4501 = vunpack.c.l.b16 %v4245
    %v4502 = vunpack.c.l.b16 %v4246
    %v4503 = vunpack.c.l.b16 %v4247
    %v4504 = vunpack.c.l.b16 %v4248
    %v4505 = vunpack.c.l.b16 %v4249
    %v4506 = vunpack.c.l.b16 %v4250
    %v4507 = vunpack.c.l.b16 %v4251
    %v4508 = vunpack.c.l.b16 %v4252
    %v4509 = vunpack.c.l.b16 %v4253
    %v4510 = vunpack.c.l.b16 %v4254
    %v4511 = vunpack.c.l.b16 %v4255
    %v4512 = vunpack.c.l.b16 %v4256
    %v4513 = vunpack.c.l.b16 %v4257
    %v4514 = vunpack.c.l.b16 %v4258
    %v4515 = vunpack.c.l.b16 %v4259
    %v4516 = vunpack.c.l.b16 %v4260
    %v4517 = vunpack.c.l.b16 %v4261
    %v4518 = vunpack.c.l.b16 %v4262
    %v4519 = vunpack.c.l.b16 %v4263
    %v4520 = vunpack.c.l.b16 %v4264
    %v4521 = vunpack.c.l.b16 %v4265
    %v4522 = vunpack.c.l.b16 %v4266
    %v4523 = vunpack.c.l.b16 %v4267
    %v4524 = vunpack.c.l.b16 %v4268
    %v4525 = vunpack.c.l.b16 %v4269
    %v4526 = vunpack.c.l.b16 %v4270
    %v4527 = vunpack.c.l.b16 %v4271
    %v4528 = vunpack.c.l.b16 %v4272
    %v4529 = vunpack.c.l.b16 %v4273
    %v4530 = vunpack.c.l.b16 %v4274
    %v4531 = vunpack.c.l.b16 %v4275
    %v4532 = vunpack.c.l.b16 %v4276
    %v4533 = vunpack.c.l.b16 %v4277
    %v4534 = vunpack.c.l.b16 %v4278
    %v4535 = vunpack.c.l.b16 %v4279
    %v4536 = vunpack.c.l.b16 %v4280
    %v4537 = vunpack.c.l.b16 %v4281
    %v4538 = vunpack.c.l.b16 %v4282
    %v4539 = vunpack.c.l.b16 %v4283
    %v4540 = vunpack.c.l.b16 %v4284
    %v4541 = vunpack.c.l.b16 %v4285
    %v4542 = vunpack.c.l.b16 %v4286
    %v4543 = vunpack.c.l.b16 %v4287
    %v4544 = vunpack.c.l.b16 %v4288
    %v4545 = vunpack.c.l.b16 %v4289
    %v4546 = vunpack.c.l.b16 %v4290
    %v4547 = vunpack.c.l.b16 %v4291
    %v4548 = vunpack.c.l.b16 %v4292
    %v4549 = vunpack.c.l.b16 %v4293
    %v4550 = vunpack.c.l.b16 %v4294
    %v4551 = vunpack.c.l.b16 %v4295
    %v4552 = vunpack.c.l.b16 %v4296
    %v4553 = vunpack.c.l.b16 %v4297
    %v4554 = vunpack.c.l.b16 %v4298
    %v4555 = vunpack.c.l.b16 %v4299
    %v4556 = vunpack.c.l.b16 %v4300
    %v4557 = vunpack.c.l.b16 %v4301
    %v4558 = vunpack.c.l.b16 %v4302
    %v4559 = vunpack.c.l.b16 %v4303
    %v4560 = vunpack.c.l.b16 %v4304
    %v4561 = vunpack.c.l.b16 %v4305
    %v4562 = vunpack.c.l.b16 %v4306
    %v4563 = vunpack.c.l.b16 %v4307
    %v4564 = vunpack.c.l.b16 %v4308
    %v4565 = vunpack.c.l.b16 %v4309
    %v4566 = vunpack.c.l.b16 %v4310
    %v4567 = vunpack.c.l.b16 %v4311
    %v4568 = vunpack.c.l.b16 %v4312
    %v4569 = vunpack.c.l.b16 %v4313
    %v4570 = vunpack.c.l.b16 %v4314
    %v4571 = vunpack.c.l.b16 %v4315
    %v4572 = vunpack.c.l.b16 %v4316
    %v4573 = vunpack.c.l.b16 %v4317
    %v4574 = vunpack.c.l.b16 %v4318
    %v4575 = vunpack.c.l.b16 %v4319
    %v4576 = vpack.c.b16 %v4448, %v4448
    %v4577 = vpack.c.b16 %v4449, %v4449
    %v4578 = vpack.c.b16 %v4450, %v4450
    %v4579 = vpack.c.b16 %v4451, %v4451
    %v4580 = vpack.c.b16 %v4452, %v4452
    %v4581 = vpack.c.b16 %v4453, %v4453
    %v4582 = vpack.c.b16 %v4454, %v4454
    %v4583 = vpack.c.b16 %v4455, %v4455
    %v4584 = vpack.c.b16 %v4456, %v4456
    %v4585 = vpack.c.b16 %v4457, %v4457
    %v4586 = vpack.c.b16 %v4458, %v4458
    %v4587 = vpack.c.b16 %v4459, %v4459
    %v4588 = vpack.c.b16 %v4460, %v4460
    %v4589 = vpack.c.b16 %v4461, %v4461
    %v4590 = vpack.c.b16 %v4462, %v4462
    %v4591 = vpack.c.b16 %v4463, %v4463
    %v4592 = vpack.c.b16 %v4464, %v4464
    %v4593 = vpack.c.b16 %v4465, %v4465
    %v4594 = vpack.c.b16 %v4466, %v4466
    %v4595 = vpack.c.b16 %v4467, %v4467
    %v4596 = vpack.c.b16 %v4468, %v4468
    %v4597 = vpack.c.b16 %v4469, %v4469
    %v4598 = vpack.c.b16 %v4470, %v4470
    %v4599 = vpack.c.b16 %v4471, %v4471
    %v4600 = vpack.c.b16 %v4472, %v4472
    %v4601 = vpack.c.b16 %v4473, %v4473
    %v4602 = vpack.c.b16 %v4474, %v4474
    %v4603 = vpack.c.b16 %v4475, %v4475
    %v4604 = vpack.c.b16 %v4476, %v4476
    %v4605 = vpack.c.b16 %v4477, %v4477
    %v4606 = vpack.c.b16 %v4478, %v4478
    %v4607 = vpack.c.b16 %v4479, %v4479
    %v4608 = vpack.c.b16 %v4480, %v4480
    %v4609 = vpack.c.b16 %v4481, %v4481
    %v4610 = vpack.c.b16 %v4482, %v4482
    %v4611 = vpack.c.b16 %v4483, %v4483
    %v4612 = vpack.c.b16 %v4484, %v4484
    %v4613 = vpack.c.b16 %v4485, %v4485
    %v4614 = vpack.c.b16 %v4486, %v4486
    %v4615 = vpack.c.b16 %v4487, %v4487
    %v4616 = vpack.c.b16 %v4488, %v4488
    %v4617 = vpack.c.b16 %v4489, %v4489
    %v4618 = vpack.c.b16 %v4490, %v4490
    %v4619 = vpack.c.b16 %v4491, %v4491
    %v4620 = vpack.c.b16 %v4492, %v4492
    %v4621 = vpack.c.b16 %v4493, %v4493
    %v4622 = vpack.c.b16 %v4494, %v4494
    %v4623 = vpack.c.b16 %v4495, %v4495
    %v4624 = vpack.c.b16 %v4496, %v4496
    %v4625 = vpack.c.b16 %v4497, %v4497
    %v4626 = vpack.c.b16 %v4498, %v4498
    %v4627 = vpack.c.b16 %v4499, %v4499
    %v4628 = vpack.c.b16 %v4500, %v4500
    %v4629 = vpack.c.b16 %v4501, %v4501
    %v4630 = vpack.c.b16 %v4502, %v4502
    %v4631 = vpack.c.b16 %v4503, %v4503
    %v4632 = vpack.c.b16 %v4504, %v4504
    %v4633 = vpack.c.b16 %v4505, %v4505
    %v4634 = vpack.c.b16 %v4506, %v4506
    %v4635 = vpack.c.b16 %v4507, %v4507
    %v4636 = vpack.c.b16 %v4508, %v4508
    %v4637 = vpack.c.b16 %v4509, %v4509
    %v4638 = vpack.c.b16 %v4510, %v4510
    %v4639 = vpack.c.b16 %v4511, %v4511
    %v4640 = vpack.c.b16 %v4512, %v4512
    %v4641 = vpack.c.b16 %v4513, %v4513
    %v4642 = vpack.c.b16 %v4514, %v4514
    %v4643 = vpack.c.b16 %v4515, %v4515
    %v4644 = vpack.c.b16 %v4516, %v4516
    %v4645 = vpack.c.b16 %v4517, %v4517
    %v4646 = vpack.c.b16 %v4518, %v4518
    %v4647 = vpack.c.b16 %v4519, %v4519
    %v4648 = vpack.c.b16 %v4520, %v4520
    %v4649 = vpack.c.b16 %v4521, %v4521
    %v4650 = vpack.c.b16 %v4522, %v4522
    %v4651 = vpack.c.b16 %v4523, %v4523
    %v4652 = vpack.c.b16 %v4524, %v4524
    %v4653 = vpack.c.b16 %v4525, %v4525
    %v4654 = vpack.c.b16 %v4526, %v4526
    %v4655 = vpack.c.b16 %v4527, %v4527
    %v4656 = vpack.c.b16 %v4528, %v4528
    %v4657 = vpack.c.b16 %v4529, %v4529
    %v4658 = vpack.c.b16 %v4530, %v4530
    %v4659 = vpack.c.b16 %v4531, %v4531
    %v4660 = vpack.c.b16 %v4532, %v4532
    %v4661 = vpack.c.b16 %v4533, %v4533
    %v4662 = vpack.c.b16 %v4534, %v4534
    %v4663 = vpack.c.b16 %v4535, %v4535
    %v4664 = vpack.c.b16 %v4536, %v4536
    %v4665 = vpack.c.b16 %v4537, %v4537
    %v4666 = vpack.c.b16 %v4538, %v4538
    %v4667 = vpack.c.b16 %v4539, %v4539
    %v4668 = vpack.c.b16 %v4540, %v4540
    %v4669 = vpack.c.b16 %v4541, %v4541
    %v4670 = vpack.c.b16 %v4542, %v4542
    %v4671 = vpack.c.b16 %v4543, %v4543
    %v4672 = vpack.c.b16 %v4544, %v4544
    %v4673 = vpack.c.b16 %v4545, %v4545
    %v4674 = vpack.c.b16 %v4546, %v4546
    %v4675 = vpack.c.b16 %v4547, %v4547
    %v4676 = vpack.c.b16 %v4548, %v4548
    %v4677 = vpack.c.b16 %v4549, %v4549
    %v4678 = vpack.c.b16 %v4550, %v4550
    %v4679 = vpack.c.b16 %v4551, %v4551
    %v4680 = vpack.c.b16 %v4552, %v4552
    %v4681 = vpack.c.b16 %v4553, %v4553
    %v4682 = vpack.c.b16 %v4554, %v4554
    %v4683 = vpack.c.b16 %v4555, %v4555
    %v4684 = vpack.c.b16 %v4556, %v4556
    %v4685 = vpack.c.b16 %v4557, %v4557
    %v4686 = vpack.c.b16 %v4558, %v4558
    %v4687 = vpack.c.b16 %v4559, %v4559
    %v4688 = vpack.c.b16 %v4560, %v4560
    %v4689 = vpack.c.b16 %v4561, %v4561
    %v4690 = vpack.c.b16 %v4562, %v4562
    %v4691 = vpack.c.b16 %v4563, %v4563
    %v4692 = vpack.c.b16 %v4564, %v4564
    %v4693 = vpack.c.b16 %v4565, %v4565
    %v4694 = vpack.c.b16 %v4566, %v4566
    %v4695 = vpack.c.b16 %v4567, %v4567
    %v4696 = vpack.c.b16 %v4568, %v4568
    %v4697 = vpack.c.b16 %v4569, %v4569
    %v4698 = vpack.c.b16 %v4570, %v4570
    %v4699 = vpack.c.b16 %v4571, %v4571
    %v4700 = vpack.c.b16 %v4572, %v4572
    %v4701 = vpack.c.b16 %v4573, %v4573
    %v4702 = vpack.c.b16 %v4574, %v4574
    %v4703 = vpack.c.b16 %v4575, %v4575
    %v4704 = vunpack.c.l.b16 %v4576
    %v4705 = vunpack.c.l.b16 %v4577
    %v4706 = vunpack.c.l.b16 %v4578
    %v4707 = vunpack.c.l.b16 %v4579
    %v4708 = vunpack.c.l.b16 %v4580
    %v4709 = vunpack.c.l.b16 %v4581
    %v4710 = vunpack.c.l.b16 %v4582
    %v4711 = vunpack.c.l.b16 %v4583
    %v4712 = vunpack.c.l.b16 %v4584
    %v4713 = vunpack.c.l.b16 %v4585
    %v4714 = vunpack.c.l.b16 %v4586
    %v4715 = vunpack.c.l.b16 %v4587
    %v4716 = vunpack.c.l.b16 %v4588
    %v4717 = vunpack.c.l.b16 %v4589
    %v4718 = vunpack.c.l.b16 %v4590
    %v4719 = vunpack.c.l.b16 %v4591
    %v4720 = vunpack.c.l.b16 %v4592
    %v4721 = vunpack.c.l.b16 %v4593
    %v4722 = vunpack.c.l.b16 %v4594
    %v4723 = vunpack.c.l.b16 %v4595
    %v4724 = vunpack.c.l.b16 %v4596
    %v4725 = vunpack.c.l.b16 %v4597
    %v4726 = vunpack.c.l.b16 %v4598
    %v4727 = vunpack.c.l.b16 %v4599
    %v4728 = vunpack.c.l.b16 %v4600
    %v4729 = vunpack.c.l.b16 %v4601
    %v4730 = vunpack.c.l.b16 %v4602
    %v4731 = vunpack.c.l.b16 %v4603
    %v4732 = vunpack.c.l.b16 %v4604
    %v4733 = vunpack.c.l.b16 %v4605
    %v4734 = vunpack.c.l.b16 %v4606
    %v4735 = vunpack.c.l.b16 %v4607
    %v4736 = vunpack.c.l.b16 %v4608
    %v4737 = vunpack.c.l.b16 %v4609
    %v4738 = vunpack.c.l.b16 %v4610
    %v4739 = vunpack.c.l.b16 %v4611
    %v4740 = vunpack.c.l.b16 %v4612
    %v4741 = vunpack.c.l.b16 %v4613
    %v4742 = vunpack.c.l.b16 %v4614
    %v4743 = vunpack.c.l.b16 %v4615
    %v4744 = vunpack.c.l.b16 %v4616
    %v4745 = vunpack.c.l.b16 %v4617
    %v4746 = vunpack.c.l.b16 %v4618
    %v4747 = vunpack.c.l.b16 %v4619
    %v4748 = vunpack.c.l.b16 %v4620
    %v4749 = vunpack.c.l.b16 %v4621
    %v4750 = vunpack.c.l.b16 %v4622
    %v4751 = vunpack.c.l.b16 %v4623
    %v4752 = vunpack.c.l.b16 %v4624
    %v4753 = vunpack.c.l.b16 %v4625
    %v4754 = vunpack.c.l.b16 %v4626
    %v4755 = vunpack.c.l.b16 %v4627
    %v4756 = vunpack.c.l.b16 %v4628
    %v4757 = vunpack.c.l.b16 %v4629
    %v4758 = vunpack.c.l.b16 %v4630
    %v4759 = vunpack.c.l.b16 %v4631
    %v4760 = vunpack.c.l.b16 %v4632
    %v4761 = vunpack.c.l.b16 %v4633
    %v4762 = vunpack.c.l.b16 %v4634
    %v4763 = vunpack.c.l.b16 %v4635
    %v4764 = vunpack.c.l.b16 %v4636
    %v4765 = vunpack.c.l.b16 %v4637
    %v4766 = vunpack.c.l.b16 %v4638
    %v4767 = vunpack.c.l.b16 %v4639
    %v4768 = vunpack.c.l.b16 %v4640
    %v4769 = vunpack.c.l.b16 %v4641
    %v4770 = vunpack.c.l.b16 %v4642
    %v4771 = vunpack.c.l.b16 %v4643
    %v4772 = vunpack.c.l.b16 %v4644
    %v4773 = vunpack.c.l.b16 %v4645
    %v4774 = vunpack.c.l.b16 %v4646
    %v4775 = vunpack.c.l.b16 %v4647
    %v4776 = vunpack.c.l.b16 %v4648
    %v4777 = vunpack.c.l.b16 %v4649
    %v4778 = vunpack.c.l.b16 %v4650
    %v4779 = vunpack.c.l.b16 %v4651
    %v4780 = vunpack.c.l.b16 %v4652
    %v4781 = vunpack.c.l.b16 %v4653
    %v4782 = vunpack.c.l.b16 %v4654
    %v4783 = vunpack.c.l.b16 %v4655
    %v4784 = vunpack.c.l.b16 %v4656
    %v4785 = vunpack.c.l.b16 %v4657
    %v4786 = vunpack.c.l.b16 %v4658
    %v4787 = vunpack.c.l.b16 %v4659
    %v4788 = vunpack.c.l.b16 %v4660
    %v4789 = vunpack.c.l.b16 %v4661
    %v4790 = vunpack.c.l.b16 %v4662
    %v4791 = vunpack.c.l.b16 %v4663
    %v4792 = vunpack.c.l.b16 %v4664
    %v4793 = vunpack.c.l.b16 %v4665
    %v4794 = vunpack.c.l.b16 %v4666
    %v4795 = vunpack.c.l.b16 %v4667
    %v4796 = vunpack.c.l.b16 %v4668
    %v4797 = vunpack.c.l.b16 %v4669
    %v4798 = vunpack.c.l.b16 %v4670
    %v4799 = vunpack.c.l.b16 %v4671
    %v4800 = vunpack.c.l.b16 %v4672
    %v4801 = vunpack.c.l.b16 %v4673
    %v4802 = vunpack.c.l.b16 %v4674
    %v4803 = vunpack.c.l.b16 %v4675
    %v4804 = vunpack.c.l.b16 %v4676
    %v4805 = vunpack.c.l.b16 %v4677
    %v4806 = vunpack.c.l.b16 %v4678
    %v4807 = vunpack.c.l.b16 %v4679
    %v4808 = vunpack.c.l.b16 %v4680
    %v4809 = vunpack.c.l.b16 %v4681
    %v4810 = vunpack.c.l.b16 %v4682
    %v4811 = vunpack.c.l.b16 %v4683
    %v4812 = vunpack.c.l.b16 %v4684
    %v4813 = vunpack.c.l.b16 %v4685
    %v4814 = vunpack.c.l.b16 %v4686
    %v4815 = vunpack.c.l.b16 %v4687
    %v4816 = vunpack.c.l.b16 %v4688
    %v4817 = vunpack.c.l.b16 %v4689
    %v4818 = vunpack.c.l.b16 %v4690
    %v4819 = vunpack.c.l.b16 %v4691
    %v4820 = vunpack.c.l.b16 %v4692
    %v4821 = vunpack.c.l.b16 %v4693
    %v4822 = vunpack.c.l.b16 %v4694
    %v4823 = vunpack.c.l.b16 %v4695
    %v4824 = vunpack.c.l.b16 %v4696
    %v4825 = vunpack.c.l.b16 %v4697
    %v4826 = vunpack.c.l.b16 %v4698
    %v4827 = vunpack.c.l.b16 %v4699
    %v4828 = vunpack.c.l.b16 %v4700
    %v4829 = vunpack.c.l.b16 %v4701
    %v4830 = vunpack.c.l.b16 %v4702
    %v4831 = vunpack.c.l.b16 %v4703
    %vm4832 = vcmask 1041409
    %v4833 = vsel %vm4832, %v4705, %v4704
    %vm4834 = vcmask 1042434
    %v4835 = vsel %vm4834, %v4706, %v4833
    %vm4836 = vcmask 1043459
    %v4837 = vsel %vm4836, %v4707, %v4835
    %vm4838 = vcmask 1044484
    %v4839 = vsel %vm4838, %v4708, %v4837
    %vm4840 = vcmask 1045509
    %v4841 = vsel %vm4840, %v4709, %v4839
    %vm4842 = vcmask 1046534
    %v4843 = vsel %vm4842, %v4710, %v4841
    %vm4844 = vcmask 1047559
    %v4845 = vsel %vm4844, %v4711, %v4843
    %v4846 = vsel %vm4832, %v4713, %v4712
    %v4847 = vsel %vm4834, %v4714, %v4846
    %v4848 = vsel %vm4836, %v4715, %v4847
    %v4849 = vsel %vm4838, %v4716, %v4848
    %v4850 = vsel %vm4840, %v4717, %v4849
    %v4851 = vsel %vm4842, %v4718, %v4850
    %v4852 = vsel %vm4844, %v4719, %v4851
    %v4853 = vsel %vm4832, %v4721, %v4720
    %v4854 = vsel %vm4834, %v4722, %v4853
    %v4855 = vsel %vm4836, %v4723, %v4854
    %v4856 = vsel %vm4838, %v4724, %v4855
    %v4857 = vsel %vm4840, %v4725, %v4856
    %v4858 = vsel %vm4842, %v4726, %v4857
    %v4859 = vsel %vm4844, %v4727, %v4858
    %v4860 = vsel %vm4832, %v4729, %v4728
    %v4861 = vsel %vm4834, %v4730, %v4860
    %v4862 = vsel %vm4836, %v4731, %v4861
    %v4863 = vsel %vm4838, %v4732, %v4862
    %v4864 = vsel %vm4840, %v4733, %v4863
    %v4865 = vsel %vm4842, %v4734, %v4864
    %v4866 = vsel %vm4844, %v4735, %v4865
    %v4867 = vsel %vm4832, %v4737, %v4736
    %v4868 = vsel %vm4834, %v4738, %v4867
    %v4869 = vsel %vm4836, %v4739, %v4868
    %v4870 = vsel %vm4838, %v4740, %v4869
    %v4871 = vsel %vm4840, %v4741, %v4870
    %v4872 = vsel %vm4842, %v4742, %v4871
    %v4873 = vsel %vm4844, %v4743, %v4872
    %v4874 = vsel %vm4832, %v4745, %v4744
    %v4875 = vsel %vm4834, %v4746, %v4874
    %v4876 = vsel %vm4836, %v4747, %v4875
    %v4877 = vsel %vm4838, %v4748, %v4876
    %v4878 = vsel %vm4840, %v4749, %v4877
    %v4879 = vsel %vm4842, %v4750, %v4878
    %v4880 = vsel %vm4844, %v4751, %v4879
    %v4881 = vsel %vm4832, %v4753, %v4752
    %v4882 = vsel %vm4834, %v4754, %v4881
    %v4883 = vsel %vm4836, %v4755, %v4882
    %v4884 = vsel %vm4838, %v4756, %v4883
    %v4885 = vsel %vm4840, %v4757, %v4884
    %v4886 = vsel %vm4842, %v4758, %v4885
    %v4887 = vsel %vm4844, %v4759, %v4886
    %v4888 = vsel %vm4832, %v4761, %v4760
    %v4889 = vsel %vm4834, %v4762, %v4888
    %v4890 = vsel %vm4836, %v4763, %v4889
    %v4891 = vsel %vm4838, %v4764, %v4890
    %v4892 = vsel %vm4840, %v4765, %v4891
    %v4893 = vsel %vm4842, %v4766, %v4892
    %v4894 = vsel %vm4844, %v4767, %v4893
    %v4895 = vsel %vm4832, %v4769, %v4768
    %v4896 = vsel %vm4834, %v4770, %v4895
    %v4897 = vsel %vm4836, %v4771, %v4896
    %v4898 = vsel %vm4838, %v4772, %v4897
    %v4899 = vsel %vm4840, %v4773, %v4898
    %v4900 = vsel %vm4842, %v4774, %v4899
    %v4901 = vsel %vm4844, %v4775, %v4900
    %v4902 = vsel %vm4832, %v4777, %v4776
    %v4903 = vsel %vm4834, %v4778, %v4902
    %v4904 = vsel %vm4836, %v4779, %v4903
    %v4905 = vsel %vm4838, %v4780, %v4904
    %v4906 = vsel %vm4840, %v4781, %v4905
    %v4907 = vsel %vm4842, %v4782, %v4906
    %v4908 = vsel %vm4844, %v4783, %v4907
    %v4909 = vsel %vm4832, %v4785, %v4784
    %v4910 = vsel %vm4834, %v4786, %v4909
    %v4911 = vsel %vm4836, %v4787, %v4910
    %v4912 = vsel %vm4838, %v4788, %v4911
    %v4913 = vsel %vm4840, %v4789, %v4912
    %v4914 = vsel %vm4842, %v4790, %v4913
    %v4915 = vsel %vm4844, %v4791, %v4914
    %v4916 = vsel %vm4832, %v4793, %v4792
    %v4917 = vsel %vm4834, %v4794, %v4916
    %v4918 = vsel %vm4836, %v4795, %v4917
    %v4919 = vsel %vm4838, %v4796, %v4918
    %v4920 = vsel %vm4840, %v4797, %v4919
    %v4921 = vsel %vm4842, %v4798, %v4920
    %v4922 = vsel %vm4844, %v4799, %v4921
    %v4923 = vsel %vm4832, %v4801, %v4800
    %v4924 = vsel %vm4834, %v4802, %v4923
    %v4925 = vsel %vm4836, %v4803, %v4924
    %v4926 = vsel %vm4838, %v4804, %v4925
    %v4927 = vsel %vm4840, %v4805, %v4926
    %v4928 = vsel %vm4842, %v4806, %v4927
    %v4929 = vsel %vm4844, %v4807, %v4928
    %v4930 = vsel %vm4832, %v4809, %v4808
    %v4931 = vsel %vm4834, %v4810, %v4930
    %v4932 = vsel %vm4836, %v4811, %v4931
    %v4933 = vsel %vm4838, %v4812, %v4932
    %v4934 = vsel %vm4840, %v4813, %v4933
    %v4935 = vsel %vm4842, %v4814, %v4934
    %v4936 = vsel %vm4844, %v4815, %v4935
    %v4937 = vsel %vm4832, %v4817, %v4816
    %v4938 = vsel %vm4834, %v4818, %v4937
    %v4939 = vsel %vm4836, %v4819, %v4938
    %v4940 = vsel %vm4838, %v4820, %v4939
    %v4941 = vsel %vm4840, %v4821, %v4940
    %v4942 = vsel %vm4842, %v4822, %v4941
    %v4943 = vsel %vm4844, %v4823, %v4942
    %v4944 = vsel %vm4832, %v4825, %v4824
    %v4945 = vsel %vm4834, %v4826, %v4944
    %v4946 = vsel %vm4836, %v4827, %v4945
    %v4947 = vsel %vm4838, %v4828, %v4946
    %v4948 = vsel %vm4840, %v4829, %v4947
    %v4949 = vsel %vm4842, %v4830, %v4948
    %v4950 = vsel %vm4844, %v4831, %v4949
    %v4951 = vpack.c.b16 %v4845, %v4845
    %v4952 = vpack.c.b16 %v4852, %v4852
    %v4953 = vpack.c.b16 %v4859, %v4859
    %v4954 = vpack.c.b16 %v4866, %v4866
    %v4955 = vpack.c.b16 %v4873, %v4873
    %v4956 = vpack.c.b16 %v4880, %v4880
    %v4957 = vpack.c.b16 %v4887, %v4887
    %v4958 = vpack.c.b16 %v4894, %v4894
    %v4959 = vpack.c.b16 %v4901, %v4901
    %v4960 = vpack.c.b16 %v4908, %v4908
    %v4961 = vpack.c.b16 %v4915, %v4915
    %v4962 = vpack.c.b16 %v4922, %v4922
    %v4963 = vpack.c.b16 %v4929, %v4929
    %v4964 = vpack.c.b16 %v4936, %v4936
    %v4965 = vpack.c.b16 %v4943, %v4943
    %v4966 = vpack.c.b16 %v4950, %v4950
    %vm4983 = vcmask 257024
    %4984 = vst.msk [vmem:[#allocation2] sm:$0xf] %vm4983, %v4951
    %4985 = vst.msk [vmem:[#allocation2 + $0x4] sm:$0xf] %vm4983, %v4952
    %4986 = vst.msk [vmem:[#allocation2 + $0x8] sm:$0xf] %vm4983, %v4953
    %4987 = vst.msk [vmem:[#allocation2 + $0xc] sm:$0xf] %vm4983, %v4954
    %4988 = vst.msk [vmem:[#allocation2 + $0x10] sm:$0xf] %vm4983, %v4955
    %4989 = vst.msk [vmem:[#allocation2 + $0x14] sm:$0xf] %vm4983, %v4956
    %4990 = vst.msk [vmem:[#allocation2 + $0x18] sm:$0xf] %vm4983, %v4957
    %4991 = vst.msk [vmem:[#allocation2 + $0x1c] sm:$0xf] %vm4983, %v4958
    %4992 = vst.msk [vmem:[#allocation2 + $0x20] sm:$0xf] %vm4983, %v4959
    %4993 = vst.msk [vmem:[#allocation2 + $0x24] sm:$0xf] %vm4983, %v4960
    %4994 = vst.msk [vmem:[#allocation2 + $0x28] sm:$0xf] %vm4983, %v4961
    %4995 = vst.msk [vmem:[#allocation2 + $0x2c] sm:$0xf] %vm4983, %v4962
    %4996 = vst.msk [vmem:[#allocation2 + $0x30] sm:$0xf] %vm4983, %v4963
    %4997 = vst.msk [vmem:[#allocation2 + $0x34] sm:$0xf] %vm4983, %v4964
    %4998 = vst.msk [vmem:[#allocation2 + $0x38] sm:$0xf] %vm4983, %v4965
    %4999 = vst.msk [vmem:[#allocation2 + $0x3c] sm:$0xf] %vm4983, %v4966
    // Predicated region
    $region14: #{tpu_custom_call.1} parent=1 // pred_check
      _
    $region15: #{tpu_custom_call.1} parent=1 // pred_check_branch
      %5001 = sbr.rel (0) target = $region17
    $region16: #{tpu_custom_call.1} parent=1 // pred_region
      %s5003 = ssub.s32 1024, 1024
      %5004 = vsyncadd [#allocation3], %s5003
      %s5005 = sshll.u32 [#allocation2], 4
      %s5006 = int_to_ptr.vmem [resolvable:$true] %s5005
      %5011 = dma.vmem_to_hbm [thread:$0]  %s5006, 1024, %s3, [#allocation3], 64, 64, 4
    $region17: #{tpu_custom_call.1} parent=1 // pred_fallthru
      _
    // Predicated region
    $region18: #{tpu_custom_call.1} parent=1 // pred_check
      _
    $region19: #{tpu_custom_call.1} parent=1 // pred_check_branch
      %5013 = sbr.rel (0) target = $region21
    $region20: #{tpu_custom_call.1} parent=1 // pred_region
      %5014 = dma.done [#allocation3], 1024
    $region21: #{tpu_custom_call.1} parent=1 // pred_fallthru
      _
    %5015 = vsyncpa [#allocation3], 1

</llo_original>
